<compile_context>
chip_gen: v7x
topology: tpu7x:2x2x1
jax: 0.10.0
libtpu: 0.0.40
codegen_flags: <defaults>
</compile_context>

<pallas_src>
import functools

import jax
import jax.numpy as jnp
from jax.experimental import pallas as pl
from jax.experimental.pallas import tpu as pltpu


# ---------------------------------------------------------------------------
# Glue: im2col equivalent of torch.nn.functional.unfold((3,3), padding=1, stride=2)
# ---------------------------------------------------------------------------
def _unfold_3x3_s2_p1(fea):
    """fea: (N, C, H, W) -> (N, L, 9*C), feature order c*9 + kh*3 + kw (torch unfold)."""
    N, C, H, W = fea.shape
    dh, dw = H // 2, W // 2
    xp = jnp.pad(fea, ((0, 0), (0, 0), (1, 1), (1, 1)))
    patches = []
    for kh in range(3):
        for kw in range(3):
            patches.append(xp[:, :, kh:kh + 2 * dh:2, kw:kw + 2 * dw:2])  # (N,C,dh,dw)
    p = jnp.stack(patches, axis=2)              # (N, C, 9, dh, dw)
    x = p.reshape(N, C * 9, dh * dw)            # (N, 9C, L)
    return jnp.transpose(x, (0, 2, 1))          # (N, L, 9C)


# ---------------------------------------------------------------------------
# Pallas kernel: per (batch, q-tile) MHA + residual + conv-as-matmul + SiLU
# ---------------------------------------------------------------------------
def _block_kernel(num_heads, hd_pad,
                  xq_ref, xkv_ref, wq_ref, wk_ref, wv_ref, wo_ref, bo_ref, wct_ref,
                  o_ref, ao_ref):
    xq = xq_ref[0]                                                     # (Lq, D) bf16
    xkv = xkv_ref[0]                                                   # (L,  D) bf16

    # q/k/v projections: bf16 MXU inputs, f32 accumulation. Head columns are
    # 128-aligned because hd is zero-padded to hd_pad in the wrapper, and the
    # 1/sqrt(hd) attention scale is already folded into W_q.
    q = jnp.dot(xq, wq_ref[...],
                preferred_element_type=jnp.float32).astype(jnp.bfloat16)   # (Lq, H*hdp)
    k = jnp.dot(xkv, wk_ref[...],
                preferred_element_type=jnp.float32).astype(jnp.bfloat16)   # (L,  H*hdp)
    v = jnp.dot(xkv, wv_ref[...],
                preferred_element_type=jnp.float32).astype(jnp.bfloat16)   # (L,  H*hdp)

    # Per-head attention. All slices start at multiples of 128 (lane-aligned
    # views of values already in vregs), so there is no relayout / masked store.
    for h in range(num_heads):
        sl = slice(h * hd_pad, (h + 1) * hd_pad)
        s = jnp.einsum('qd,kd->qk', q[:, sl], k[:, sl],
                       preferred_element_type=jnp.float32)              # (Lq, L) f32
        s = s - jnp.max(s, axis=-1, keepdims=True)
        p = jnp.exp(s)                                                  # f32 softmax math
        denom = jnp.sum(p, axis=-1, keepdims=True)                      # (Lq, 1) f32
        # p@v with un-normalized probabilities; normalize AFTER the matmul so the
        # reciprocal multiply touches (Lq, hdp) elements instead of (Lq, L).
        ao = jnp.dot(p.astype(jnp.bfloat16), v[:, sl],
                     preferred_element_type=jnp.float32)                # (Lq, hdp) f32
        ao = ao * pl.reciprocal(denom, approx=True)
        ao_ref[:, sl] = ao.astype(jnp.bfloat16)                         # aligned store

    # Out-projection fused with the head reduction: one (Lq, H*hdp)@(H*hdp, D)
    # matmul; the sum over heads happens in the MXU f32 accumulator.
    # TODO(synk): nn.Dropout(p=0.3) is stochastic in train mode; eval-mode identity only.
    attn = jnp.dot(ao_ref[...], wo_ref[...],
                   preferred_element_type=jnp.float32) + bo_ref[...]    # (Lq, D) f32
    xr = attn + xq.astype(jnp.float32)                                  # residual

    # Conv-as-matmul with a plain (M,K)x(K,N) feed and a lane-dense
    # (Lq, out_c_pad) store; padded channels are zero and dropped by the wrapper.
    y = jnp.dot(xr.astype(jnp.bfloat16), wct_ref[...],
                preferred_element_type=jnp.float32)                     # (Lq, out_c_pad)
    o_ref[0] = y * jax.nn.sigmoid(y)                                    # SiLU


def crowdformer_block(fea, wqkv, wo, bo, wconv, num_heads=8):
    """fea: (N, C, H, W) -> (N, out_c, H//2, W//2)."""
    N, C, H, W = fea.shape
    dh, dw = H // 2, W // 2
    L = dh * dw
    D = 9 * C
    out_c = wconv.shape[0]
    hd = D // num_heads
    assert hd * num_heads == D, "9*in_c must be divisible by num_heads"

    # Lane-alignment padding: per-head width and conv output channels -> 128 multiples.
    hd_pad = ((hd + 127) // 128) * 128
    hp = num_heads * hd_pad
    out_c_pad = ((out_c + 127) // 128) * 128

    # Query-tile size (second grid axis): feeds both v7x TensorCores and shrinks
    # per-step VMEM. Must divide L and be a multiple of 8.
    lq = L if L <= 256 else (256 if L % 256 == 0 else L)

    # Unfolded activations emitted in bf16: halves HBM traffic of the 9x-expanded tensor.
    x = _unfold_3x3_s2_p1(fea).astype(jnp.bfloat16)                    # (N, L, D)

    scale = 1.0 / (float(hd) ** 0.5)

    def pad_head_cols(w):
        # (D, D) head-major columns -> (D, num_heads*hd_pad), zero-padded per head.
        wh = w.reshape(D, num_heads, hd)
        wh = jnp.pad(wh, ((0, 0), (0, 0), (0, hd_pad - hd)))
        return wh.reshape(D, hp).astype(jnp.bfloat16)

    wq_pad = pad_head_cols(wqkv[:, :D] * scale)                        # scale folded into W_q
    wk_pad = pad_head_cols(wqkv[:, D:2 * D])
    wv_pad = pad_head_cols(wqkv[:, 2 * D:])

    wo_h = wo.reshape(num_heads, hd, D)
    wo_h = jnp.pad(wo_h, ((0, 0), (0, hd_pad - hd), (0, 0)))
    wo_pad = wo_h.reshape(hp, D).astype(jnp.bfloat16)                  # (H*hdp, D)

    bo2 = bo.reshape(1, D).astype(jnp.float32)

    wct = wconv.reshape(out_c, D).T                                    # (D, out_c)
    wct = jnp.pad(wct, ((0, 0), (0, out_c_pad - out_c))).astype(jnp.bfloat16)

    # Constant operands: whole-array VMEM residency, no double-buffering.
    vmem_spec = pl.BlockSpec(memory_space=pltpu.MemorySpace.VMEM)

    kernel = functools.partial(_block_kernel, num_heads, hd_pad)

    y = pl.pallas_call(
        kernel,
        out_shape=jax.ShapeDtypeStruct((N, L, out_c_pad), jnp.float32),
        grid=(N, L // lq),
        in_specs=[
            pl.BlockSpec((1, lq, D), lambda b, qi: (b, qi, 0)),        # x (queries / residual)
            pl.BlockSpec((1, L, D), lambda b, qi: (b, 0, 0)),          # x (keys / values)
            vmem_spec,                                                 # wq (scaled, padded)
            vmem_spec,                                                 # wk (padded)
            vmem_spec,                                                 # wv (padded)
            vmem_spec,                                                 # wo (H*hdp, D)
            vmem_spec,                                                 # out-proj bias (1, D)
            vmem_spec,                                                 # conv weight^T (D, out_c_pad)
        ],
        out_specs=pl.BlockSpec((1, lq, out_c_pad), lambda b, qi: (b, qi, 0)),
        scratch_shapes=[
            pltpu.VMEM((lq, hp), jnp.bfloat16),                        # head-concat attn output
        ],
        compiler_params=pltpu.CompilerParams(
            dimension_semantics=("parallel", "parallel"),
            vmem_limit_bytes=64 * 1024 * 1024,
        ),
    )(x, x, wq_pad, wk_pad, wv_pad, wo_pad, bo2, wct)

    # Drop channel padding; fold((dh,dw),(1,1)) == channel-major reshape.
    y = y[:, :, :out_c]                                                # (N, L, out_c)
    return jnp.transpose(y, (0, 2, 1)).reshape(N, out_c, dh, dw)


# ---------------------------------------------------------------------------
# Pure-JAX reference for verification
# ---------------------------------------------------------------------------
def _ref_forward(fea, wqkv, wo, bo, wconv, num_heads):
    N, C, H, W = fea.shape
    dh, dw = H // 2, W // 2
    x = _unfold_3x3_s2_p1(fea)                                         # (N, L, D) f32
    D = x.shape[-1]
    hd = D // num_heads
    qkv = x @ wqkv
    q, k, v = qkv[..., :D], qkv[..., D:2 * D], qkv[..., 2 * D:]

    def split_heads(t):
        return t.reshape(N, -1, num_heads, hd).transpose(0, 2, 1, 3)

    qh, kh, vh = map(split_heads, (q, k, v))
    s = jnp.einsum("nhqd,nhkd->nhqk", qh, kh) / jnp.sqrt(float(hd))
    p = jax.nn.softmax(s, axis=-1)
    a = jnp.einsum("nhqk,nhkd->nhqd", p, vh).transpose(0, 2, 1, 3).reshape(N, -1, D)
    a = a @ wo + bo
    xr = a + x
    out_c = wconv.shape[0]
    y = jax.nn.silu(xr @ wconv.reshape(out_c, -1).T)
    return jnp.transpose(y, (0, 2, 1)).reshape(N, out_c, dh, dw)


if __name__ == "__main__":
    # Small shapes consistent with the module: 9*in_c must be divisible by num_heads=8.
    N, C, H, W = 2, 8, 16, 16
    out_c, num_heads = 16, 8
    D = 9 * C

    key = jax.random.PRNGKey(0)
    k0, k1, k2, k3, k4 = jax.random.split(key, 5)
    fea = jax.random.normal(k0, (N, C, H, W), dtype=jnp.float32)
    # Deterministic synthetic parameters (module's nn.Parameter / Attention linears).
    wqkv = jax.random.normal(k1, (D, 3 * D), dtype=jnp.float32) * 0.05
    wo = jax.random.normal(k2, (D, D), dtype=jnp.float32) * 0.05
    bo = jax.random.normal(k3, (D,), dtype=jnp.float32) * 0.05
    wconv = jax.random.normal(k4, (out_c, C, 3, 3), dtype=jnp.float32) * 0.05

    out = crowdformer_block(fea, wqkv, wo, bo, wconv, num_heads)
    out = jax.block_until_ready(out)

    assert out.shape == (N, out_c, H // 2, W // 2), out.shape
    ref = _ref_forward(fea, wqkv, wo, bo, wconv, num_heads)
    max_err = float(jnp.max(jnp.abs(out - ref)))
    # bf16 MXU inputs with f32 accumulation vs. an f32 reference: allow a few e-3 slack.
    assert max_err < 3e-2, f"max abs error vs reference: {max_err}"

    print("KERNEL_OK")
</pallas_src>

<mosaic_0001>
module attributes {stable_mosaic.version = 11 : i64} {
  func.func @_block_kernel(%arg0: i32, %arg1: i32, %arg2: memref<1x64x72xbf16, #tpu.memory_space<vmem>>, %arg3: memref<1x64x72xbf16, #tpu.memory_space<vmem>>, %arg4: memref<72x1024xbf16, #tpu.memory_space<vmem>>, %arg5: memref<72x1024xbf16, #tpu.memory_space<vmem>>, %arg6: memref<72x1024xbf16, #tpu.memory_space<vmem>>, %arg7: memref<1024x72xbf16, #tpu.memory_space<vmem>>, %arg8: memref<1x72xf32, #tpu.memory_space<vmem>>, %arg9: memref<72x128xbf16, #tpu.memory_space<vmem>>, %arg10: memref<1x64x128xf32, #tpu.memory_space<vmem>>, %arg11: memref<64x1024xbf16, #tpu.memory_space<vmem>>) attributes {dimension_semantics = [#tpu.dimension_semantics<parallel>, #tpu.dimension_semantics<parallel>], iteration_bounds = array<i64: 2, 1>, scalar_prefetch = 0 : i64, scratch_operands = 1 : i64, tpu.core_type = #tpu.core_type<tc>, window_params = [{transform_indices = @transform_0, window_bounds = array<i64: 1, 64, 72>}, {transform_indices = @transform_1, window_bounds = array<i64: 1, 64, 72>}, {pipeline_mode = #tpu.pipeline_mode<synchronous>, transform_indices = @transform_2, window_bounds = array<i64: 72, 1024>}, {pipeline_mode = #tpu.pipeline_mode<synchronous>, transform_indices = @transform_3, window_bounds = array<i64: 72, 1024>}, {pipeline_mode = #tpu.pipeline_mode<synchronous>, transform_indices = @transform_4, window_bounds = array<i64: 72, 1024>}, {pipeline_mode = #tpu.pipeline_mode<synchronous>, transform_indices = @transform_5, window_bounds = array<i64: 1024, 72>}, {pipeline_mode = #tpu.pipeline_mode<synchronous>, transform_indices = @transform_6, window_bounds = array<i64: 1, 72>}, {pipeline_mode = #tpu.pipeline_mode<synchronous>, transform_indices = @transform_7, window_bounds = array<i64: 72, 128>}, {transform_indices = @transform_8, window_bounds = array<i64: 1, 64, 128>}]} {
    %c0 = arith.constant 0 : index
    %c0_0 = arith.constant 0 : index
    %c0_1 = arith.constant 0 : index
    %0 = vector.load %arg2[%c0, %c0_0, %c0_1] : memref<1x64x72xbf16, #tpu.memory_space<vmem>>, vector<1x64x72xbf16>
    %1 = vector.shape_cast %0 : vector<1x64x72xbf16> to vector<64x72xbf16>
    %c0_2 = arith.constant 0 : index
    %c0_3 = arith.constant 0 : index
    %c0_4 = arith.constant 0 : index
    %2 = vector.load %arg3[%c0_2, %c0_3, %c0_4] : memref<1x64x72xbf16, #tpu.memory_space<vmem>>, vector<1x64x72xbf16>
    %3 = vector.shape_cast %2 : vector<1x64x72xbf16> to vector<64x72xbf16>
    %c0_5 = arith.constant 0 : index
    %c0_6 = arith.constant 0 : index
    %4 = vector.load %arg4[%c0_5, %c0_6] : memref<72x1024xbf16, #tpu.memory_space<vmem>>, vector<72x1024xbf16>
    %cst = arith.constant dense<0.000000e+00> : vector<64x1024xf32>
    %5 = tpu.matmul %1, %4, %cst {dimension_numbers = #tpu.dot_dimension_numbers<[1], [0], [0], [1], [0, 0, 1, 1], [], []>} : vector<64x72xbf16>, vector<72x1024xbf16>, vector<64x1024xf32> -> vector<64x1024xf32>
    %6 = arith.truncf %5 : vector<64x1024xf32> to vector<64x1024xbf16>
    %c0_7 = arith.constant 0 : index
    %c0_8 = arith.constant 0 : index
    %7 = vector.load %arg5[%c0_7, %c0_8] : memref<72x1024xbf16, #tpu.memory_space<vmem>>, vector<72x1024xbf16>
    %cst_9 = arith.constant dense<0.000000e+00> : vector<64x1024xf32>
    %8 = tpu.matmul %3, %7, %cst_9 {dimension_numbers = #tpu.dot_dimension_numbers<[1], [0], [0], [1], [0, 0, 1, 1], [], []>} : vector<64x72xbf16>, vector<72x1024xbf16>, vector<64x1024xf32> -> vector<64x1024xf32>
    %9 = arith.truncf %8 : vector<64x1024xf32> to vector<64x1024xbf16>
    %c0_10 = arith.constant 0 : index
    %c0_11 = arith.constant 0 : index
    %10 = vector.load %arg6[%c0_10, %c0_11] : memref<72x1024xbf16, #tpu.memory_space<vmem>>, vector<72x1024xbf16>
    %cst_12 = arith.constant dense<0.000000e+00> : vector<64x1024xf32>
    %11 = tpu.matmul %3, %10, %cst_12 {dimension_numbers = #tpu.dot_dimension_numbers<[1], [0], [0], [1], [0, 0, 1, 1], [], []>} : vector<64x72xbf16>, vector<72x1024xbf16>, vector<64x1024xf32> -> vector<64x1024xf32>
    %12 = arith.truncf %11 : vector<64x1024xf32> to vector<64x1024xbf16>
    %13 = vector.extract_strided_slice %6 {offsets = [0, 0], sizes = [64, 128], strides = [1, 1]} : vector<64x1024xbf16> to vector<64x128xbf16>
    %14 = vector.extract_strided_slice %9 {offsets = [0, 0], sizes = [64, 128], strides = [1, 1]} : vector<64x1024xbf16> to vector<64x128xbf16>
    "tpu.trace_start"() <{level = 10 : i32, message = "qd,kd->qk"}> : () -> ()
    %cst_13 = arith.constant dense<0.000000e+00> : vector<64x64xf32>
    %15 = tpu.matmul %13, %14, %cst_13 {dimension_numbers = #tpu.dot_dimension_numbers<[1], [1], [0], [0], [0, 0, 1, 0], [], []>} : vector<64x128xbf16>, vector<64x128xbf16>, vector<64x64xf32> -> vector<64x64xf32>
    "tpu.trace_stop"() : () -> ()
    %cst_14 = arith.constant dense<0xFF800000> : vector<64xf32>
    %16 = vector.multi_reduction <maximumf>, %15, %cst_14 [1] : vector<64x64xf32> to vector<64xf32>
    %17 = vector.shape_cast %16 : vector<64xf32> to vector<64x1xf32>
    %18 = vector.broadcast %17 : vector<64x1xf32> to vector<64x64xf32>
    %19 = arith.subf %15, %18 : vector<64x64xf32>
    %20 = math.exp %19 : vector<64x64xf32>
    %cst_15 = arith.constant dense<0.000000e+00> : vector<64xf32>
    %21 = vector.multi_reduction <add>, %20, %cst_15 [1] : vector<64x64xf32> to vector<64xf32>
    %22 = vector.shape_cast %21 : vector<64xf32> to vector<64x1xf32>
    %23 = arith.truncf %20 : vector<64x64xf32> to vector<64x64xbf16>
    %24 = vector.extract_strided_slice %12 {offsets = [0, 0], sizes = [64, 128], strides = [1, 1]} : vector<64x1024xbf16> to vector<64x128xbf16>
    %cst_16 = arith.constant dense<0.000000e+00> : vector<64x128xf32>
    %25 = tpu.matmul %23, %24, %cst_16 {dimension_numbers = #tpu.dot_dimension_numbers<[1], [0], [0], [1], [0, 0, 1, 1], [], []>} : vector<64x64xbf16>, vector<64x128xbf16>, vector<64x128xf32> -> vector<64x128xf32>
    %26 = tpu.reciprocal %22 {approx = true} : vector<64x1xf32> -> vector<64x1xf32>
    %27 = vector.broadcast %26 : vector<64x1xf32> to vector<64x128xf32>
    %28 = arith.mulf %25, %27 : vector<64x128xf32>
    %29 = arith.truncf %28 : vector<64x128xf32> to vector<64x128xbf16>
    %c0_17 = arith.constant 0 : index
    %c0_18 = arith.constant 0 : index
    %30 = vector.load %arg11[%c0_17, %c0_18] : memref<64x1024xbf16, #tpu.memory_space<vmem>>, vector<64x128xbf16>
    tpu.vector_store %arg11[%c0_17, %c0_18], %29 {strides = array<i32>} : memref<64x1024xbf16, #tpu.memory_space<vmem>>, vector<64x128xbf16>,
    %31 = vector.extract_strided_slice %6 {offsets = [0, 128], sizes = [64, 128], strides = [1, 1]} : vector<64x1024xbf16> to vector<64x128xbf16>
    %32 = vector.extract_strided_slice %9 {offsets = [0, 128], sizes = [64, 128], strides = [1, 1]} : vector<64x1024xbf16> to vector<64x128xbf16>
    "tpu.trace_start"() <{level = 10 : i32, message = "qd,kd->qk"}> : () -> ()
    %cst_19 = arith.constant dense<0.000000e+00> : vector<64x64xf32>
    %33 = tpu.matmul %31, %32, %cst_19 {dimension_numbers = #tpu.dot_dimension_numbers<[1], [1], [0], [0], [0, 0, 1, 0], [], []>} : vector<64x128xbf16>, vector<64x128xbf16>, vector<64x64xf32> -> vector<64x64xf32>
    "tpu.trace_stop"() : () -> ()
    %cst_20 = arith.constant dense<0xFF800000> : vector<64xf32>
    %34 = vector.multi_reduction <maximumf>, %33, %cst_20 [1] : vector<64x64xf32> to vector<64xf32>
    %35 = vector.shape_cast %34 : vector<64xf32> to vector<64x1xf32>
    %36 = vector.broadcast %35 : vector<64x1xf32> to vector<64x64xf32>
    %37 = arith.subf %33, %36 : vector<64x64xf32>
    %38 = math.exp %37 : vector<64x64xf32>
    %cst_21 = arith.constant dense<0.000000e+00> : vector<64xf32>
    %39 = vector.multi_reduction <add>, %38, %cst_21 [1] : vector<64x64xf32> to vector<64xf32>
    %40 = vector.shape_cast %39 : vector<64xf32> to vector<64x1xf32>
    %41 = arith.truncf %38 : vector<64x64xf32> to vector<64x64xbf16>
    %42 = vector.extract_strided_slice %12 {offsets = [0, 128], sizes = [64, 128], strides = [1, 1]} : vector<64x1024xbf16> to vector<64x128xbf16>
    %cst_22 = arith.constant dense<0.000000e+00> : vector<64x128xf32>
    %43 = tpu.matmul %41, %42, %cst_22 {dimension_numbers = #tpu.dot_dimension_numbers<[1], [0], [0], [1], [0, 0, 1, 1], [], []>} : vector<64x64xbf16>, vector<64x128xbf16>, vector<64x128xf32> -> vector<64x128xf32>
    %44 = tpu.reciprocal %40 {approx = true} : vector<64x1xf32> -> vector<64x1xf32>
    %45 = vector.broadcast %44 : vector<64x1xf32> to vector<64x128xf32>
    %46 = arith.mulf %43, %45 : vector<64x128xf32>
    %47 = arith.truncf %46 : vector<64x128xf32> to vector<64x128xbf16>
    %c0_23 = arith.constant 0 : index
    %c128 = arith.constant 128 : index
    %48 = vector.load %arg11[%c0_23, %c128] : memref<64x1024xbf16, #tpu.memory_space<vmem>>, vector<64x128xbf16>
    tpu.vector_store %arg11[%c0_23, %c128], %47 {strides = array<i32>} : memref<64x1024xbf16, #tpu.memory_space<vmem>>, vector<64x128xbf16>,
    %49 = vector.extract_strided_slice %6 {offsets = [0, 256], sizes = [64, 128], strides = [1, 1]} : vector<64x1024xbf16> to vector<64x128xbf16>
    %50 = vector.extract_strided_slice %9 {offsets = [0, 256], sizes = [64, 128], strides = [1, 1]} : vector<64x1024xbf16> to vector<64x128xbf16>
    "tpu.trace_start"() <{level = 10 : i32, message = "qd,kd->qk"}> : () -> ()
    %cst_24 = arith.constant dense<0.000000e+00> : vector<64x64xf32>
    %51 = tpu.matmul %49, %50, %cst_24 {dimension_numbers = #tpu.dot_dimension_numbers<[1], [1], [0], [0], [0, 0, 1, 0], [], []>} : vector<64x128xbf16>, vector<64x128xbf16>, vector<64x64xf32> -> vector<64x64xf32>
    "tpu.trace_stop"() : () -> ()
    %cst_25 = arith.constant dense<0xFF800000> : vector<64xf32>
    %52 = vector.multi_reduction <maximumf>, %51, %cst_25 [1] : vector<64x64xf32> to vector<64xf32>
    %53 = vector.shape_cast %52 : vector<64xf32> to vector<64x1xf32>
    %54 = vector.broadcast %53 : vector<64x1xf32> to vector<64x64xf32>
    %55 = arith.subf %51, %54 : vector<64x64xf32>
    %56 = math.exp %55 : vector<64x64xf32>
    %cst_26 = arith.constant dense<0.000000e+00> : vector<64xf32>
    %57 = vector.multi_reduction <add>, %56, %cst_26 [1] : vector<64x64xf32> to vector<64xf32>
    %58 = vector.shape_cast %57 : vector<64xf32> to vector<64x1xf32>
    %59 = arith.truncf %56 : vector<64x64xf32> to vector<64x64xbf16>
    %60 = vector.extract_strided_slice %12 {offsets = [0, 256], sizes = [64, 128], strides = [1, 1]} : vector<64x1024xbf16> to vector<64x128xbf16>
    %cst_27 = arith.constant dense<0.000000e+00> : vector<64x128xf32>
    %61 = tpu.matmul %59, %60, %cst_27 {dimension_numbers = #tpu.dot_dimension_numbers<[1], [0], [0], [1], [0, 0, 1, 1], [], []>} : vector<64x64xbf16>, vector<64x128xbf16>, vector<64x128xf32> -> vector<64x128xf32>
    %62 = tpu.reciprocal %58 {approx = true} : vector<64x1xf32> -> vector<64x1xf32>
    %63 = vector.broadcast %62 : vector<64x1xf32> to vector<64x128xf32>
    %64 = arith.mulf %61, %63 : vector<64x128xf32>
    %65 = arith.truncf %64 : vector<64x128xf32> to vector<64x128xbf16>
    %c0_28 = arith.constant 0 : index
    %c256 = arith.constant 256 : index
    %66 = vector.load %arg11[%c0_28, %c256] : memref<64x1024xbf16, #tpu.memory_space<vmem>>, vector<64x128xbf16>
    tpu.vector_store %arg11[%c0_28, %c256], %65 {strides = array<i32>} : memref<64x1024xbf16, #tpu.memory_space<vmem>>, vector<64x128xbf16>,
    %67 = vector.extract_strided_slice %6 {offsets = [0, 384], sizes = [64, 128], strides = [1, 1]} : vector<64x1024xbf16> to vector<64x128xbf16>
    %68 = vector.extract_strided_slice %9 {offsets = [0, 384], sizes = [64, 128], strides = [1, 1]} : vector<64x1024xbf16> to vector<64x128xbf16>
    "tpu.trace_start"() <{level = 10 : i32, message = "qd,kd->qk"}> : () -> ()
    %cst_29 = arith.constant dense<0.000000e+00> : vector<64x64xf32>
    %69 = tpu.matmul %67, %68, %cst_29 {dimension_numbers = #tpu.dot_dimension_numbers<[1], [1], [0], [0], [0, 0, 1, 0], [], []>} : vector<64x128xbf16>, vector<64x128xbf16>, vector<64x64xf32> -> vector<64x64xf32>
    "tpu.trace_stop"() : () -> ()
    %cst_30 = arith.constant dense<0xFF800000> : vector<64xf32>
    %70 = vector.multi_reduction <maximumf>, %69, %cst_30 [1] : vector<64x64xf32> to vector<64xf32>
    %71 = vector.shape_cast %70 : vector<64xf32> to vector<64x1xf32>
    %72 = vector.broadcast %71 : vector<64x1xf32> to vector<64x64xf32>
    %73 = arith.subf %69, %72 : vector<64x64xf32>
    %74 = math.exp %73 : vector<64x64xf32>
    %cst_31 = arith.constant dense<0.000000e+00> : vector<64xf32>
    %75 = vector.multi_reduction <add>, %74, %cst_31 [1] : vector<64x64xf32> to vector<64xf32>
    %76 = vector.shape_cast %75 : vector<64xf32> to vector<64x1xf32>
    %77 = arith.truncf %74 : vector<64x64xf32> to vector<64x64xbf16>
    %78 = vector.extract_strided_slice %12 {offsets = [0, 384], sizes = [64, 128], strides = [1, 1]} : vector<64x1024xbf16> to vector<64x128xbf16>
    %cst_32 = arith.constant dense<0.000000e+00> : vector<64x128xf32>
    %79 = tpu.matmul %77, %78, %cst_32 {dimension_numbers = #tpu.dot_dimension_numbers<[1], [0], [0], [1], [0, 0, 1, 1], [], []>} : vector<64x64xbf16>, vector<64x128xbf16>, vector<64x128xf32> -> vector<64x128xf32>
    %80 = tpu.reciprocal %76 {approx = true} : vector<64x1xf32> -> vector<64x1xf32>
    %81 = vector.broadcast %80 : vector<64x1xf32> to vector<64x128xf32>
    %82 = arith.mulf %79, %81 : vector<64x128xf32>
    %83 = arith.truncf %82 : vector<64x128xf32> to vector<64x128xbf16>
    %c0_33 = arith.constant 0 : index
    %c384 = arith.constant 384 : index
    %84 = vector.load %arg11[%c0_33, %c384] : memref<64x1024xbf16, #tpu.memory_space<vmem>>, vector<64x128xbf16>
    tpu.vector_store %arg11[%c0_33, %c384], %83 {strides = array<i32>} : memref<64x1024xbf16, #tpu.memory_space<vmem>>, vector<64x128xbf16>,
    %85 = vector.extract_strided_slice %6 {offsets = [0, 512], sizes = [64, 128], strides = [1, 1]} : vector<64x1024xbf16> to vector<64x128xbf16>
    %86 = vector.extract_strided_slice %9 {offsets = [0, 512], sizes = [64, 128], strides = [1, 1]} : vector<64x1024xbf16> to vector<64x128xbf16>
    "tpu.trace_start"() <{level = 10 : i32, message = "qd,kd->qk"}> : () -> ()
    %cst_34 = arith.constant dense<0.000000e+00> : vector<64x64xf32>
    %87 = tpu.matmul %85, %86, %cst_34 {dimension_numbers = #tpu.dot_dimension_numbers<[1], [1], [0], [0], [0, 0, 1, 0], [], []>} : vector<64x128xbf16>, vector<64x128xbf16>, vector<64x64xf32> -> vector<64x64xf32>
    "tpu.trace_stop"() : () -> ()
    %cst_35 = arith.constant dense<0xFF800000> : vector<64xf32>
    %88 = vector.multi_reduction <maximumf>, %87, %cst_35 [1] : vector<64x64xf32> to vector<64xf32>
    %89 = vector.shape_cast %88 : vector<64xf32> to vector<64x1xf32>
    %90 = vector.broadcast %89 : vector<64x1xf32> to vector<64x64xf32>
    %91 = arith.subf %87, %90 : vector<64x64xf32>
    %92 = math.exp %91 : vector<64x64xf32>
    %cst_36 = arith.constant dense<0.000000e+00> : vector<64xf32>
    %93 = vector.multi_reduction <add>, %92, %cst_36 [1] : vector<64x64xf32> to vector<64xf32>
    %94 = vector.shape_cast %93 : vector<64xf32> to vector<64x1xf32>
    %95 = arith.truncf %92 : vector<64x64xf32> to vector<64x64xbf16>
    %96 = vector.extract_strided_slice %12 {offsets = [0, 512], sizes = [64, 128], strides = [1, 1]} : vector<64x1024xbf16> to vector<64x128xbf16>
    %cst_37 = arith.constant dense<0.000000e+00> : vector<64x128xf32>
    %97 = tpu.matmul %95, %96, %cst_37 {dimension_numbers = #tpu.dot_dimension_numbers<[1], [0], [0], [1], [0, 0, 1, 1], [], []>} : vector<64x64xbf16>, vector<64x128xbf16>, vector<64x128xf32> -> vector<64x128xf32>
    %98 = tpu.reciprocal %94 {approx = true} : vector<64x1xf32> -> vector<64x1xf32>
    %99 = vector.broadcast %98 : vector<64x1xf32> to vector<64x128xf32>
    %100 = arith.mulf %97, %99 : vector<64x128xf32>
    %101 = arith.truncf %100 : vector<64x128xf32> to vector<64x128xbf16>
    %c0_38 = arith.constant 0 : index
    %c512 = arith.constant 512 : index
    %102 = vector.load %arg11[%c0_38, %c512] : memref<64x1024xbf16, #tpu.memory_space<vmem>>, vector<64x128xbf16>
    tpu.vector_store %arg11[%c0_38, %c512], %101 {strides = array<i32>} : memref<64x1024xbf16, #tpu.memory_space<vmem>>, vector<64x128xbf16>,
    %103 = vector.extract_strided_slice %6 {offsets = [0, 640], sizes = [64, 128], strides = [1, 1]} : vector<64x1024xbf16> to vector<64x128xbf16>
    %104 = vector.extract_strided_slice %9 {offsets = [0, 640], sizes = [64, 128], strides = [1, 1]} : vector<64x1024xbf16> to vector<64x128xbf16>
    "tpu.trace_start"() <{level = 10 : i32, message = "qd,kd->qk"}> : () -> ()
    %cst_39 = arith.constant dense<0.000000e+00> : vector<64x64xf32>
    %105 = tpu.matmul %103, %104, %cst_39 {dimension_numbers = #tpu.dot_dimension_numbers<[1], [1], [0], [0], [0, 0, 1, 0], [], []>} : vector<64x128xbf16>, vector<64x128xbf16>, vector<64x64xf32> -> vector<64x64xf32>
    "tpu.trace_stop"() : () -> ()
    %cst_40 = arith.constant dense<0xFF800000> : vector<64xf32>
    %106 = vector.multi_reduction <maximumf>, %105, %cst_40 [1] : vector<64x64xf32> to vector<64xf32>
    %107 = vector.shape_cast %106 : vector<64xf32> to vector<64x1xf32>
    %108 = vector.broadcast %107 : vector<64x1xf32> to vector<64x64xf32>
    %109 = arith.subf %105, %108 : vector<64x64xf32>
    %110 = math.exp %109 : vector<64x64xf32>
    %cst_41 = arith.constant dense<0.000000e+00> : vector<64xf32>
    %111 = vector.multi_reduction <add>, %110, %cst_41 [1] : vector<64x64xf32> to vector<64xf32>
    %112 = vector.shape_cast %111 : vector<64xf32> to vector<64x1xf32>
    %113 = arith.truncf %110 : vector<64x64xf32> to vector<64x64xbf16>
    %114 = vector.extract_strided_slice %12 {offsets = [0, 640], sizes = [64, 128], strides = [1, 1]} : vector<64x1024xbf16> to vector<64x128xbf16>
    %cst_42 = arith.constant dense<0.000000e+00> : vector<64x128xf32>
    %115 = tpu.matmul %113, %114, %cst_42 {dimension_numbers = #tpu.dot_dimension_numbers<[1], [0], [0], [1], [0, 0, 1, 1], [], []>} : vector<64x64xbf16>, vector<64x128xbf16>, vector<64x128xf32> -> vector<64x128xf32>
    %116 = tpu.reciprocal %112 {approx = true} : vector<64x1xf32> -> vector<64x1xf32>
    %117 = vector.broadcast %116 : vector<64x1xf32> to vector<64x128xf32>
    %118 = arith.mulf %115, %117 : vector<64x128xf32>
    %119 = arith.truncf %118 : vector<64x128xf32> to vector<64x128xbf16>
    %c0_43 = arith.constant 0 : index
    %c640 = arith.constant 640 : index
    %120 = vector.load %arg11[%c0_43, %c640] : memref<64x1024xbf16, #tpu.memory_space<vmem>>, vector<64x128xbf16>
    tpu.vector_store %arg11[%c0_43, %c640], %119 {strides = array<i32>} : memref<64x1024xbf16, #tpu.memory_space<vmem>>, vector<64x128xbf16>,
    %121 = vector.extract_strided_slice %6 {offsets = [0, 768], sizes = [64, 128], strides = [1, 1]} : vector<64x1024xbf16> to vector<64x128xbf16>
    %122 = vector.extract_strided_slice %9 {offsets = [0, 768], sizes = [64, 128], strides = [1, 1]} : vector<64x1024xbf16> to vector<64x128xbf16>
    "tpu.trace_start"() <{level = 10 : i32, message = "qd,kd->qk"}> : () -> ()
    %cst_44 = arith.constant dense<0.000000e+00> : vector<64x64xf32>
    %123 = tpu.matmul %121, %122, %cst_44 {dimension_numbers = #tpu.dot_dimension_numbers<[1], [1], [0], [0], [0, 0, 1, 0], [], []>} : vector<64x128xbf16>, vector<64x128xbf16>, vector<64x64xf32> -> vector<64x64xf32>
    "tpu.trace_stop"() : () -> ()
    %cst_45 = arith.constant dense<0xFF800000> : vector<64xf32>
    %124 = vector.multi_reduction <maximumf>, %123, %cst_45 [1] : vector<64x64xf32> to vector<64xf32>
    %125 = vector.shape_cast %124 : vector<64xf32> to vector<64x1xf32>
    %126 = vector.broadcast %125 : vector<64x1xf32> to vector<64x64xf32>
    %127 = arith.subf %123, %126 : vector<64x64xf32>
    %128 = math.exp %127 : vector<64x64xf32>
    %cst_46 = arith.constant dense<0.000000e+00> : vector<64xf32>
    %129 = vector.multi_reduction <add>, %128, %cst_46 [1] : vector<64x64xf32> to vector<64xf32>
    %130 = vector.shape_cast %129 : vector<64xf32> to vector<64x1xf32>
    %131 = arith.truncf %128 : vector<64x64xf32> to vector<64x64xbf16>
    %132 = vector.extract_strided_slice %12 {offsets = [0, 768], sizes = [64, 128], strides = [1, 1]} : vector<64x1024xbf16> to vector<64x128xbf16>
    %cst_47 = arith.constant dense<0.000000e+00> : vector<64x128xf32>
    %133 = tpu.matmul %131, %132, %cst_47 {dimension_numbers = #tpu.dot_dimension_numbers<[1], [0], [0], [1], [0, 0, 1, 1], [], []>} : vector<64x64xbf16>, vector<64x128xbf16>, vector<64x128xf32> -> vector<64x128xf32>
    %134 = tpu.reciprocal %130 {approx = true} : vector<64x1xf32> -> vector<64x1xf32>
    %135 = vector.broadcast %134 : vector<64x1xf32> to vector<64x128xf32>
    %136 = arith.mulf %133, %135 : vector<64x128xf32>
    %137 = arith.truncf %136 : vector<64x128xf32> to vector<64x128xbf16>
    %c0_48 = arith.constant 0 : index
    %c768 = arith.constant 768 : index
    %138 = vector.load %arg11[%c0_48, %c768] : memref<64x1024xbf16, #tpu.memory_space<vmem>>, vector<64x128xbf16>
    tpu.vector_store %arg11[%c0_48, %c768], %137 {strides = array<i32>} : memref<64x1024xbf16, #tpu.memory_space<vmem>>, vector<64x128xbf16>,
    %139 = vector.extract_strided_slice %6 {offsets = [0, 896], sizes = [64, 128], strides = [1, 1]} : vector<64x1024xbf16> to vector<64x128xbf16>
    %140 = vector.extract_strided_slice %9 {offsets = [0, 896], sizes = [64, 128], strides = [1, 1]} : vector<64x1024xbf16> to vector<64x128xbf16>
    "tpu.trace_start"() <{level = 10 : i32, message = "qd,kd->qk"}> : () -> ()
    %cst_49 = arith.constant dense<0.000000e+00> : vector<64x64xf32>
    %141 = tpu.matmul %139, %140, %cst_49 {dimension_numbers = #tpu.dot_dimension_numbers<[1], [1], [0], [0], [0, 0, 1, 0], [], []>} : vector<64x128xbf16>, vector<64x128xbf16>, vector<64x64xf32> -> vector<64x64xf32>
    "tpu.trace_stop"() : () -> ()
    %cst_50 = arith.constant dense<0xFF800000> : vector<64xf32>
    %142 = vector.multi_reduction <maximumf>, %141, %cst_50 [1] : vector<64x64xf32> to vector<64xf32>
    %143 = vector.shape_cast %142 : vector<64xf32> to vector<64x1xf32>
    %144 = vector.broadcast %143 : vector<64x1xf32> to vector<64x64xf32>
    %145 = arith.subf %141, %144 : vector<64x64xf32>
    %146 = math.exp %145 : vector<64x64xf32>
    %cst_51 = arith.constant dense<0.000000e+00> : vector<64xf32>
    %147 = vector.multi_reduction <add>, %146, %cst_51 [1] : vector<64x64xf32> to vector<64xf32>
    %148 = vector.shape_cast %147 : vector<64xf32> to vector<64x1xf32>
    %149 = arith.truncf %146 : vector<64x64xf32> to vector<64x64xbf16>
    %150 = vector.extract_strided_slice %12 {offsets = [0, 896], sizes = [64, 128], strides = [1, 1]} : vector<64x1024xbf16> to vector<64x128xbf16>
    %cst_52 = arith.constant dense<0.000000e+00> : vector<64x128xf32>
    %151 = tpu.matmul %149, %150, %cst_52 {dimension_numbers = #tpu.dot_dimension_numbers<[1], [0], [0], [1], [0, 0, 1, 1], [], []>} : vector<64x64xbf16>, vector<64x128xbf16>, vector<64x128xf32> -> vector<64x128xf32>
    %152 = tpu.reciprocal %148 {approx = true} : vector<64x1xf32> -> vector<64x1xf32>
    %153 = vector.broadcast %152 : vector<64x1xf32> to vector<64x128xf32>
    %154 = arith.mulf %151, %153 : vector<64x128xf32>
    %155 = arith.truncf %154 : vector<64x128xf32> to vector<64x128xbf16>
    %c0_53 = arith.constant 0 : index
    %c896 = arith.constant 896 : index
    %156 = vector.load %arg11[%c0_53, %c896] : memref<64x1024xbf16, #tpu.memory_space<vmem>>, vector<64x128xbf16>
    tpu.vector_store %arg11[%c0_53, %c896], %155 {strides = array<i32>} : memref<64x1024xbf16, #tpu.memory_space<vmem>>, vector<64x128xbf16>,
    %c0_54 = arith.constant 0 : index
    %c0_55 = arith.constant 0 : index
    %157 = vector.load %arg11[%c0_54, %c0_55] : memref<64x1024xbf16, #tpu.memory_space<vmem>>, vector<64x1024xbf16>
    %c0_56 = arith.constant 0 : index
    %c0_57 = arith.constant 0 : index
    %158 = vector.load %arg7[%c0_56, %c0_57] : memref<1024x72xbf16, #tpu.memory_space<vmem>>, vector<1024x72xbf16>
    %cst_58 = arith.constant dense<0.000000e+00> : vector<64x72xf32>
    %159 = tpu.matmul %157, %158, %cst_58 {dimension_numbers = #tpu.dot_dimension_numbers<[1], [0], [0], [1], [0, 0, 1, 1], [], []>} : vector<64x1024xbf16>, vector<1024x72xbf16>, vector<64x72xf32> -> vector<64x72xf32>
    %c0_59 = arith.constant 0 : index
    %c0_60 = arith.constant 0 : index
    %160 = vector.load %arg8[%c0_59, %c0_60] : memref<1x72xf32, #tpu.memory_space<vmem>>, vector<1x72xf32>
    %161 = vector.broadcast %160 : vector<1x72xf32> to vector<64x72xf32>
    %162 = arith.addf %159, %161 : vector<64x72xf32>
    %163 = arith.extf %1 : vector<64x72xbf16> to vector<64x72xf32>
    %164 = arith.addf %162, %163 : vector<64x72xf32>
    %165 = arith.truncf %164 : vector<64x72xf32> to vector<64x72xbf16>
    %c0_61 = arith.constant 0 : index
    %c0_62 = arith.constant 0 : index
    %166 = vector.load %arg9[%c0_61, %c0_62] : memref<72x128xbf16, #tpu.memory_space<vmem>>, vector<72x128xbf16>
    %cst_63 = arith.constant dense<0.000000e+00> : vector<64x128xf32>
    %167 = tpu.matmul %165, %166, %cst_63 {dimension_numbers = #tpu.dot_dimension_numbers<[1], [0], [0], [1], [0, 0, 1, 1], [], []>} : vector<64x72xbf16>, vector<72x128xbf16>, vector<64x128xf32> -> vector<64x128xf32>
    %168 = arith.negf %167 : vector<64x128xf32>
    %169 = math.exp %168 : vector<64x128xf32>
    %cst_64 = arith.constant 1.000000e+00 : f32
    %170 = vector.broadcast %cst_64 : f32 to vector<64x128xf32>
    %171 = arith.addf %170, %169 : vector<64x128xf32>
    %172 = arith.divf %170, %171 : vector<64x128xf32>
    %173 = arith.mulf %167, %172 : vector<64x128xf32>
    %c0_65 = arith.constant 0 : index
    %c0_66 = arith.constant 0 : index
    %c0_67 = arith.constant 0 : index
    %174 = vector.load %arg10[%c0_65, %c0_66, %c0_67] : memref<1x64x128xf32, #tpu.memory_space<vmem>>, vector<1x64x128xf32>
    %175 = vector.shape_cast %174 : vector<1x64x128xf32> to vector<64x128xf32>
    %176 = vector.shape_cast %173 : vector<64x128xf32> to vector<1x64x128xf32>
    tpu.vector_store %arg10[%c0_65, %c0_66, %c0_67], %176 {strides = array<i32>} : memref<1x64x128xf32, #tpu.memory_space<vmem>>, vector<1x64x128xf32>,
    return
  }
  func.func @transform_0(%arg0: i32, %arg1: i32) -> (i32, i32, i32) {
    %c0_i32 = arith.constant 0 : i32
    %c0_i32_0 = arith.constant 0 : i32
    return %arg0, %arg1, %c0_i32 : i32, i32, i32
  }
  func.func @transform_1(%arg0: i32, %arg1: i32) -> (i32, i32, i32) {
    %c0_i32 = arith.constant 0 : i32
    %c0_i32_0 = arith.constant 0 : i32
    %c0_i32_1 = arith.constant 0 : i32
    return %arg0, %c0_i32, %c0_i32_0 : i32, i32, i32
  }
  func.func @transform_2(%arg0: i32, %arg1: i32) -> (i32, i32) {
    %c0_i32 = arith.constant 0 : i32
    %c0_i32_0 = arith.constant 0 : i32
    %c0_i32_1 = arith.constant 0 : i32
    return %c0_i32, %c0_i32_0 : i32, i32
  }
  func.func @transform_3(%arg0: i32, %arg1: i32) -> (i32, i32) {
    %c0_i32 = arith.constant 0 : i32
    %c0_i32_0 = arith.constant 0 : i32
    %c0_i32_1 = arith.constant 0 : i32
    return %c0_i32, %c0_i32_0 : i32, i32
  }
  func.func @transform_4(%arg0: i32, %arg1: i32) -> (i32, i32) {
    %c0_i32 = arith.constant 0 : i32
    %c0_i32_0 = arith.constant 0 : i32
    %c0_i32_1 = arith.constant 0 : i32
    return %c0_i32, %c0_i32_0 : i32, i32
  }
  func.func @transform_5(%arg0: i32, %arg1: i32) -> (i32, i32) {
    %c0_i32 = arith.constant 0 : i32
    %c0_i32_0 = arith.constant 0 : i32
    %c0_i32_1 = arith.constant 0 : i32
    return %c0_i32, %c0_i32_0 : i32, i32
  }
  func.func @transform_6(%arg0: i32, %arg1: i32) -> (i32, i32) {
    %c0_i32 = arith.constant 0 : i32
    %c0_i32_0 = arith.constant 0 : i32
    %c0_i32_1 = arith.constant 0 : i32
    return %c0_i32, %c0_i32_0 : i32, i32
  }
  func.func @transform_7(%arg0: i32, %arg1: i32) -> (i32, i32) {
    %c0_i32 = arith.constant 0 : i32
    %c0_i32_0 = arith.constant 0 : i32
    %c0_i32_1 = arith.constant 0 : i32
    return %c0_i32, %c0_i32_0 : i32, i32
  }
  func.func @transform_8(%arg0: i32, %arg1: i32) -> (i32, i32, i32) {
    %c0_i32 = arith.constant 0 : i32
    %c0_i32_0 = arith.constant 0 : i32
    return %arg0, %arg1, %c0_i32 : i32, i32, i32
  }
}

</mosaic_0001>

<llo_original>
// kernel: tpu_custom_call.1
$region0: #{tpu_custom_call.1}
  #allocation0 [shape = 'u32[]', space=smem, size = 0x4, offset = 0x4, fixed_abs, tag = 'smem constant byte address 0x4 - core index']
  #allocation1 [shape = 'u32[144,128]{1,0:T(1,128)}', space=vmem, size = 0x12000, scoped, tag = 'internal scratch']
  #allocation2 [shape = 'bf16[64,1024]{1,0:T(16,128)(2,1)}', space=vmem, size = 0x20000, scoped, tag = 'scratch operand']
  %s0 = inlined_call_operand.hbm [shape: bf16[2,64,72], index: 0, kind: input, shape index: {}]
  %s1 = inlined_call_operand.hbm [shape: bf16[2,64,72], index: 1, kind: input, shape index: {}]
  %s2 = inlined_call_operand.hbm [shape: bf16[72,1024], index: 2, kind: input, shape index: {}]
  %s3 = inlined_call_operand.hbm [shape: bf16[72,1024], index: 3, kind: input, shape index: {}]
  %s4 = inlined_call_operand.hbm [shape: bf16[72,1024], index: 4, kind: input, shape index: {}]
  %s5 = inlined_call_operand.hbm [shape: bf16[1024,72], index: 5, kind: input, shape index: {}]
  %s6 = inlined_call_operand.hbm [shape: f32[1,72], index: 6, kind: input, shape index: {}]
  %s7 = inlined_call_operand.hbm [shape: bf16[72,128], index: 7, kind: input, shape index: {}]
  %s8 = inlined_call_operand.hbm [shape: f32[2,64,128], index: 8, kind: output, shape index: {}]
  %s9 = sld [smem:[#allocation0]]
  $region97: #{tpu_custom_call.1} parent=0
    _
  %s11 = ssub.s32 1, %s9
  %s12 = scalar_select 0, %s11, %s9
  $region1: #{tpu_custom_call.1} parent=0
    #allocation3 [shape = 'u8[32768]{0}', space=vmem, size = 0x8000, scoped, tag = 'input window, operand 0']
    #allocation4 [shape = 's32[2]{0}', space=sflag, size = 0x8, scoped, tag = 'scoped memory for tpu_custom_call.1']
    #allocation5 [shape = 's32[2]{0}', space=sflag, size = 0x8, scoped, tag = 'scoped memory for tpu_custom_call.1']
    #allocation6 [shape = 'u8[32768]{0}', space=vmem, size = 0x8000, scoped, tag = 'input window, operand 1']
    #allocation7 [shape = 's32[2]{0}', space=sflag, size = 0x8, scoped, tag = 'scoped memory for tpu_custom_call.1']
    #allocation8 [shape = 'u8[147456]{0}', space=vmem, size = 0x24000, scoped, tag = 'input window, operand 2, single buffered']
    #allocation9 [shape = 'u8[147456]{0}', space=vmem, size = 0x24000, scoped, tag = 'input window, operand 3, single buffered']
    #allocation10 [shape = 's32[1]{0}', space=sflag, size = 0x4, scoped, tag = 'scoped memory for tpu_custom_call.1']
    #allocation11 [shape = 'u8[147456]{0}', space=vmem, size = 0x24000, scoped, tag = 'input window, operand 4, single buffered']
    #allocation12 [shape = 'u8[262144]{0}', space=vmem, size = 0x40000, scoped, tag = 'input window, operand 5, single buffered']
    #allocation13 [shape = 's32[1]{0}', space=sflag, size = 0x4, scoped, tag = 'scoped memory for tpu_custom_call.1']
    #allocation14 [shape = 'u8[512]{0}', space=vmem, size = 0x400, scoped, tag = 'input window, operand 6, single buffered']
    #allocation15 [shape = 'u8[18432]{0}', space=vmem, size = 0x4800, scoped, tag = 'input window, operand 7, single buffered']
    #allocation16 [shape = 's32[1]{0}', space=sflag, size = 0x4, scoped, tag = 'scoped memory for tpu_custom_call.1']
    #allocation17 [shape = 'u8[65536]{0}', space=vmem, size = 0x10000, scoped, tag = 'output window, operand 0']
    %13 = vsyncpa [#allocation4], 0
    %s14 = scalar_lea.sflag [#allocation4], 1
    %15 = vsyncpa %s14, 0
    %16 = vsyncpa [#allocation7], 0
    %s17 = scalar_lea.sflag [#allocation7], 1
    %18 = vsyncpa %s17, 0
    %19 = vsyncpa [#allocation10], 0
    %20 = vsyncpa [#allocation13], 0
    %21 = vsyncpa [#allocation16], 0
    %22 = vsyncpa [#allocation5], 0
    %s23 = scalar_lea.sflag [#allocation5], 1
    %24 = vsyncpa %s23, 0
    loop: start=0, step=1, limit=4
    $region2: #{tpu_custom_call.1} parent=1 // loop_pre_header
      _
    $region3: #{tpu_custom_call.1} parent=1 // loop_header
      %s26 = sphi 0, %s30
      %p27 = scmp.ge.s32.totalorder %s26, 4
      %s33 = sphi 0, %s45
      %s34 = sphi 0, %s41
      %s35 = sphi 0, %s33
      %s36 = sphi 0, %s34
      %s37 = sphi 0, %s35
      %s38 = sphi 0, %s36
      %s50 = sphi 0, %s52
      %s53 = sphi 0, %s50
      %s54 = sphi 0, %s53
      %s70 = sphi 0, %s54
      %s76 = sphi 0, %s78
      %s79 = sphi 0, %s76
      %s80 = sphi 0, %s79
      %s96 = sphi 0, %s80
      %s100 = sphi 0, %s100
      %s102 = sphi 0, %s100
      %s103 = sphi 0, %s102
      %s117 = sphi 0, %s103
      %s121 = sphi 0, %s121
      %s123 = sphi 0, %s121
      %s124 = sphi 0, %s123
      %s138 = sphi 0, %s124
      %s142 = sphi 0, %s142
      %s144 = sphi 0, %s142
      %s145 = sphi 0, %s144
      %s159 = sphi 0, %s145
      %s163 = sphi 0, %s163
      %s165 = sphi 0, %s163
      %s166 = sphi 0, %s165
      %s180 = sphi 0, %s166
      %s184 = sphi 0, %s184
      %s186 = sphi 0, %s184
      %s187 = sphi 0, %s186
      %s201 = sphi 0, %s187
      %s205 = sphi 0, %s205
      %s207 = sphi 0, %s205
      %s208 = sphi 0, %s207
      %s222 = sphi 0, %s208
      %s230 = sphi 0, %s232
      %s233 = sphi 0, %s230
      %s234 = sphi 0, %s233
      %s250 = sphi 0, %s234
    $region4: #{tpu_custom_call.1} parent=1 // loop_header_branch
      %29 = sbr.rel (%p27) target = $region8
    $region5: #{tpu_custom_call.1} parent=1 // loop_body
      %s31 = ssub.s32 %s26, 1
      %s32 = ssub.s32 %s26, 2
      %s39 = sadd.s32 1, %s34
      %p40 = scmp.ge.s32.totalorder %s39, 1
      %s41 = scalar_select %p40, 0, %s39
      %s42 = sadd.s32 1, %s33
      %s43 = scalar_select %p40, %s42, %s33
      %p44 = scmp.ge.s32.totalorder %s43, 2
      %s45 = scalar_select %p44, 0, %s43
      %s46 = ssub.s32 %s33, %s45
      %s47 = ssub.s32 %s34, %s41
      %s48 = sor.u32 %s46, %s47
      %p49 = scmp.eq.s32.totalorder %s48, 0
      %s51 = sadd.s32 %s50, 1
      %s52 = scalar_select %p49, %s50, %s51
      %p55 = pneg %p49
      %p56 = scmp.eq.s32.totalorder %s26, 1
      %p57 = por %p55, %p56
      %p58 = scmp.ne.s32.totalorder %s50, %s53
      %p59 = scmp.eq.s32.totalorder %s26, 0
      %p60 = por %p58, %p59
      %p61 = scmp.ne.s32.totalorder %s50, %s53
      %p62 = scmp.eq.s32.totalorder %s31, 1
      %p63 = por %p61, %p62
      %p64 = scmp.ne.s32.totalorder %s53, %s54
      %p65 = scmp.eq.s32.totalorder %s31, 0
      %p66 = por %p64, %p65
      %p67 = scmp.ne.s32.totalorder %s53, %s54
      %p68 = scmp.eq.s32.totalorder %s32, 1
      %p69 = por %p67, %p68
      %p71 = scmp.ne.s32.totalorder %s54, %s70
      %p72 = scmp.eq.s32.totalorder %s32, 0
      %p73 = por %p71, %p72
      %s74 = ssub.s32 %s33, %s45
      %p75 = scmp.eq.s32.totalorder %s74, 0
      %s77 = sadd.s32 %s76, 1
      %s78 = scalar_select %p75, %s76, %s77
      %p81 = pneg %p75
      %p82 = scmp.eq.s32.totalorder %s26, 1
      %p83 = por %p81, %p82
      %p84 = scmp.ne.s32.totalorder %s76, %s79
      %p85 = scmp.eq.s32.totalorder %s26, 0
      %p86 = por %p84, %p85
      %p87 = scmp.ne.s32.totalorder %s76, %s79
      %p88 = scmp.eq.s32.totalorder %s31, 1
      %p89 = por %p87, %p88
      %p90 = scmp.ne.s32.totalorder %s79, %s80
      %p91 = scmp.eq.s32.totalorder %s31, 0
      %p92 = por %p90, %p91
      %p93 = scmp.ne.s32.totalorder %s79, %s80
      %p94 = scmp.eq.s32.totalorder %s32, 1
      %p95 = por %p93, %p94
      %p97 = scmp.ne.s32.totalorder %s80, %s96
      %p98 = scmp.eq.s32.totalorder %s32, 0
      %p99 = por %p97, %p98
      %s101 = sadd.s32 %s100, 1
      %p104 = scmp.eq.s32.totalorder %s26, 1
      %p105 = scmp.ne.s32.totalorder %s100, %s102
      %p106 = scmp.eq.s32.totalorder %s26, 0
      %p107 = por %p105, %p106
      %p108 = scmp.ne.s32.totalorder %s100, %s102
      %p109 = scmp.eq.s32.totalorder %s31, 1
      %p110 = por %p108, %p109
      %p111 = scmp.ne.s32.totalorder %s102, %s103
      %p112 = scmp.eq.s32.totalorder %s31, 0
      %p113 = por %p111, %p112
      %p114 = scmp.ne.s32.totalorder %s102, %s103
      %p115 = scmp.eq.s32.totalorder %s32, 1
      %p116 = por %p114, %p115
      %p118 = scmp.ne.s32.totalorder %s103, %s117
      %p119 = scmp.eq.s32.totalorder %s32, 0
      %p120 = por %p118, %p119
      %s122 = sadd.s32 %s121, 1
      %p125 = scmp.eq.s32.totalorder %s26, 1
      %p126 = scmp.ne.s32.totalorder %s121, %s123
      %p127 = scmp.eq.s32.totalorder %s26, 0
      %p128 = por %p126, %p127
      %p129 = scmp.ne.s32.totalorder %s121, %s123
      %p130 = scmp.eq.s32.totalorder %s31, 1
      %p131 = por %p129, %p130
      %p132 = scmp.ne.s32.totalorder %s123, %s124
      %p133 = scmp.eq.s32.totalorder %s31, 0
      %p134 = por %p132, %p133
      %p135 = scmp.ne.s32.totalorder %s123, %s124
      %p136 = scmp.eq.s32.totalorder %s32, 1
      %p137 = por %p135, %p136
      %p139 = scmp.ne.s32.totalorder %s124, %s138
      %p140 = scmp.eq.s32.totalorder %s32, 0
      %p141 = por %p139, %p140
      %s143 = sadd.s32 %s142, 1
      %p146 = scmp.eq.s32.totalorder %s26, 1
      %p147 = scmp.ne.s32.totalorder %s142, %s144
      %p148 = scmp.eq.s32.totalorder %s26, 0
      %p149 = por %p147, %p148
      %p150 = scmp.ne.s32.totalorder %s142, %s144
      %p151 = scmp.eq.s32.totalorder %s31, 1
      %p152 = por %p150, %p151
      %p153 = scmp.ne.s32.totalorder %s144, %s145
      %p154 = scmp.eq.s32.totalorder %s31, 0
      %p155 = por %p153, %p154
      %p156 = scmp.ne.s32.totalorder %s144, %s145
      %p157 = scmp.eq.s32.totalorder %s32, 1
      %p158 = por %p156, %p157
      %p160 = scmp.ne.s32.totalorder %s145, %s159
      %p161 = scmp.eq.s32.totalorder %s32, 0
      %p162 = por %p160, %p161
      %s164 = sadd.s32 %s163, 1
      %p167 = scmp.eq.s32.totalorder %s26, 1
      %p168 = scmp.ne.s32.totalorder %s163, %s165
      %p169 = scmp.eq.s32.totalorder %s26, 0
      %p170 = por %p168, %p169
      %p171 = scmp.ne.s32.totalorder %s163, %s165
      %p172 = scmp.eq.s32.totalorder %s31, 1
      %p173 = por %p171, %p172
      %p174 = scmp.ne.s32.totalorder %s165, %s166
      %p175 = scmp.eq.s32.totalorder %s31, 0
      %p176 = por %p174, %p175
      %p177 = scmp.ne.s32.totalorder %s165, %s166
      %p178 = scmp.eq.s32.totalorder %s32, 1
      %p179 = por %p177, %p178
      %p181 = scmp.ne.s32.totalorder %s166, %s180
      %p182 = scmp.eq.s32.totalorder %s32, 0
      %p183 = por %p181, %p182
      %s185 = sadd.s32 %s184, 1
      %p188 = scmp.eq.s32.totalorder %s26, 1
      %p189 = scmp.ne.s32.totalorder %s184, %s186
      %p190 = scmp.eq.s32.totalorder %s26, 0
      %p191 = por %p189, %p190
      %p192 = scmp.ne.s32.totalorder %s184, %s186
      %p193 = scmp.eq.s32.totalorder %s31, 1
      %p194 = por %p192, %p193
      %p195 = scmp.ne.s32.totalorder %s186, %s187
      %p196 = scmp.eq.s32.totalorder %s31, 0
      %p197 = por %p195, %p196
      %p198 = scmp.ne.s32.totalorder %s186, %s187
      %p199 = scmp.eq.s32.totalorder %s32, 1
      %p200 = por %p198, %p199
      %p202 = scmp.ne.s32.totalorder %s187, %s201
      %p203 = scmp.eq.s32.totalorder %s32, 0
      %p204 = por %p202, %p203
      %s206 = sadd.s32 %s205, 1
      %p209 = scmp.eq.s32.totalorder %s26, 1
      %p210 = scmp.ne.s32.totalorder %s205, %s207
      %p211 = scmp.eq.s32.totalorder %s26, 0
      %p212 = por %p210, %p211
      %p213 = scmp.ne.s32.totalorder %s205, %s207
      %p214 = scmp.eq.s32.totalorder %s31, 1
      %p215 = por %p213, %p214
      %p216 = scmp.ne.s32.totalorder %s207, %s208
      %p217 = scmp.eq.s32.totalorder %s31, 0
      %p218 = por %p216, %p217
      %p219 = scmp.ne.s32.totalorder %s207, %s208
      %p220 = scmp.eq.s32.totalorder %s32, 1
      %p221 = por %p219, %p220
      %p223 = scmp.ne.s32.totalorder %s208, %s222
      %p224 = scmp.eq.s32.totalorder %s32, 0
      %p225 = por %p223, %p224
      %s226 = ssub.s32 %s33, %s45
      %s227 = ssub.s32 %s34, %s41
      %s228 = sor.u32 %s226, %s227
      %p229 = scmp.eq.s32.totalorder %s228, 0
      %s231 = sadd.s32 %s230, 1
      %s232 = scalar_select %p229, %s230, %s231
      %p235 = pneg %p229
      %p236 = scmp.eq.s32.totalorder %s26, 1
      %p237 = por %p235, %p236
      %p238 = scmp.ne.s32.totalorder %s230, %s233
      %p239 = scmp.eq.s32.totalorder %s26, 0
      %p240 = por %p238, %p239
      %p241 = scmp.ne.s32.totalorder %s230, %s233
      %p242 = scmp.eq.s32.totalorder %s31, 1
      %p243 = por %p241, %p242
      %p244 = scmp.ne.s32.totalorder %s233, %s234
      %p245 = scmp.eq.s32.totalorder %s31, 0
      %p246 = por %p244, %p245
      %p247 = scmp.ne.s32.totalorder %s233, %s234
      %p248 = scmp.eq.s32.totalorder %s32, 1
      %p249 = por %p247, %p248
      %p251 = scmp.ne.s32.totalorder %s234, %s250
      %p252 = scmp.eq.s32.totalorder %s32, 0
      %p253 = por %p251, %p252
      %p254 = scmp.le.s32.totalorder 1, %s26
      %p255 = scmp.lt.s32.totalorder %s26, 3
      %p256 = pnand %p254, %p255
      %p257 = pneg %p256
      // Predicated region
      $region9: #{tpu_custom_call.1} parent=5 // pred_check
        _
      $region10: #{tpu_custom_call.1} parent=5 // pred_check_branch
        %259 = sbr.rel (%p256) target = $region12
      $region11: #{tpu_custom_call.1} parent=5 // pred_region
        %s260 = ssub.s32 %s26, 1
        // Predicated region
        $region13: #{tpu_custom_call.1} parent=11 // pred_check
          %p261 = pneg %p113
        $region14: #{tpu_custom_call.1} parent=11 // pred_check_branch
          %263 = sbr.rel (%p261) target = $region16
        $region15: #{tpu_custom_call.1} parent=11 // pred_region
          %s265 = ssub.s32 4608, 4608
          %266 = vsyncadd [#allocation7], %s265
          %s267 = sshll.u32 [#allocation8], 4
          %s268 = int_to_ptr.vmem [resolvable:$true] %s267
          %273 = dma.hbm_to_vmem [thread:$0]  %s2, 4608, %s268, [#allocation7], 512, 512, 32
        $region16: #{tpu_custom_call.1} parent=11 // pred_fallthru
          _
        // Predicated region
        $region17: #{tpu_custom_call.1} parent=11 // pred_check
          %p274 = pneg %p134
        $region18: #{tpu_custom_call.1} parent=11 // pred_check_branch
          %276 = sbr.rel (%p274) target = $region20
        $region19: #{tpu_custom_call.1} parent=11 // pred_region
          %s278 = ssub.s32 4608, 4608
          %279 = vsyncadd [#allocation10], %s278
          %s280 = sshll.u32 [#allocation9], 4
          %s281 = int_to_ptr.vmem [resolvable:$true] %s280
          %286 = dma.hbm_to_vmem [thread:$0]  %s3, 4608, %s281, [#allocation10], 512, 512, 32
        $region20: #{tpu_custom_call.1} parent=11 // pred_fallthru
          _
        // Predicated region
        $region21: #{tpu_custom_call.1} parent=11 // pred_check
          %p287 = pneg %p155
        $region22: #{tpu_custom_call.1} parent=11 // pred_check_branch
          %289 = sbr.rel (%p287) target = $region24
        $region23: #{tpu_custom_call.1} parent=11 // pred_region
          %s291 = ssub.s32 4608, 4608
          %292 = vsyncadd [#allocation10], %s291
          %s293 = sshll.u32 [#allocation11], 4
          %s294 = int_to_ptr.vmem [resolvable:$true] %s293
          %299 = dma.hbm_to_vmem [thread:$0]  %s4, 4608, %s294, [#allocation10], 512, 512, 32
        $region24: #{tpu_custom_call.1} parent=11 // pred_fallthru
          _
        // Predicated region
        $region25: #{tpu_custom_call.1} parent=11 // pred_check
          %p300 = pneg %p176
        $region26: #{tpu_custom_call.1} parent=11 // pred_check_branch
          %302 = sbr.rel (%p300) target = $region28
        $region27: #{tpu_custom_call.1} parent=11 // pred_region
          %s304 = ssub.s32 8192, 8192
          %305 = vsyncadd [#allocation13], %s304
          %s306 = sshll.u32 [#allocation12], 4
          %s307 = int_to_ptr.vmem [resolvable:$true] %s306
          %312 = dma.hbm_to_vmem [thread:$0]  %s5, 8192, %s307, [#allocation13], 64, 64, 4
        $region28: #{tpu_custom_call.1} parent=11 // pred_fallthru
          _
        // Predicated region
        $region29: #{tpu_custom_call.1} parent=11 // pred_check
          %p313 = pneg %p197
        $region30: #{tpu_custom_call.1} parent=11 // pred_check_branch
          %315 = sbr.rel (%p313) target = $region32
        $region31: #{tpu_custom_call.1} parent=11 // pred_region
          %s317 = ssub.s32 16, 16
          %318 = vsyncadd [#allocation13], %s317
          %s320 = sshll.u32 [#allocation14], 4
          %s321 = int_to_ptr.vmem [resolvable:$true] %s320
          %323 = dma.hbm_to_vmem [thread:$0]  %s6, 16, %s321, [#allocation13]
        $region32: #{tpu_custom_call.1} parent=11 // pred_fallthru
          _
        // Predicated region
        $region33: #{tpu_custom_call.1} parent=11 // pred_check
          %p324 = pneg %p218
        $region34: #{tpu_custom_call.1} parent=11 // pred_check_branch
          %326 = sbr.rel (%p324) target = $region36
        $region35: #{tpu_custom_call.1} parent=11 // pred_region
          %s328 = ssub.s32 576, 576
          %329 = vsyncadd [#allocation16], %s328
          %s330 = sshll.u32 [#allocation15], 4
          %s331 = int_to_ptr.vmem [resolvable:$true] %s330
          %336 = dma.hbm_to_vmem [thread:$0]  %s7, 576, %s331, [#allocation16], 64, 64, 4
        $region36: #{tpu_custom_call.1} parent=11 // pred_fallthru
          _
      $region12: #{tpu_custom_call.1} parent=5 // pred_fallthru
        _
      %p337 = scmp.lt.s32.totalorder %s26, 2
      // Predicated region
      $region37: #{tpu_custom_call.1} parent=5 // pred_check
        %p338 = pneg %p337
      $region38: #{tpu_custom_call.1} parent=5 // pred_check_branch
        %340 = sbr.rel (%p338) target = $region40
      $region39: #{tpu_custom_call.1} parent=5 // pred_region
        // Predicated region
        $region41: #{tpu_custom_call.1} parent=39 // pred_check
          %p341 = pneg %p60
        $region42: #{tpu_custom_call.1} parent=39 // pred_check_branch
          %343 = sbr.rel (%p341) target = $region44
        $region43: #{tpu_custom_call.1} parent=39 // pred_region
          %s344 = sand.u32 %s50, 1
          %s345 = scalar_lea.sflag [#allocation4], %s344
          %s346 = sand.u32 %s50, 1
          %s347 = smul.addr %s346, 32
          %s348 = scalar_lea.vmem [#allocation3], %s347
          %s349 = smul.u32 8, %s34
          %s351 = ssub.s32 512, 512
          %352 = vsyncadd %s345, %s351
          %s353 = smul.addr %s33, 8
          %s354 = sadd.s32 %s349, %s353
          %s355 = smul.addr %s354, 64
          %s356 = scalar_lea.hbm %s0, %s355
          %s357 = sshll.u32 %s348, 4
          %s358 = int_to_ptr.vmem [resolvable:$true] %s357
          %363 = dma.hbm_to_vmem [thread:$0]  %s356, 512, %s358, %s345, 64, 64, 4
        $region44: #{tpu_custom_call.1} parent=39 // pred_fallthru
          _
        // Predicated region
        $region45: #{tpu_custom_call.1} parent=39 // pred_check
          %p364 = pneg %p86
        $region46: #{tpu_custom_call.1} parent=39 // pred_check_branch
          %366 = sbr.rel (%p364) target = $region48
        $region47: #{tpu_custom_call.1} parent=39 // pred_region
          %s367 = sand.u32 %s26, 1
          %s368 = scalar_lea.sflag [#allocation7], %s367
          %s369 = sand.u32 %s76, 1
          %s370 = smul.addr %s369, 32
          %s371 = scalar_lea.vmem [#allocation6], %s370
          %s373 = ssub.s32 512, 512
          %374 = vsyncadd %s368, %s373
          %s375 = smul.addr %s33, 8
          %s376 = smul.addr %s375, 64
          %s377 = scalar_lea.hbm %s1, %s376
          %s378 = sshll.u32 %s371, 4
          %s379 = int_to_ptr.vmem [resolvable:$true] %s378
          %384 = dma.hbm_to_vmem [thread:$0]  %s377, 512, %s379, %s368, 64, 64, 4
        $region48: #{tpu_custom_call.1} parent=39 // pred_fallthru
          _
      $region40: #{tpu_custom_call.1} parent=5 // pred_fallthru
        _
      %p385 = scmp.le.s32.totalorder 1, %s26
      %p386 = scmp.lt.s32.totalorder %s26, 3
      %p387 = pnand %p385, %p386
      %p388 = pneg %p387
      // Predicated region
      $region49: #{tpu_custom_call.1} parent=5 // pred_check
        _
      $region50: #{tpu_custom_call.1} parent=5 // pred_check_branch
        %390 = sbr.rel (%p387) target = $region52
      $region51: #{tpu_custom_call.1} parent=5 // pred_region
        %s391 = ssub.s32 %s26, 1
        %s392 = sand.u32 %s53, 1
        %s393 = scalar_lea.sflag [#allocation4], %s392
        %s394 = sand.u32 %s53, 1
        %s395 = smul.addr %s394, 32
        %s396 = scalar_lea.vmem [#allocation3], %s395
        // Predicated region
        $region53: #{tpu_custom_call.1} parent=51 // pred_check
          %p397 = pneg %p66
        $region54: #{tpu_custom_call.1} parent=51 // pred_check_branch
          %399 = sbr.rel (%p397) target = $region56
        $region55: #{tpu_custom_call.1} parent=51 // pred_region
          %400 = dma.done %s393, 512
        $region56: #{tpu_custom_call.1} parent=51 // pred_fallthru
          _
        %s401 = sand.u32 %s31, 1
        %s402 = scalar_lea.sflag [#allocation7], %s401
        %s403 = sand.u32 %s79, 1
        %s404 = smul.addr %s403, 32
        %s405 = scalar_lea.vmem [#allocation6], %s404
        // Predicated region
        $region57: #{tpu_custom_call.1} parent=51 // pred_check
          %p406 = pneg %p92
        $region58: #{tpu_custom_call.1} parent=51 // pred_check_branch
          %408 = sbr.rel (%p406) target = $region60
        $region59: #{tpu_custom_call.1} parent=51 // pred_region
          %409 = dma.done %s402, 512
        $region60: #{tpu_custom_call.1} parent=51 // pred_fallthru
          _
        // Predicated region
        $region61: #{tpu_custom_call.1} parent=51 // pred_check
          %p410 = pneg %p113
        $region62: #{tpu_custom_call.1} parent=51 // pred_check_branch
          %412 = sbr.rel (%p410) target = $region64
        $region63: #{tpu_custom_call.1} parent=51 // pred_region
          %413 = dma.done [#allocation7], 4608
        $region64: #{tpu_custom_call.1} parent=51 // pred_fallthru
          _
        // Predicated region
        $region65: #{tpu_custom_call.1} parent=51 // pred_check
          %p414 = pneg %p134
        $region66: #{tpu_custom_call.1} parent=51 // pred_check_branch
          %416 = sbr.rel (%p414) target = $region68
        $region67: #{tpu_custom_call.1} parent=51 // pred_region
          %417 = dma.done [#allocation10], 4608
        $region68: #{tpu_custom_call.1} parent=51 // pred_fallthru
          _
        // Predicated region
        $region69: #{tpu_custom_call.1} parent=51 // pred_check
          %p418 = pneg %p155
        $region70: #{tpu_custom_call.1} parent=51 // pred_check_branch
          %420 = sbr.rel (%p418) target = $region72
        $region71: #{tpu_custom_call.1} parent=51 // pred_region
          %421 = dma.done [#allocation10], 4608
        $region72: #{tpu_custom_call.1} parent=51 // pred_fallthru
          _
        // Predicated region
        $region73: #{tpu_custom_call.1} parent=51 // pred_check
          %p422 = pneg %p176
        $region74: #{tpu_custom_call.1} parent=51 // pred_check_branch
          %424 = sbr.rel (%p422) target = $region76
        $region75: #{tpu_custom_call.1} parent=51 // pred_region
          %425 = dma.done [#allocation13], 8192
        $region76: #{tpu_custom_call.1} parent=51 // pred_fallthru
          _
        // Predicated region
        $region77: #{tpu_custom_call.1} parent=51 // pred_check
          %p426 = pneg %p197
        $region78: #{tpu_custom_call.1} parent=51 // pred_check_branch
          %428 = sbr.rel (%p426) target = $region80
        $region79: #{tpu_custom_call.1} parent=51 // pred_region
          %429 = dma.done [#allocation13], 16
        $region80: #{tpu_custom_call.1} parent=51 // pred_fallthru
          _
        // Predicated region
        $region81: #{tpu_custom_call.1} parent=51 // pred_check
          %p430 = pneg %p218
        $region82: #{tpu_custom_call.1} parent=51 // pred_check_branch
          %432 = sbr.rel (%p430) target = $region84
        $region83: #{tpu_custom_call.1} parent=51 // pred_region
          %433 = dma.done [#allocation16], 576
        $region84: #{tpu_custom_call.1} parent=51 // pred_fallthru
          _
        %s434 = sand.u32 %s53, 1
        %s435 = scalar_lea.sflag [#allocation4], %s434
        %s436 = sand.u32 %s53, 1
        %s437 = smul.addr %s436, 32
        %s438 = scalar_lea.vmem [#allocation3], %s437
        %p439 = pneg %p66
        %p440 = pneg %p63
        %s441 = sand.u32 %s31, 1
        %s442 = scalar_lea.sflag [#allocation7], %s441
        %s443 = sand.u32 %s79, 1
        %s444 = smul.addr %s443, 32
        %s445 = scalar_lea.vmem [#allocation6], %s444
        %p446 = pneg %p92
        %p447 = pneg %p89
        %p448 = pneg %p113
        %p449 = pneg %p110
        %p450 = pneg %p134
        %p451 = pneg %p131
        %p452 = pneg %p155
        %p453 = pneg %p152
        %p454 = pneg %p176
        %p455 = pneg %p173
        %p456 = pneg %p197
        %p457 = pneg %p194
        %p458 = pneg %p218
        %p459 = pneg %p215
        %p460 = pneg %p246
        %p461 = pneg %p243
        %s462 = sand.u32 %s233, 1
        %s463 = scalar_lea.sflag [#allocation5], %s462
        %s464 = sand.u32 %s233, 1
        %s465 = smul.addr %s464, 64
        %s466 = scalar_lea.vmem [#allocation17], %s465
        %s467 = smul.u32 8, %s36
        %s468 = smul.u32 8, %s36
        %v470 = vld [vmem:[%s396] sm:$0xf]
        %v471 = vld [vmem:[%s396 + $0x4] sm:$0xf]
        %v472 = vld [vmem:[%s396 + $0x8] sm:$0xf]
        %v473 = vld [vmem:[%s396 + $0xc] sm:$0xf]
        %v474 = vld [vmem:[%s396 + $0x10] sm:$0xf]
        %v475 = vld [vmem:[%s396 + $0x14] sm:$0xf]
        %v476 = vld [vmem:[%s396 + $0x18] sm:$0xf]
        %v477 = vld [vmem:[%s396 + $0x1c] sm:$0xf]
        %v478 = vld [vmem:[%s405] sm:$0xf]
        %v479 = vld [vmem:[%s405 + $0x4] sm:$0xf]
        %v480 = vld [vmem:[%s405 + $0x8] sm:$0xf]
        %v481 = vld [vmem:[%s405 + $0xc] sm:$0xf]
        %v482 = vld [vmem:[%s405 + $0x10] sm:$0xf]
        %v483 = vld [vmem:[%s405 + $0x14] sm:$0xf]
        %v484 = vld [vmem:[%s405 + $0x18] sm:$0xf]
        %v485 = vld [vmem:[%s405 + $0x1c] sm:$0xf]
        %v486 = vld [vmem:[#allocation8] sm:$0xff]
        %v487 = vld [vmem:[#allocation8 + $0x8] sm:$0xff]
        %v488 = vld [vmem:[#allocation8 + $0x10] sm:$0xff]
        %v489 = vld [vmem:[#allocation8 + $0x18] sm:$0xff]
        %v490 = vld [vmem:[#allocation8 + $0x20] sm:$0xff]
        %v491 = vld [vmem:[#allocation8 + $0x28] sm:$0xff]
        %v492 = vld [vmem:[#allocation8 + $0x30] sm:$0xff]
        %v493 = vld [vmem:[#allocation8 + $0x38] sm:$0xff]
        %v494 = vld [vmem:[#allocation8 + $0x40] sm:$0xff]
        %v495 = vld [vmem:[#allocation8 + $0x48] sm:$0xff]
        %v496 = vld [vmem:[#allocation8 + $0x50] sm:$0xff]
        %v497 = vld [vmem:[#allocation8 + $0x58] sm:$0xff]
        %v498 = vld [vmem:[#allocation8 + $0x60] sm:$0xff]
        %v499 = vld [vmem:[#allocation8 + $0x68] sm:$0xff]
        %v500 = vld [vmem:[#allocation8 + $0x70] sm:$0xff]
        %v501 = vld [vmem:[#allocation8 + $0x78] sm:$0xff]
        %v502 = vld [vmem:[#allocation8 + $0x80] sm:$0xff]
        %v503 = vld [vmem:[#allocation8 + $0x88] sm:$0xff]
        %v504 = vld [vmem:[#allocation8 + $0x90] sm:$0xff]
        %v505 = vld [vmem:[#allocation8 + $0x98] sm:$0xff]
        %v506 = vld [vmem:[#allocation8 + $0xa0] sm:$0xff]
        %v507 = vld [vmem:[#allocation8 + $0xa8] sm:$0xff]
        %v508 = vld [vmem:[#allocation8 + $0xb0] sm:$0xff]
        %v509 = vld [vmem:[#allocation8 + $0xb8] sm:$0xff]
        %v510 = vld [vmem:[#allocation8 + $0xc0] sm:$0xff]
        %v511 = vld [vmem:[#allocation8 + $0xc8] sm:$0xff]
        %v512 = vld [vmem:[#allocation8 + $0xd0] sm:$0xff]
        %v513 = vld [vmem:[#allocation8 + $0xd8] sm:$0xff]
        %v514 = vld [vmem:[#allocation8 + $0xe0] sm:$0xff]
        %v515 = vld [vmem:[#allocation8 + $0xe8] sm:$0xff]
        %v516 = vld [vmem:[#allocation8 + $0xf0] sm:$0xff]
        %v517 = vld [vmem:[#allocation8 + $0xf8] sm:$0xff]
        %v518 = vld [vmem:[#allocation8 + $0x100] sm:$0xff]
        %v519 = vld [vmem:[#allocation8 + $0x108] sm:$0xff]
        %v520 = vld [vmem:[#allocation8 + $0x110] sm:$0xff]
        %v521 = vld [vmem:[#allocation8 + $0x118] sm:$0xff]
        %v530 = vunpack.c.l.b16 %v470
        %v531 = vunpack.c.l.b16 %v471
        %v532 = vunpack.c.l.b16 %v472
        %v533 = vunpack.c.l.b16 %v473
        %v534 = vunpack.c.l.b16 %v474
        %v535 = vunpack.c.l.b16 %v475
        %v536 = vunpack.c.l.b16 %v476
        %v537 = vunpack.c.l.b16 %v477
        %v538 = vpack.c.b16 %v531, %v530
        %v539 = vpack.c.b16 %v533, %v532
        %v540 = vpack.c.b16 %v535, %v534
        %v541 = vpack.c.b16 %v537, %v536
        %v578 = vunpack.c.l.b16 %v486
        %v579 = vunpack.c.h.b16 %v486
        %v580 = vunpack.c.l.b16 %v487
        %v581 = vunpack.c.h.b16 %v487
        %v582 = vunpack.c.l.b16 %v488
        %v583 = vunpack.c.h.b16 %v488
        %v584 = vunpack.c.l.b16 %v489
        %v585 = vunpack.c.h.b16 %v489
        %v586 = vunpack.c.l.b16 %v490
        %v587 = vunpack.c.h.b16 %v490
        %v588 = vunpack.c.l.b16 %v491
        %v589 = vunpack.c.h.b16 %v491
        %v590 = vunpack.c.l.b16 %v492
        %v591 = vunpack.c.h.b16 %v492
        %v592 = vunpack.c.l.b16 %v493
        %v593 = vunpack.c.h.b16 %v493
        %v594 = vunpack.c.l.b16 %v494
        %v595 = vunpack.c.h.b16 %v494
        %v596 = vunpack.c.l.b16 %v495
        %v597 = vunpack.c.h.b16 %v495
        %v598 = vunpack.c.l.b16 %v496
        %v599 = vunpack.c.h.b16 %v496
        %v600 = vunpack.c.l.b16 %v497
        %v601 = vunpack.c.h.b16 %v497
        %v602 = vunpack.c.l.b16 %v498
        %v603 = vunpack.c.h.b16 %v498
        %v604 = vunpack.c.l.b16 %v499
        %v605 = vunpack.c.h.b16 %v499
        %v606 = vunpack.c.l.b16 %v500
        %v607 = vunpack.c.h.b16 %v500
        %v608 = vunpack.c.l.b16 %v501
        %v609 = vunpack.c.h.b16 %v501
        %v610 = vunpack.c.l.b16 %v502
        %v611 = vunpack.c.h.b16 %v502
        %v612 = vunpack.c.l.b16 %v503
        %v613 = vunpack.c.h.b16 %v503
        %v614 = vunpack.c.l.b16 %v504
        %v615 = vunpack.c.h.b16 %v504
        %v616 = vunpack.c.l.b16 %v505
        %v617 = vunpack.c.h.b16 %v505
        %v618 = vunpack.c.l.b16 %v506
        %v619 = vunpack.c.h.b16 %v506
        %v620 = vunpack.c.l.b16 %v507
        %v621 = vunpack.c.h.b16 %v507
        %v622 = vunpack.c.l.b16 %v508
        %v623 = vunpack.c.h.b16 %v508
        %v624 = vunpack.c.l.b16 %v509
        %v625 = vunpack.c.h.b16 %v509
        %v626 = vunpack.c.l.b16 %v510
        %v627 = vunpack.c.h.b16 %v510
        %v628 = vunpack.c.l.b16 %v511
        %v629 = vunpack.c.h.b16 %v511
        %v630 = vunpack.c.l.b16 %v512
        %v631 = vunpack.c.h.b16 %v512
        %v632 = vunpack.c.l.b16 %v513
        %v633 = vunpack.c.h.b16 %v513
        %v634 = vunpack.c.l.b16 %v514
        %v635 = vunpack.c.h.b16 %v514
        %v636 = vunpack.c.l.b16 %v515
        %v637 = vunpack.c.h.b16 %v515
        %v638 = vunpack.c.l.b16 %v516
        %v639 = vunpack.c.h.b16 %v516
        %v640 = vunpack.c.l.b16 %v517
        %v641 = vunpack.c.h.b16 %v517
        %v642 = vunpack.c.l.b16 %v518
        %v643 = vunpack.c.h.b16 %v518
        %v644 = vunpack.c.l.b16 %v519
        %v645 = vunpack.c.h.b16 %v519
        %v646 = vunpack.c.l.b16 %v520
        %v647 = vunpack.c.h.b16 %v520
        %v648 = vunpack.c.l.b16 %v521
        %v649 = vunpack.c.h.b16 %v521
        %v650 = vpack.c.b16 %v586, %v578
        %v651 = vpack.c.b16 %v587, %v579
        %v652 = vpack.c.b16 %v588, %v580
        %v653 = vpack.c.b16 %v589, %v581
        %v654 = vpack.c.b16 %v590, %v582
        %v655 = vpack.c.b16 %v591, %v583
        %v656 = vpack.c.b16 %v592, %v584
        %v657 = vpack.c.b16 %v593, %v585
        %v658 = vpack.c.b16 %v602, %v594
        %v659 = vpack.c.b16 %v603, %v595
        %v660 = vpack.c.b16 %v604, %v596
        %v661 = vpack.c.b16 %v605, %v597
        %v662 = vpack.c.b16 %v606, %v598
        %v663 = vpack.c.b16 %v607, %v599
        %v664 = vpack.c.b16 %v608, %v600
        %v665 = vpack.c.b16 %v609, %v601
        %v666 = vpack.c.b16 %v618, %v610
        %v667 = vpack.c.b16 %v619, %v611
        %v668 = vpack.c.b16 %v620, %v612
        %v669 = vpack.c.b16 %v621, %v613
        %v670 = vpack.c.b16 %v622, %v614
        %v671 = vpack.c.b16 %v623, %v615
        %v672 = vpack.c.b16 %v624, %v616
        %v673 = vpack.c.b16 %v625, %v617
        %v674 = vpack.c.b16 %v634, %v626
        %v675 = vpack.c.b16 %v635, %v627
        %v676 = vpack.c.b16 %v636, %v628
        %v677 = vpack.c.b16 %v637, %v629
        %v678 = vpack.c.b16 %v638, %v630
        %v679 = vpack.c.b16 %v639, %v631
        %v680 = vpack.c.b16 %v640, %v632
        %v681 = vpack.c.b16 %v641, %v633
        %v682 = vpack.c.b16 %v642, %v642
        %v683 = vpack.c.b16 %v643, %v643
        %v684 = vpack.c.b16 %v644, %v644
        %v685 = vpack.c.b16 %v645, %v645
        %v686 = vpack.c.b16 %v646, %v646
        %v687 = vpack.c.b16 %v647, %v647
        %v688 = vpack.c.b16 %v648, %v648
        %v689 = vpack.c.b16 %v649, %v649
        %vm722 = vcmask 588800
        %v724 = vsel %vm722, %v538, 0
        %v727 = vsel %vm722, %v539, 0
        %v730 = vsel %vm722, %v540, 0
        %v733 = vsel %vm722, %v541, 0
        %vm735 = vcmask 1043456
        %v737 = vsel %vm735, %v682, 0
        %v740 = vsel %vm735, %v683, 0
        %v743 = vsel %vm735, %v684, 0
        %v746 = vsel %vm735, %v685, 0
        %v749 = vsel %vm735, %v686, 0
        %v752 = vsel %vm735, %v687, 0
        %v755 = vsel %vm735, %v688, 0
        %v758 = vsel %vm735, %v689, 0
        %760 = vmatprep.subr.bf16.mxu0 %v651
        %761 = vmatpush1.bf16.msra.mxu0 %v650
        %762 = vmatprep.subr.bf16.mxu0 %v659
        %763 = vmatpush1.bf16.msra.mxu0 %v658
        %764 = vmatprep.subr.bf16.mxu0 %v667
        %765 = vmatpush1.bf16.msra.mxu0 %v666
        %766 = vmatprep.subr.bf16.mxu0 %v675
        %767 = vmatpush1.bf16.msra.mxu0 %v674
        %768 = vmatprep.subr.bf16.mxu0 %v740
        %769 = vmatpush1.bf16.msra.mxu0 %v737
        %770 = vmatprep.subr.bf16.mxu0 0
        %771 = vmatpush1.bf16.msra.mxu0 0
        %772 = vmatprep.subr.bf16.mxu0 0
        %773 = vmatpush1.bf16.msra.mxu0 0
        %774 = vmatprep.subr.bf16.mxu0 0
        %775 = vmatpush1.bf16.msra.mxu0 0
        %776 = vmatprep.subr.bf16.mxu0 0
        %777 = vmatpush1.bf16.msra.mxu0 0
        %778 = vmatprep.subr.bf16.mxu0 0
        %779 = vmatpush1.bf16.msra.mxu0 0
        %780 = vmatprep.subr.bf16.mxu0 0
        %781 = vmatpush1.bf16.msra.mxu0 0
        %782 = vmatprep.subr.bf16.mxu0 0
        %783 = vmatpush1.bf16.msra.mxu0 0
        %784 = vmatprep.subr.bf16.mxu0 0
        %785 = vmatpush1.bf16.msra.mxu0 0
        %786 = vmatprep.subr.bf16.mxu0 0
        %787 = vmatpush1.bf16.msra.mxu0 0
        %788 = vmatprep.subr.bf16.mxu0 0
        %789 = vmatpush1.bf16.msra.mxu0 0
        %790 = vmatprep.subr.bf16.mxu0 0
        %791 = vmatpush1.bf16.msra.mxu0 0
        %792 = vmatprep.mubr.bf16.mxu0 0
        %793 = vmatmul.mubr.bf16.gmra.mrb[0].mxu0 %v724
        %v794 = vpop.f32.mrb[0].mxu0
        %v795 = vadd.f32 0.0, %v794
        %v796 = vpop.f32.mrb[0].mxu0
        %v797 = vadd.f32 0.0, %v796
        %v798 = vpop.f32.mrb[0].mxu0
        %v799 = vadd.f32 0.0, %v798
        %v800 = vpop.f32.mrb[0].mxu0
        %v801 = vadd.f32 0.0, %v800
        %802 = vmatprep.mubr.bf16.mxu0 0
        %803 = vmatmul.mubr.bf16.gmra.mrb[0].mxu0 %v727
        %v804 = vpop.f32.mrb[0].mxu0
        %v805 = vadd.f32 0.0, %v804
        %v806 = vpop.f32.mrb[0].mxu0
        %v807 = vadd.f32 0.0, %v806
        %v808 = vpop.f32.mrb[0].mxu0
        %v809 = vadd.f32 0.0, %v808
        %v810 = vpop.f32.mrb[0].mxu0
        %v811 = vadd.f32 0.0, %v810
        %812 = vmatprep.mubr.bf16.mxu0 0
        %813 = vmatmul.mubr.bf16.gmra.mrb[0].mxu0 %v730
        %v814 = vpop.f32.mrb[0].mxu0
        %v815 = vadd.f32 0.0, %v814
        %v816 = vpop.f32.mrb[0].mxu0
        %v817 = vadd.f32 0.0, %v816
        %v818 = vpop.f32.mrb[0].mxu0
        %v819 = vadd.f32 0.0, %v818
        %v820 = vpop.f32.mrb[0].mxu0
        %v821 = vadd.f32 0.0, %v820
        %822 = vmatprep.mubr.bf16.mxu0 0
        %823 = vmatmul.mubr.bf16.gmra.mrb[0].mxu0 %v733
        %v824 = vpop.f32.mrb[0].mxu0
        %v825 = vadd.f32 0.0, %v824
        %v826 = vpop.f32.mrb[0].mxu0
        %v827 = vadd.f32 0.0, %v826
        %v828 = vpop.f32.mrb[0].mxu0
        %v829 = vadd.f32 0.0, %v828
        %v830 = vpop.f32.mrb[0].mxu0
        %v831 = vadd.f32 0.0, %v830
        %832 = vdwg.mxu0
        %833 = vmatprep.subr.bf16.mxu0 %v653
        %834 = vmatpush1.bf16.msra.mxu0 %v652
        %835 = vmatprep.subr.bf16.mxu0 %v661
        %836 = vmatpush1.bf16.msra.mxu0 %v660
        %837 = vmatprep.subr.bf16.mxu0 %v669
        %838 = vmatpush1.bf16.msra.mxu0 %v668
        %839 = vmatprep.subr.bf16.mxu0 %v677
        %840 = vmatpush1.bf16.msra.mxu0 %v676
        %841 = vmatprep.subr.bf16.mxu0 %v746
        %842 = vmatpush1.bf16.msra.mxu0 %v743
        %843 = vmatprep.subr.bf16.mxu0 0
        %844 = vmatpush1.bf16.msra.mxu0 0
        %845 = vmatprep.subr.bf16.mxu0 0
        %846 = vmatpush1.bf16.msra.mxu0 0
        %847 = vmatprep.subr.bf16.mxu0 0
        %848 = vmatpush1.bf16.msra.mxu0 0
        %849 = vmatprep.subr.bf16.mxu0 0
        %850 = vmatpush1.bf16.msra.mxu0 0
        %851 = vmatprep.subr.bf16.mxu0 0
        %852 = vmatpush1.bf16.msra.mxu0 0
        %853 = vmatprep.subr.bf16.mxu0 0
        %854 = vmatpush1.bf16.msra.mxu0 0
        %855 = vmatprep.subr.bf16.mxu0 0
        %856 = vmatpush1.bf16.msra.mxu0 0
        %857 = vmatprep.subr.bf16.mxu0 0
        %858 = vmatpush1.bf16.msra.mxu0 0
        %859 = vmatprep.subr.bf16.mxu0 0
        %860 = vmatpush1.bf16.msra.mxu0 0
        %861 = vmatprep.subr.bf16.mxu0 0
        %862 = vmatpush1.bf16.msra.mxu0 0
        %863 = vmatprep.subr.bf16.mxu0 0
        %864 = vmatpush1.bf16.msra.mxu0 0
        %865 = vmatprep.mubr.bf16.mxu0 0
        %866 = vmatmul.mubr.bf16.gmra.mrb[0].mxu0 %v724
        %v867 = vpop.f32.mrb[0].mxu0
        %v868 = vadd.f32 0.0, %v867
        %v869 = vpop.f32.mrb[0].mxu0
        %v870 = vadd.f32 0.0, %v869
        %v871 = vpop.f32.mrb[0].mxu0
        %v872 = vadd.f32 0.0, %v871
        %v873 = vpop.f32.mrb[0].mxu0
        %v874 = vadd.f32 0.0, %v873
        %875 = vmatprep.mubr.bf16.mxu0 0
        %876 = vmatmul.mubr.bf16.gmra.mrb[0].mxu0 %v727
        %v877 = vpop.f32.mrb[0].mxu0
        %v878 = vadd.f32 0.0, %v877
        %v879 = vpop.f32.mrb[0].mxu0
        %v880 = vadd.f32 0.0, %v879
        %v881 = vpop.f32.mrb[0].mxu0
        %v882 = vadd.f32 0.0, %v881
        %v883 = vpop.f32.mrb[0].mxu0
        %v884 = vadd.f32 0.0, %v883
        %885 = vmatprep.mubr.bf16.mxu0 0
        %886 = vmatmul.mubr.bf16.gmra.mrb[0].mxu0 %v730
        %v887 = vpop.f32.mrb[0].mxu0
        %v888 = vadd.f32 0.0, %v887
        %v889 = vpop.f32.mrb[0].mxu0
        %v890 = vadd.f32 0.0, %v889
        %v891 = vpop.f32.mrb[0].mxu0
        %v892 = vadd.f32 0.0, %v891
        %v893 = vpop.f32.mrb[0].mxu0
        %v894 = vadd.f32 0.0, %v893
        %895 = vmatprep.mubr.bf16.mxu0 0
        %896 = vmatmul.mubr.bf16.gmra.mrb[0].mxu0 %v733
        %v897 = vpop.f32.mrb[0].mxu0
        %v898 = vadd.f32 0.0, %v897
        %v899 = vpop.f32.mrb[0].mxu0
        %v900 = vadd.f32 0.0, %v899
        %v901 = vpop.f32.mrb[0].mxu0
        %v902 = vadd.f32 0.0, %v901
        %v903 = vpop.f32.mrb[0].mxu0
        %v904 = vadd.f32 0.0, %v903
        %905 = vdwg.mxu0
        %906 = vmatprep.subr.bf16.mxu0 %v655
        %907 = vmatpush1.bf16.msra.mxu0 %v654
        %908 = vmatprep.subr.bf16.mxu0 %v663
        %909 = vmatpush1.bf16.msra.mxu0 %v662
        %910 = vmatprep.subr.bf16.mxu0 %v671
        %911 = vmatpush1.bf16.msra.mxu0 %v670
        %912 = vmatprep.subr.bf16.mxu0 %v679
        %913 = vmatpush1.bf16.msra.mxu0 %v678
        %914 = vmatprep.subr.bf16.mxu0 %v752
        %915 = vmatpush1.bf16.msra.mxu0 %v749
        %916 = vmatprep.subr.bf16.mxu0 0
        %917 = vmatpush1.bf16.msra.mxu0 0
        %918 = vmatprep.subr.bf16.mxu0 0
        %919 = vmatpush1.bf16.msra.mxu0 0
        %920 = vmatprep.subr.bf16.mxu0 0
        %921 = vmatpush1.bf16.msra.mxu0 0
        %922 = vmatprep.subr.bf16.mxu0 0
        %923 = vmatpush1.bf16.msra.mxu0 0
        %924 = vmatprep.subr.bf16.mxu0 0
        %925 = vmatpush1.bf16.msra.mxu0 0
        %926 = vmatprep.subr.bf16.mxu0 0
        %927 = vmatpush1.bf16.msra.mxu0 0
        %928 = vmatprep.subr.bf16.mxu0 0
        %929 = vmatpush1.bf16.msra.mxu0 0
        %930 = vmatprep.subr.bf16.mxu0 0
        %931 = vmatpush1.bf16.msra.mxu0 0
        %932 = vmatprep.subr.bf16.mxu0 0
        %933 = vmatpush1.bf16.msra.mxu0 0
        %934 = vmatprep.subr.bf16.mxu0 0
        %935 = vmatpush1.bf16.msra.mxu0 0
        %936 = vmatprep.subr.bf16.mxu0 0
        %937 = vmatpush1.bf16.msra.mxu0 0
        %938 = vmatprep.mubr.bf16.mxu0 0
        %939 = vmatmul.mubr.bf16.gmra.mrb[0].mxu0 %v724
        %v940 = vpop.f32.mrb[0].mxu0
        %v941 = vadd.f32 0.0, %v940
        %v942 = vpop.f32.mrb[0].mxu0
        %v943 = vadd.f32 0.0, %v942
        %v944 = vpop.f32.mrb[0].mxu0
        %v945 = vadd.f32 0.0, %v944
        %v946 = vpop.f32.mrb[0].mxu0
        %v947 = vadd.f32 0.0, %v946
        %948 = vmatprep.mubr.bf16.mxu0 0
        %949 = vmatmul.mubr.bf16.gmra.mrb[0].mxu0 %v727
        %v950 = vpop.f32.mrb[0].mxu0
        %v951 = vadd.f32 0.0, %v950
        %v952 = vpop.f32.mrb[0].mxu0
        %v953 = vadd.f32 0.0, %v952
        %v954 = vpop.f32.mrb[0].mxu0
        %v955 = vadd.f32 0.0, %v954
        %v956 = vpop.f32.mrb[0].mxu0
        %v957 = vadd.f32 0.0, %v956
        %958 = vmatprep.mubr.bf16.mxu0 0
        %959 = vmatmul.mubr.bf16.gmra.mrb[0].mxu0 %v730
        %v960 = vpop.f32.mrb[0].mxu0
        %v961 = vadd.f32 0.0, %v960
        %v962 = vpop.f32.mrb[0].mxu0
        %v963 = vadd.f32 0.0, %v962
        %v964 = vpop.f32.mrb[0].mxu0
        %v965 = vadd.f32 0.0, %v964
        %v966 = vpop.f32.mrb[0].mxu0
        %v967 = vadd.f32 0.0, %v966
        %968 = vmatprep.mubr.bf16.mxu0 0
        %969 = vmatmul.mubr.bf16.gmra.mrb[0].mxu0 %v733
        %v970 = vpop.f32.mrb[0].mxu0
        %v971 = vadd.f32 0.0, %v970
        %v972 = vpop.f32.mrb[0].mxu0
        %v973 = vadd.f32 0.0, %v972
        %v974 = vpop.f32.mrb[0].mxu0
        %v975 = vadd.f32 0.0, %v974
        %v976 = vpop.f32.mrb[0].mxu0
        %v977 = vadd.f32 0.0, %v976
        %978 = vdwg.mxu0
        %979 = vmatprep.subr.bf16.mxu0 %v657
        %980 = vmatpush1.bf16.msra.mxu0 %v656
        %981 = vmatprep.subr.bf16.mxu0 %v665
        %982 = vmatpush1.bf16.msra.mxu0 %v664
        %983 = vmatprep.subr.bf16.mxu0 %v673
        %984 = vmatpush1.bf16.msra.mxu0 %v672
        %985 = vmatprep.subr.bf16.mxu0 %v681
        %986 = vmatpush1.bf16.msra.mxu0 %v680
        %987 = vmatprep.subr.bf16.mxu0 %v758
        %988 = vmatpush1.bf16.msra.mxu0 %v755
        %989 = vmatprep.subr.bf16.mxu0 0
        %990 = vmatpush1.bf16.msra.mxu0 0
        %991 = vmatprep.subr.bf16.mxu0 0
        %992 = vmatpush1.bf16.msra.mxu0 0
        %993 = vmatprep.subr.bf16.mxu0 0
        %994 = vmatpush1.bf16.msra.mxu0 0
        %995 = vmatprep.subr.bf16.mxu0 0
        %996 = vmatpush1.bf16.msra.mxu0 0
        %997 = vmatprep.subr.bf16.mxu0 0
        %998 = vmatpush1.bf16.msra.mxu0 0
        %999 = vmatprep.subr.bf16.mxu0 0
        %1000 = vmatpush1.bf16.msra.mxu0 0
        %1001 = vmatprep.subr.bf16.mxu0 0
        %1002 = vmatpush1.bf16.msra.mxu0 0
        %1003 = vmatprep.subr.bf16.mxu0 0
        %1004 = vmatpush1.bf16.msra.mxu0 0
        %1005 = vmatprep.subr.bf16.mxu0 0
        %1006 = vmatpush1.bf16.msra.mxu0 0
        %1007 = vmatprep.subr.bf16.mxu0 0
        %1008 = vmatpush1.bf16.msra.mxu0 0
        %1009 = vmatprep.subr.bf16.mxu0 0
        %1010 = vmatpush1.bf16.msra.mxu0 0
        %1011 = vmatprep.mubr.bf16.mxu0 0
        %1012 = vmatmul.mubr.bf16.gmra.mrb[0].mxu0 %v724
        %v1013 = vpop.f32.mrb[0].mxu0
        %v1014 = vadd.f32 0.0, %v1013
        %v1015 = vpop.f32.mrb[0].mxu0
        %v1016 = vadd.f32 0.0, %v1015
        %v1017 = vpop.f32.mrb[0].mxu0
        %v1018 = vadd.f32 0.0, %v1017
        %v1019 = vpop.f32.mrb[0].mxu0
        %v1020 = vadd.f32 0.0, %v1019
        %1021 = vmatprep.mubr.bf16.mxu0 0
        %1022 = vmatmul.mubr.bf16.gmra.mrb[0].mxu0 %v727
        %v1023 = vpop.f32.mrb[0].mxu0
        %v1024 = vadd.f32 0.0, %v1023
        %v1025 = vpop.f32.mrb[0].mxu0
        %v1026 = vadd.f32 0.0, %v1025
        %v1027 = vpop.f32.mrb[0].mxu0
        %v1028 = vadd.f32 0.0, %v1027
        %v1029 = vpop.f32.mrb[0].mxu0
        %v1030 = vadd.f32 0.0, %v1029
        %1031 = vmatprep.mubr.bf16.mxu0 0
        %1032 = vmatmul.mubr.bf16.gmra.mrb[0].mxu0 %v730
        %v1033 = vpop.f32.mrb[0].mxu0
        %v1034 = vadd.f32 0.0, %v1033
        %v1035 = vpop.f32.mrb[0].mxu0
        %v1036 = vadd.f32 0.0, %v1035
        %v1037 = vpop.f32.mrb[0].mxu0
        %v1038 = vadd.f32 0.0, %v1037
        %v1039 = vpop.f32.mrb[0].mxu0
        %v1040 = vadd.f32 0.0, %v1039
        %1041 = vmatprep.mubr.bf16.mxu0 0
        %1042 = vmatmul.mubr.bf16.gmra.mrb[0].mxu0 %v733
        %v1043 = vpop.f32.mrb[0].mxu0
        %v1044 = vadd.f32 0.0, %v1043
        %v1045 = vpop.f32.mrb[0].mxu0
        %v1046 = vadd.f32 0.0, %v1045
        %v1047 = vpop.f32.mrb[0].mxu0
        %v1048 = vadd.f32 0.0, %v1047
        %v1049 = vpop.f32.mrb[0].mxu0
        %v1050 = vadd.f32 0.0, %v1049
        %1051 = vdwg.mxu0
        %v1052 = vpack.c.bf16 %v799, %v795
        %v1053 = vpack.c.bf16 %v801, %v797
        %v1054 = vpack.c.bf16 %v872, %v868
        %v1055 = vpack.c.bf16 %v874, %v870
        %v1056 = vpack.c.bf16 %v945, %v941
        %v1057 = vpack.c.bf16 %v947, %v943
        %v1058 = vpack.c.bf16 %v1018, %v1014
        %v1059 = vpack.c.bf16 %v1020, %v1016
        %v1060 = vpack.c.bf16 %v809, %v805
        %v1061 = vpack.c.bf16 %v811, %v807
        %v1062 = vpack.c.bf16 %v882, %v878
        %v1063 = vpack.c.bf16 %v884, %v880
        %v1064 = vpack.c.bf16 %v955, %v951
        %v1065 = vpack.c.bf16 %v957, %v953
        %v1066 = vpack.c.bf16 %v1028, %v1024
        %v1067 = vpack.c.bf16 %v1030, %v1026
        %v1068 = vpack.c.bf16 %v819, %v815
        %v1069 = vpack.c.bf16 %v821, %v817
        %v1070 = vpack.c.bf16 %v892, %v888
        %v1071 = vpack.c.bf16 %v894, %v890
        %v1072 = vpack.c.bf16 %v965, %v961
        %v1073 = vpack.c.bf16 %v967, %v963
        %v1074 = vpack.c.bf16 %v1038, %v1034
        %v1075 = vpack.c.bf16 %v1040, %v1036
        %v1076 = vpack.c.bf16 %v829, %v825
        %v1077 = vpack.c.bf16 %v831, %v827
        %v1078 = vpack.c.bf16 %v902, %v898
        %v1079 = vpack.c.bf16 %v904, %v900
        %v1080 = vpack.c.bf16 %v975, %v971
        %v1081 = vpack.c.bf16 %v977, %v973
        %v1082 = vpack.c.bf16 %v1048, %v1044
        %v1083 = vpack.c.bf16 %v1050, %v1046
        %v1084 = vld [vmem:[#allocation9] sm:$0xff]
        %v1085 = vld [vmem:[#allocation9 + $0x8] sm:$0xff]
        %v1086 = vld [vmem:[#allocation9 + $0x10] sm:$0xff]
        %v1087 = vld [vmem:[#allocation9 + $0x18] sm:$0xff]
        %v1088 = vld [vmem:[#allocation9 + $0x20] sm:$0xff]
        %v1089 = vld [vmem:[#allocation9 + $0x28] sm:$0xff]
        %v1090 = vld [vmem:[#allocation9 + $0x30] sm:$0xff]
        %v1091 = vld [vmem:[#allocation9 + $0x38] sm:$0xff]
        %v1092 = vld [vmem:[#allocation9 + $0x40] sm:$0xff]
        %v1093 = vld [vmem:[#allocation9 + $0x48] sm:$0xff]
        %v1094 = vld [vmem:[#allocation9 + $0x50] sm:$0xff]
        %v1095 = vld [vmem:[#allocation9 + $0x58] sm:$0xff]
        %v1096 = vld [vmem:[#allocation9 + $0x60] sm:$0xff]
        %v1097 = vld [vmem:[#allocation9 + $0x68] sm:$0xff]
        %v1098 = vld [vmem:[#allocation9 + $0x70] sm:$0xff]
        %v1099 = vld [vmem:[#allocation9 + $0x78] sm:$0xff]
        %v1100 = vld [vmem:[#allocation9 + $0x80] sm:$0xff]
        %v1101 = vld [vmem:[#allocation9 + $0x88] sm:$0xff]
        %v1102 = vld [vmem:[#allocation9 + $0x90] sm:$0xff]
        %v1103 = vld [vmem:[#allocation9 + $0x98] sm:$0xff]
        %v1104 = vld [vmem:[#allocation9 + $0xa0] sm:$0xff]
        %v1105 = vld [vmem:[#allocation9 + $0xa8] sm:$0xff]
        %v1106 = vld [vmem:[#allocation9 + $0xb0] sm:$0xff]
        %v1107 = vld [vmem:[#allocation9 + $0xb8] sm:$0xff]
        %v1108 = vld [vmem:[#allocation9 + $0xc0] sm:$0xff]
        %v1109 = vld [vmem:[#allocation9 + $0xc8] sm:$0xff]
        %v1110 = vld [vmem:[#allocation9 + $0xd0] sm:$0xff]
        %v1111 = vld [vmem:[#allocation9 + $0xd8] sm:$0xff]
        %v1112 = vld [vmem:[#allocation9 + $0xe0] sm:$0xff]
        %v1113 = vld [vmem:[#allocation9 + $0xe8] sm:$0xff]
        %v1114 = vld [vmem:[#allocation9 + $0xf0] sm:$0xff]
        %v1115 = vld [vmem:[#allocation9 + $0xf8] sm:$0xff]
        %v1116 = vld [vmem:[#allocation9 + $0x100] sm:$0xff]
        %v1117 = vld [vmem:[#allocation9 + $0x108] sm:$0xff]
        %v1118 = vld [vmem:[#allocation9 + $0x110] sm:$0xff]
        %v1119 = vld [vmem:[#allocation9 + $0x118] sm:$0xff]
        %v1128 = vunpack.c.l.b16 %v478
        %v1129 = vunpack.c.l.b16 %v479
        %v1130 = vunpack.c.l.b16 %v480
        %v1131 = vunpack.c.l.b16 %v481
        %v1132 = vunpack.c.l.b16 %v482
        %v1133 = vunpack.c.l.b16 %v483
        %v1134 = vunpack.c.l.b16 %v484
        %v1135 = vunpack.c.l.b16 %v485
        %v1136 = vpack.c.b16 %v1129, %v1128
        %v1137 = vpack.c.b16 %v1131, %v1130
        %v1138 = vpack.c.b16 %v1133, %v1132
        %v1139 = vpack.c.b16 %v1135, %v1134
        %v1176 = vunpack.c.l.b16 %v1084
        %v1177 = vunpack.c.h.b16 %v1084
        %v1178 = vunpack.c.l.b16 %v1085
        %v1179 = vunpack.c.h.b16 %v1085
        %v1180 = vunpack.c.l.b16 %v1086
        %v1181 = vunpack.c.h.b16 %v1086
        %v1182 = vunpack.c.l.b16 %v1087
        %v1183 = vunpack.c.h.b16 %v1087
        %v1184 = vunpack.c.l.b16 %v1088
        %v1185 = vunpack.c.h.b16 %v1088
        %v1186 = vunpack.c.l.b16 %v1089
        %v1187 = vunpack.c.h.b16 %v1089
        %v1188 = vunpack.c.l.b16 %v1090
        %v1189 = vunpack.c.h.b16 %v1090
        %v1190 = vunpack.c.l.b16 %v1091
        %v1191 = vunpack.c.h.b16 %v1091
        %v1192 = vunpack.c.l.b16 %v1092
        %v1193 = vunpack.c.h.b16 %v1092
        %v1194 = vunpack.c.l.b16 %v1093
        %v1195 = vunpack.c.h.b16 %v1093
        %v1196 = vunpack.c.l.b16 %v1094
        %v1197 = vunpack.c.h.b16 %v1094
        %v1198 = vunpack.c.l.b16 %v1095
        %v1199 = vunpack.c.h.b16 %v1095
        %v1200 = vunpack.c.l.b16 %v1096
        %v1201 = vunpack.c.h.b16 %v1096
        %v1202 = vunpack.c.l.b16 %v1097
        %v1203 = vunpack.c.h.b16 %v1097
        %v1204 = vunpack.c.l.b16 %v1098
        %v1205 = vunpack.c.h.b16 %v1098
        %v1206 = vunpack.c.l.b16 %v1099
        %v1207 = vunpack.c.h.b16 %v1099
        %v1208 = vunpack.c.l.b16 %v1100
        %v1209 = vunpack.c.h.b16 %v1100
        %v1210 = vunpack.c.l.b16 %v1101
        %v1211 = vunpack.c.h.b16 %v1101
        %v1212 = vunpack.c.l.b16 %v1102
        %v1213 = vunpack.c.h.b16 %v1102
        %v1214 = vunpack.c.l.b16 %v1103
        %v1215 = vunpack.c.h.b16 %v1103
        %v1216 = vunpack.c.l.b16 %v1104
        %v1217 = vunpack.c.h.b16 %v1104
        %v1218 = vunpack.c.l.b16 %v1105
        %v1219 = vunpack.c.h.b16 %v1105
        %v1220 = vunpack.c.l.b16 %v1106
        %v1221 = vunpack.c.h.b16 %v1106
        %v1222 = vunpack.c.l.b16 %v1107
        %v1223 = vunpack.c.h.b16 %v1107
        %v1224 = vunpack.c.l.b16 %v1108
        %v1225 = vunpack.c.h.b16 %v1108
        %v1226 = vunpack.c.l.b16 %v1109
        %v1227 = vunpack.c.h.b16 %v1109
        %v1228 = vunpack.c.l.b16 %v1110
        %v1229 = vunpack.c.h.b16 %v1110
        %v1230 = vunpack.c.l.b16 %v1111
        %v1231 = vunpack.c.h.b16 %v1111
        %v1232 = vunpack.c.l.b16 %v1112
        %v1233 = vunpack.c.h.b16 %v1112
        %v1234 = vunpack.c.l.b16 %v1113
        %v1235 = vunpack.c.h.b16 %v1113
        %v1236 = vunpack.c.l.b16 %v1114
        %v1237 = vunpack.c.h.b16 %v1114
        %v1238 = vunpack.c.l.b16 %v1115
        %v1239 = vunpack.c.h.b16 %v1115
        %v1240 = vunpack.c.l.b16 %v1116
        %v1241 = vunpack.c.h.b16 %v1116
        %v1242 = vunpack.c.l.b16 %v1117
        %v1243 = vunpack.c.h.b16 %v1117
        %v1244 = vunpack.c.l.b16 %v1118
        %v1245 = vunpack.c.h.b16 %v1118
        %v1246 = vunpack.c.l.b16 %v1119
        %v1247 = vunpack.c.h.b16 %v1119
        %v1248 = vpack.c.b16 %v1184, %v1176
        %v1249 = vpack.c.b16 %v1185, %v1177
        %v1250 = vpack.c.b16 %v1186, %v1178
        %v1251 = vpack.c.b16 %v1187, %v1179
        %v1252 = vpack.c.b16 %v1188, %v1180
        %v1253 = vpack.c.b16 %v1189, %v1181
        %v1254 = vpack.c.b16 %v1190, %v1182
        %v1255 = vpack.c.b16 %v1191, %v1183
        %v1256 = vpack.c.b16 %v1200, %v1192
        %v1257 = vpack.c.b16 %v1201, %v1193
        %v1258 = vpack.c.b16 %v1202, %v1194
        %v1259 = vpack.c.b16 %v1203, %v1195
        %v1260 = vpack.c.b16 %v1204, %v1196
        %v1261 = vpack.c.b16 %v1205, %v1197
        %v1262 = vpack.c.b16 %v1206, %v1198
        %v1263 = vpack.c.b16 %v1207, %v1199
        %v1264 = vpack.c.b16 %v1216, %v1208
        %v1265 = vpack.c.b16 %v1217, %v1209
        %v1266 = vpack.c.b16 %v1218, %v1210
        %v1267 = vpack.c.b16 %v1219, %v1211
        %v1268 = vpack.c.b16 %v1220, %v1212
        %v1269 = vpack.c.b16 %v1221, %v1213
        %v1270 = vpack.c.b16 %v1222, %v1214
        %v1271 = vpack.c.b16 %v1223, %v1215
        %v1272 = vpack.c.b16 %v1232, %v1224
        %v1273 = vpack.c.b16 %v1233, %v1225
        %v1274 = vpack.c.b16 %v1234, %v1226
        %v1275 = vpack.c.b16 %v1235, %v1227
        %v1276 = vpack.c.b16 %v1236, %v1228
        %v1277 = vpack.c.b16 %v1237, %v1229
        %v1278 = vpack.c.b16 %v1238, %v1230
        %v1279 = vpack.c.b16 %v1239, %v1231
        %v1280 = vpack.c.b16 %v1240, %v1240
        %v1281 = vpack.c.b16 %v1241, %v1241
        %v1282 = vpack.c.b16 %v1242, %v1242
        %v1283 = vpack.c.b16 %v1243, %v1243
        %v1284 = vpack.c.b16 %v1244, %v1244
        %v1285 = vpack.c.b16 %v1245, %v1245
        %v1286 = vpack.c.b16 %v1246, %v1246
        %v1287 = vpack.c.b16 %v1247, %v1247
        %v1321 = vsel %vm722, %v1136, 0
        %v1324 = vsel %vm722, %v1137, 0
        %v1327 = vsel %vm722, %v1138, 0
        %v1330 = vsel %vm722, %v1139, 0
        %v1333 = vsel %vm735, %v1280, 0
        %v1336 = vsel %vm735, %v1281, 0
        %v1339 = vsel %vm735, %v1282, 0
        %v1342 = vsel %vm735, %v1283, 0
        %v1345 = vsel %vm735, %v1284, 0
        %v1348 = vsel %vm735, %v1285, 0
        %v1351 = vsel %vm735, %v1286, 0
        %v1354 = vsel %vm735, %v1287, 0
        %1356 = vmatprep.subr.bf16.mxu0 %v1249
        %1357 = vmatpush1.bf16.msra.mxu0 %v1248
        %1358 = vmatprep.subr.bf16.mxu0 %v1257
        %1359 = vmatpush1.bf16.msra.mxu0 %v1256
        %1360 = vmatprep.subr.bf16.mxu0 %v1265
        %1361 = vmatpush1.bf16.msra.mxu0 %v1264
        %1362 = vmatprep.subr.bf16.mxu0 %v1273
        %1363 = vmatpush1.bf16.msra.mxu0 %v1272
        %1364 = vmatprep.subr.bf16.mxu0 %v1336
        %1365 = vmatpush1.bf16.msra.mxu0 %v1333
        %1366 = vmatprep.subr.bf16.mxu0 0
        %1367 = vmatpush1.bf16.msra.mxu0 0
        %1368 = vmatprep.subr.bf16.mxu0 0
        %1369 = vmatpush1.bf16.msra.mxu0 0
        %1370 = vmatprep.subr.bf16.mxu0 0
        %1371 = vmatpush1.bf16.msra.mxu0 0
        %1372 = vmatprep.subr.bf16.mxu0 0
        %1373 = vmatpush1.bf16.msra.mxu0 0
        %1374 = vmatprep.subr.bf16.mxu0 0
        %1375 = vmatpush1.bf16.msra.mxu0 0
        %1376 = vmatprep.subr.bf16.mxu0 0
        %1377 = vmatpush1.bf16.msra.mxu0 0
        %1378 = vmatprep.subr.bf16.mxu0 0
        %1379 = vmatpush1.bf16.msra.mxu0 0
        %1380 = vmatprep.subr.bf16.mxu0 0
        %1381 = vmatpush1.bf16.msra.mxu0 0
        %1382 = vmatprep.subr.bf16.mxu0 0
        %1383 = vmatpush1.bf16.msra.mxu0 0
        %1384 = vmatprep.subr.bf16.mxu0 0
        %1385 = vmatpush1.bf16.msra.mxu0 0
        %1386 = vmatprep.subr.bf16.mxu0 0
        %1387 = vmatpush1.bf16.msra.mxu0 0
        %1388 = vmatprep.mubr.bf16.mxu0 0
        %1389 = vmatmul.mubr.bf16.gmra.mrb[0].mxu0 %v1321
        %v1390 = vpop.f32.mrb[0].mxu0
        %v1391 = vadd.f32 0.0, %v1390
        %v1392 = vpop.f32.mrb[0].mxu0
        %v1393 = vadd.f32 0.0, %v1392
        %v1394 = vpop.f32.mrb[0].mxu0
        %v1395 = vadd.f32 0.0, %v1394
        %v1396 = vpop.f32.mrb[0].mxu0
        %v1397 = vadd.f32 0.0, %v1396
        %1398 = vmatprep.mubr.bf16.mxu0 0
        %1399 = vmatmul.mubr.bf16.gmra.mrb[0].mxu0 %v1324
        %v1400 = vpop.f32.mrb[0].mxu0
        %v1401 = vadd.f32 0.0, %v1400
        %v1402 = vpop.f32.mrb[0].mxu0
        %v1403 = vadd.f32 0.0, %v1402
        %v1404 = vpop.f32.mrb[0].mxu0
        %v1405 = vadd.f32 0.0, %v1404
        %v1406 = vpop.f32.mrb[0].mxu0
        %v1407 = vadd.f32 0.0, %v1406
        %1408 = vmatprep.mubr.bf16.mxu0 0
        %1409 = vmatmul.mubr.bf16.gmra.mrb[0].mxu0 %v1327
        %v1410 = vpop.f32.mrb[0].mxu0
        %v1411 = vadd.f32 0.0, %v1410
        %v1412 = vpop.f32.mrb[0].mxu0
        %v1413 = vadd.f32 0.0, %v1412
        %v1414 = vpop.f32.mrb[0].mxu0
        %v1415 = vadd.f32 0.0, %v1414
        %v1416 = vpop.f32.mrb[0].mxu0
        %v1417 = vadd.f32 0.0, %v1416
        %1418 = vmatprep.mubr.bf16.mxu0 0
        %1419 = vmatmul.mubr.bf16.gmra.mrb[0].mxu0 %v1330
        %v1420 = vpop.f32.mrb[0].mxu0
        %v1421 = vadd.f32 0.0, %v1420
        %v1422 = vpop.f32.mrb[0].mxu0
        %v1423 = vadd.f32 0.0, %v1422
        %v1424 = vpop.f32.mrb[0].mxu0
        %v1425 = vadd.f32 0.0, %v1424
        %v1426 = vpop.f32.mrb[0].mxu0
        %v1427 = vadd.f32 0.0, %v1426
        %1428 = vdwg.mxu0
        %1429 = vmatprep.subr.bf16.mxu0 %v1251
        %1430 = vmatpush1.bf16.msra.mxu0 %v1250
        %1431 = vmatprep.subr.bf16.mxu0 %v1259
        %1432 = vmatpush1.bf16.msra.mxu0 %v1258
        %1433 = vmatprep.subr.bf16.mxu0 %v1267
        %1434 = vmatpush1.bf16.msra.mxu0 %v1266
        %1435 = vmatprep.subr.bf16.mxu0 %v1275
        %1436 = vmatpush1.bf16.msra.mxu0 %v1274
        %1437 = vmatprep.subr.bf16.mxu0 %v1342
        %1438 = vmatpush1.bf16.msra.mxu0 %v1339
        %1439 = vmatprep.subr.bf16.mxu0 0
        %1440 = vmatpush1.bf16.msra.mxu0 0
        %1441 = vmatprep.subr.bf16.mxu0 0
        %1442 = vmatpush1.bf16.msra.mxu0 0
        %1443 = vmatprep.subr.bf16.mxu0 0
        %1444 = vmatpush1.bf16.msra.mxu0 0
        %1445 = vmatprep.subr.bf16.mxu0 0
        %1446 = vmatpush1.bf16.msra.mxu0 0
        %1447 = vmatprep.subr.bf16.mxu0 0
        %1448 = vmatpush1.bf16.msra.mxu0 0
        %1449 = vmatprep.subr.bf16.mxu0 0
        %1450 = vmatpush1.bf16.msra.mxu0 0
        %1451 = vmatprep.subr.bf16.mxu0 0
        %1452 = vmatpush1.bf16.msra.mxu0 0
        %1453 = vmatprep.subr.bf16.mxu0 0
        %1454 = vmatpush1.bf16.msra.mxu0 0
        %1455 = vmatprep.subr.bf16.mxu0 0
        %1456 = vmatpush1.bf16.msra.mxu0 0
        %1457 = vmatprep.subr.bf16.mxu0 0
        %1458 = vmatpush1.bf16.msra.mxu0 0
        %1459 = vmatprep.subr.bf16.mxu0 0
        %1460 = vmatpush1.bf16.msra.mxu0 0
        %1461 = vmatprep.mubr.bf16.mxu0 0
        %1462 = vmatmul.mubr.bf16.gmra.mrb[0].mxu0 %v1321
        %v1463 = vpop.f32.mrb[0].mxu0
        %v1464 = vadd.f32 0.0, %v1463
        %v1465 = vpop.f32.mrb[0].mxu0
        %v1466 = vadd.f32 0.0, %v1465
        %v1467 = vpop.f32.mrb[0].mxu0
        %v1468 = vadd.f32 0.0, %v1467
        %v1469 = vpop.f32.mrb[0].mxu0
        %v1470 = vadd.f32 0.0, %v1469
        %1471 = vmatprep.mubr.bf16.mxu0 0
        %1472 = vmatmul.mubr.bf16.gmra.mrb[0].mxu0 %v1324
        %v1473 = vpop.f32.mrb[0].mxu0
        %v1474 = vadd.f32 0.0, %v1473
        %v1475 = vpop.f32.mrb[0].mxu0
        %v1476 = vadd.f32 0.0, %v1475
        %v1477 = vpop.f32.mrb[0].mxu0
        %v1478 = vadd.f32 0.0, %v1477
        %v1479 = vpop.f32.mrb[0].mxu0
        %v1480 = vadd.f32 0.0, %v1479
        %1481 = vmatprep.mubr.bf16.mxu0 0
        %1482 = vmatmul.mubr.bf16.gmra.mrb[0].mxu0 %v1327
        %v1483 = vpop.f32.mrb[0].mxu0
        %v1484 = vadd.f32 0.0, %v1483
        %v1485 = vpop.f32.mrb[0].mxu0
        %v1486 = vadd.f32 0.0, %v1485
        %v1487 = vpop.f32.mrb[0].mxu0
        %v1488 = vadd.f32 0.0, %v1487
        %v1489 = vpop.f32.mrb[0].mxu0
        %v1490 = vadd.f32 0.0, %v1489
        %1491 = vmatprep.mubr.bf16.mxu0 0
        %1492 = vmatmul.mubr.bf16.gmra.mrb[0].mxu0 %v1330
        %v1493 = vpop.f32.mrb[0].mxu0
        %v1494 = vadd.f32 0.0, %v1493
        %v1495 = vpop.f32.mrb[0].mxu0
        %v1496 = vadd.f32 0.0, %v1495
        %v1497 = vpop.f32.mrb[0].mxu0
        %v1498 = vadd.f32 0.0, %v1497
        %v1499 = vpop.f32.mrb[0].mxu0
        %v1500 = vadd.f32 0.0, %v1499
        %1501 = vdwg.mxu0
        %1502 = vmatprep.subr.bf16.mxu0 %v1253
        %1503 = vmatpush1.bf16.msra.mxu0 %v1252
        %1504 = vmatprep.subr.bf16.mxu0 %v1261
        %1505 = vmatpush1.bf16.msra.mxu0 %v1260
        %1506 = vmatprep.subr.bf16.mxu0 %v1269
        %1507 = vmatpush1.bf16.msra.mxu0 %v1268
        %1508 = vmatprep.subr.bf16.mxu0 %v1277
        %1509 = vmatpush1.bf16.msra.mxu0 %v1276
        %1510 = vmatprep.subr.bf16.mxu0 %v1348
        %1511 = vmatpush1.bf16.msra.mxu0 %v1345
        %1512 = vmatprep.subr.bf16.mxu0 0
        %1513 = vmatpush1.bf16.msra.mxu0 0
        %1514 = vmatprep.subr.bf16.mxu0 0
        %1515 = vmatpush1.bf16.msra.mxu0 0
        %1516 = vmatprep.subr.bf16.mxu0 0
        %1517 = vmatpush1.bf16.msra.mxu0 0
        %1518 = vmatprep.subr.bf16.mxu0 0
        %1519 = vmatpush1.bf16.msra.mxu0 0
        %1520 = vmatprep.subr.bf16.mxu0 0
        %1521 = vmatpush1.bf16.msra.mxu0 0
        %1522 = vmatprep.subr.bf16.mxu0 0
        %1523 = vmatpush1.bf16.msra.mxu0 0
        %1524 = vmatprep.subr.bf16.mxu0 0
        %1525 = vmatpush1.bf16.msra.mxu0 0
        %1526 = vmatprep.subr.bf16.mxu0 0
        %1527 = vmatpush1.bf16.msra.mxu0 0
        %1528 = vmatprep.subr.bf16.mxu0 0
        %1529 = vmatpush1.bf16.msra.mxu0 0
        %1530 = vmatprep.subr.bf16.mxu0 0
        %1531 = vmatpush1.bf16.msra.mxu0 0
        %1532 = vmatprep.subr.bf16.mxu0 0
        %1533 = vmatpush1.bf16.msra.mxu0 0
        %1534 = vmatprep.mubr.bf16.mxu0 0
        %1535 = vmatmul.mubr.bf16.gmra.mrb[0].mxu0 %v1321
        %v1536 = vpop.f32.mrb[0].mxu0
        %v1537 = vadd.f32 0.0, %v1536
        %v1538 = vpop.f32.mrb[0].mxu0
        %v1539 = vadd.f32 0.0, %v1538
        %v1540 = vpop.f32.mrb[0].mxu0
        %v1541 = vadd.f32 0.0, %v1540
        %v1542 = vpop.f32.mrb[0].mxu0
        %v1543 = vadd.f32 0.0, %v1542
        %1544 = vmatprep.mubr.bf16.mxu0 0
        %1545 = vmatmul.mubr.bf16.gmra.mrb[0].mxu0 %v1324
        %v1546 = vpop.f32.mrb[0].mxu0
        %v1547 = vadd.f32 0.0, %v1546
        %v1548 = vpop.f32.mrb[0].mxu0
        %v1549 = vadd.f32 0.0, %v1548
        %v1550 = vpop.f32.mrb[0].mxu0
        %v1551 = vadd.f32 0.0, %v1550
        %v1552 = vpop.f32.mrb[0].mxu0
        %v1553 = vadd.f32 0.0, %v1552
        %1554 = vmatprep.mubr.bf16.mxu0 0
        %1555 = vmatmul.mubr.bf16.gmra.mrb[0].mxu0 %v1327
        %v1556 = vpop.f32.mrb[0].mxu0
        %v1557 = vadd.f32 0.0, %v1556
        %v1558 = vpop.f32.mrb[0].mxu0
        %v1559 = vadd.f32 0.0, %v1558
        %v1560 = vpop.f32.mrb[0].mxu0
        %v1561 = vadd.f32 0.0, %v1560
        %v1562 = vpop.f32.mrb[0].mxu0
        %v1563 = vadd.f32 0.0, %v1562
        %1564 = vmatprep.mubr.bf16.mxu0 0
        %1565 = vmatmul.mubr.bf16.gmra.mrb[0].mxu0 %v1330
        %v1566 = vpop.f32.mrb[0].mxu0
        %v1567 = vadd.f32 0.0, %v1566
        %v1568 = vpop.f32.mrb[0].mxu0
        %v1569 = vadd.f32 0.0, %v1568
        %v1570 = vpop.f32.mrb[0].mxu0
        %v1571 = vadd.f32 0.0, %v1570
        %v1572 = vpop.f32.mrb[0].mxu0
        %v1573 = vadd.f32 0.0, %v1572
        %1574 = vdwg.mxu0
        %1575 = vmatprep.subr.bf16.mxu0 %v1255
        %1576 = vmatpush1.bf16.msra.mxu0 %v1254
        %1577 = vmatprep.subr.bf16.mxu0 %v1263
        %1578 = vmatpush1.bf16.msra.mxu0 %v1262
        %1579 = vmatprep.subr.bf16.mxu0 %v1271
        %1580 = vmatpush1.bf16.msra.mxu0 %v1270
        %1581 = vmatprep.subr.bf16.mxu0 %v1279
        %1582 = vmatpush1.bf16.msra.mxu0 %v1278
        %1583 = vmatprep.subr.bf16.mxu0 %v1354
        %1584 = vmatpush1.bf16.msra.mxu0 %v1351
        %1585 = vmatprep.subr.bf16.mxu0 0
        %1586 = vmatpush1.bf16.msra.mxu0 0
        %1587 = vmatprep.subr.bf16.mxu0 0
        %1588 = vmatpush1.bf16.msra.mxu0 0
        %1589 = vmatprep.subr.bf16.mxu0 0
        %1590 = vmatpush1.bf16.msra.mxu0 0
        %1591 = vmatprep.subr.bf16.mxu0 0
        %1592 = vmatpush1.bf16.msra.mxu0 0
        %1593 = vmatprep.subr.bf16.mxu0 0
        %1594 = vmatpush1.bf16.msra.mxu0 0
        %1595 = vmatprep.subr.bf16.mxu0 0
        %1596 = vmatpush1.bf16.msra.mxu0 0
        %1597 = vmatprep.subr.bf16.mxu0 0
        %1598 = vmatpush1.bf16.msra.mxu0 0
        %1599 = vmatprep.subr.bf16.mxu0 0
        %1600 = vmatpush1.bf16.msra.mxu0 0
        %1601 = vmatprep.subr.bf16.mxu0 0
        %1602 = vmatpush1.bf16.msra.mxu0 0
        %1603 = vmatprep.subr.bf16.mxu0 0
        %1604 = vmatpush1.bf16.msra.mxu0 0
        %1605 = vmatprep.subr.bf16.mxu0 0
        %1606 = vmatpush1.bf16.msra.mxu0 0
        %1607 = vmatprep.mubr.bf16.mxu0 0
        %1608 = vmatmul.mubr.bf16.gmra.mrb[0].mxu0 %v1321
        %v1609 = vpop.f32.mrb[0].mxu0
        %v1610 = vadd.f32 0.0, %v1609
        %v1611 = vpop.f32.mrb[0].mxu0
        %v1612 = vadd.f32 0.0, %v1611
        %v1613 = vpop.f32.mrb[0].mxu0
        %v1614 = vadd.f32 0.0, %v1613
        %v1615 = vpop.f32.mrb[0].mxu0
        %v1616 = vadd.f32 0.0, %v1615
        %1617 = vmatprep.mubr.bf16.mxu0 0
        %1618 = vmatmul.mubr.bf16.gmra.mrb[0].mxu0 %v1324
        %v1619 = vpop.f32.mrb[0].mxu0
        %v1620 = vadd.f32 0.0, %v1619
        %v1621 = vpop.f32.mrb[0].mxu0
        %v1622 = vadd.f32 0.0, %v1621
        %v1623 = vpop.f32.mrb[0].mxu0
        %v1624 = vadd.f32 0.0, %v1623
        %v1625 = vpop.f32.mrb[0].mxu0
        %v1626 = vadd.f32 0.0, %v1625
        %1627 = vmatprep.mubr.bf16.mxu0 0
        %1628 = vmatmul.mubr.bf16.gmra.mrb[0].mxu0 %v1327
        %v1629 = vpop.f32.mrb[0].mxu0
        %v1630 = vadd.f32 0.0, %v1629
        %v1631 = vpop.f32.mrb[0].mxu0
        %v1632 = vadd.f32 0.0, %v1631
        %v1633 = vpop.f32.mrb[0].mxu0
        %v1634 = vadd.f32 0.0, %v1633
        %v1635 = vpop.f32.mrb[0].mxu0
        %v1636 = vadd.f32 0.0, %v1635
        %1637 = vmatprep.mubr.bf16.mxu0 0
        %1638 = vmatmul.mubr.bf16.gmra.mrb[0].mxu0 %v1330
        %v1639 = vpop.f32.mrb[0].mxu0
        %v1640 = vadd.f32 0.0, %v1639
        %v1641 = vpop.f32.mrb[0].mxu0
        %v1642 = vadd.f32 0.0, %v1641
        %v1643 = vpop.f32.mrb[0].mxu0
        %v1644 = vadd.f32 0.0, %v1643
        %v1645 = vpop.f32.mrb[0].mxu0
        %v1646 = vadd.f32 0.0, %v1645
        %1647 = vdwg.mxu0
        %v1648 = vpack.c.bf16 %v1395, %v1391
        %v1649 = vpack.c.bf16 %v1397, %v1393
        %v1650 = vpack.c.bf16 %v1468, %v1464
        %v1651 = vpack.c.bf16 %v1470, %v1466
        %v1652 = vpack.c.bf16 %v1541, %v1537
        %v1653 = vpack.c.bf16 %v1543, %v1539
        %v1654 = vpack.c.bf16 %v1614, %v1610
        %v1655 = vpack.c.bf16 %v1616, %v1612
        %v1656 = vpack.c.bf16 %v1405, %v1401
        %v1657 = vpack.c.bf16 %v1407, %v1403
        %v1658 = vpack.c.bf16 %v1478, %v1474
        %v1659 = vpack.c.bf16 %v1480, %v1476
        %v1660 = vpack.c.bf16 %v1551, %v1547
        %v1661 = vpack.c.bf16 %v1553, %v1549
        %v1662 = vpack.c.bf16 %v1624, %v1620
        %v1663 = vpack.c.bf16 %v1626, %v1622
        %v1664 = vpack.c.bf16 %v1415, %v1411
        %v1665 = vpack.c.bf16 %v1417, %v1413
        %v1666 = vpack.c.bf16 %v1488, %v1484
        %v1667 = vpack.c.bf16 %v1490, %v1486
        %v1668 = vpack.c.bf16 %v1561, %v1557
        %v1669 = vpack.c.bf16 %v1563, %v1559
        %v1670 = vpack.c.bf16 %v1634, %v1630
        %v1671 = vpack.c.bf16 %v1636, %v1632
        %v1672 = vpack.c.bf16 %v1425, %v1421
        %v1673 = vpack.c.bf16 %v1427, %v1423
        %v1674 = vpack.c.bf16 %v1498, %v1494
        %v1675 = vpack.c.bf16 %v1500, %v1496
        %v1676 = vpack.c.bf16 %v1571, %v1567
        %v1677 = vpack.c.bf16 %v1573, %v1569
        %v1678 = vpack.c.bf16 %v1644, %v1640
        %v1679 = vpack.c.bf16 %v1646, %v1642
        %v1680 = vld [vmem:[#allocation11] sm:$0xff]
        %v1681 = vld [vmem:[#allocation11 + $0x8] sm:$0xff]
        %v1682 = vld [vmem:[#allocation11 + $0x10] sm:$0xff]
        %v1683 = vld [vmem:[#allocation11 + $0x18] sm:$0xff]
        %v1684 = vld [vmem:[#allocation11 + $0x20] sm:$0xff]
        %v1685 = vld [vmem:[#allocation11 + $0x28] sm:$0xff]
        %v1686 = vld [vmem:[#allocation11 + $0x30] sm:$0xff]
        %v1687 = vld [vmem:[#allocation11 + $0x38] sm:$0xff]
        %v1688 = vld [vmem:[#allocation11 + $0x40] sm:$0xff]
        %v1689 = vld [vmem:[#allocation11 + $0x48] sm:$0xff]
        %v1690 = vld [vmem:[#allocation11 + $0x50] sm:$0xff]
        %v1691 = vld [vmem:[#allocation11 + $0x58] sm:$0xff]
        %v1692 = vld [vmem:[#allocation11 + $0x60] sm:$0xff]
        %v1693 = vld [vmem:[#allocation11 + $0x68] sm:$0xff]
        %v1694 = vld [vmem:[#allocation11 + $0x70] sm:$0xff]
        %v1695 = vld [vmem:[#allocation11 + $0x78] sm:$0xff]
        %v1696 = vld [vmem:[#allocation11 + $0x80] sm:$0xff]
        %v1697 = vld [vmem:[#allocation11 + $0x88] sm:$0xff]
        %v1698 = vld [vmem:[#allocation11 + $0x90] sm:$0xff]
        %v1699 = vld [vmem:[#allocation11 + $0x98] sm:$0xff]
        %v1700 = vld [vmem:[#allocation11 + $0xa0] sm:$0xff]
        %v1701 = vld [vmem:[#allocation11 + $0xa8] sm:$0xff]
        %v1702 = vld [vmem:[#allocation11 + $0xb0] sm:$0xff]
        %v1703 = vld [vmem:[#allocation11 + $0xb8] sm:$0xff]
        %v1704 = vld [vmem:[#allocation11 + $0xc0] sm:$0xff]
        %v1705 = vld [vmem:[#allocation11 + $0xc8] sm:$0xff]
        %v1706 = vld [vmem:[#allocation11 + $0xd0] sm:$0xff]
        %v1707 = vld [vmem:[#allocation11 + $0xd8] sm:$0xff]
        %v1708 = vld [vmem:[#allocation11 + $0xe0] sm:$0xff]
        %v1709 = vld [vmem:[#allocation11 + $0xe8] sm:$0xff]
        %v1710 = vld [vmem:[#allocation11 + $0xf0] sm:$0xff]
        %v1711 = vld [vmem:[#allocation11 + $0xf8] sm:$0xff]
        %v1712 = vld [vmem:[#allocation11 + $0x100] sm:$0xff]
        %v1713 = vld [vmem:[#allocation11 + $0x108] sm:$0xff]
        %v1714 = vld [vmem:[#allocation11 + $0x110] sm:$0xff]
        %v1715 = vld [vmem:[#allocation11 + $0x118] sm:$0xff]
        %v1752 = vunpack.c.l.b16 %v1680
        %v1753 = vunpack.c.h.b16 %v1680
        %v1754 = vunpack.c.l.b16 %v1681
        %v1755 = vunpack.c.h.b16 %v1681
        %v1756 = vunpack.c.l.b16 %v1682
        %v1757 = vunpack.c.h.b16 %v1682
        %v1758 = vunpack.c.l.b16 %v1683
        %v1759 = vunpack.c.h.b16 %v1683
        %v1760 = vunpack.c.l.b16 %v1684
        %v1761 = vunpack.c.h.b16 %v1684
        %v1762 = vunpack.c.l.b16 %v1685
        %v1763 = vunpack.c.h.b16 %v1685
        %v1764 = vunpack.c.l.b16 %v1686
        %v1765 = vunpack.c.h.b16 %v1686
        %v1766 = vunpack.c.l.b16 %v1687
        %v1767 = vunpack.c.h.b16 %v1687
        %v1768 = vunpack.c.l.b16 %v1688
        %v1769 = vunpack.c.h.b16 %v1688
        %v1770 = vunpack.c.l.b16 %v1689
        %v1771 = vunpack.c.h.b16 %v1689
        %v1772 = vunpack.c.l.b16 %v1690
        %v1773 = vunpack.c.h.b16 %v1690
        %v1774 = vunpack.c.l.b16 %v1691
        %v1775 = vunpack.c.h.b16 %v1691
        %v1776 = vunpack.c.l.b16 %v1692
        %v1777 = vunpack.c.h.b16 %v1692
        %v1778 = vunpack.c.l.b16 %v1693
        %v1779 = vunpack.c.h.b16 %v1693
        %v1780 = vunpack.c.l.b16 %v1694
        %v1781 = vunpack.c.h.b16 %v1694
        %v1782 = vunpack.c.l.b16 %v1695
        %v1783 = vunpack.c.h.b16 %v1695
        %v1784 = vunpack.c.l.b16 %v1696
        %v1785 = vunpack.c.h.b16 %v1696
        %v1786 = vunpack.c.l.b16 %v1697
        %v1787 = vunpack.c.h.b16 %v1697
        %v1788 = vunpack.c.l.b16 %v1698
        %v1789 = vunpack.c.h.b16 %v1698
        %v1790 = vunpack.c.l.b16 %v1699
        %v1791 = vunpack.c.h.b16 %v1699
        %v1792 = vunpack.c.l.b16 %v1700
        %v1793 = vunpack.c.h.b16 %v1700
        %v1794 = vunpack.c.l.b16 %v1701
        %v1795 = vunpack.c.h.b16 %v1701
        %v1796 = vunpack.c.l.b16 %v1702
        %v1797 = vunpack.c.h.b16 %v1702
        %v1798 = vunpack.c.l.b16 %v1703
        %v1799 = vunpack.c.h.b16 %v1703
        %v1800 = vunpack.c.l.b16 %v1704
        %v1801 = vunpack.c.h.b16 %v1704
        %v1802 = vunpack.c.l.b16 %v1705
        %v1803 = vunpack.c.h.b16 %v1705
        %v1804 = vunpack.c.l.b16 %v1706
        %v1805 = vunpack.c.h.b16 %v1706
        %v1806 = vunpack.c.l.b16 %v1707
        %v1807 = vunpack.c.h.b16 %v1707
        %v1808 = vunpack.c.l.b16 %v1708
        %v1809 = vunpack.c.h.b16 %v1708
        %v1810 = vunpack.c.l.b16 %v1709
        %v1811 = vunpack.c.h.b16 %v1709
        %v1812 = vunpack.c.l.b16 %v1710
        %v1813 = vunpack.c.h.b16 %v1710
        %v1814 = vunpack.c.l.b16 %v1711
        %v1815 = vunpack.c.h.b16 %v1711
        %v1816 = vunpack.c.l.b16 %v1712
        %v1817 = vunpack.c.h.b16 %v1712
        %v1818 = vunpack.c.l.b16 %v1713
        %v1819 = vunpack.c.h.b16 %v1713
        %v1820 = vunpack.c.l.b16 %v1714
        %v1821 = vunpack.c.h.b16 %v1714
        %v1822 = vunpack.c.l.b16 %v1715
        %v1823 = vunpack.c.h.b16 %v1715
        %v1824 = vpack.c.b16 %v1760, %v1752
        %v1825 = vpack.c.b16 %v1761, %v1753
        %v1826 = vpack.c.b16 %v1762, %v1754
        %v1827 = vpack.c.b16 %v1763, %v1755
        %v1828 = vpack.c.b16 %v1764, %v1756
        %v1829 = vpack.c.b16 %v1765, %v1757
        %v1830 = vpack.c.b16 %v1766, %v1758
        %v1831 = vpack.c.b16 %v1767, %v1759
        %v1832 = vpack.c.b16 %v1776, %v1768
        %v1833 = vpack.c.b16 %v1777, %v1769
        %v1834 = vpack.c.b16 %v1778, %v1770
        %v1835 = vpack.c.b16 %v1779, %v1771
        %v1836 = vpack.c.b16 %v1780, %v1772
        %v1837 = vpack.c.b16 %v1781, %v1773
        %v1838 = vpack.c.b16 %v1782, %v1774
        %v1839 = vpack.c.b16 %v1783, %v1775
        %v1840 = vpack.c.b16 %v1792, %v1784
        %v1841 = vpack.c.b16 %v1793, %v1785
        %v1842 = vpack.c.b16 %v1794, %v1786
        %v1843 = vpack.c.b16 %v1795, %v1787
        %v1844 = vpack.c.b16 %v1796, %v1788
        %v1845 = vpack.c.b16 %v1797, %v1789
        %v1846 = vpack.c.b16 %v1798, %v1790
        %v1847 = vpack.c.b16 %v1799, %v1791
        %v1848 = vpack.c.b16 %v1808, %v1800
        %v1849 = vpack.c.b16 %v1809, %v1801
        %v1850 = vpack.c.b16 %v1810, %v1802
        %v1851 = vpack.c.b16 %v1811, %v1803
        %v1852 = vpack.c.b16 %v1812, %v1804
        %v1853 = vpack.c.b16 %v1813, %v1805
        %v1854 = vpack.c.b16 %v1814, %v1806
        %v1855 = vpack.c.b16 %v1815, %v1807
        %v1856 = vpack.c.b16 %v1816, %v1816
        %v1857 = vpack.c.b16 %v1817, %v1817
        %v1858 = vpack.c.b16 %v1818, %v1818
        %v1859 = vpack.c.b16 %v1819, %v1819
        %v1860 = vpack.c.b16 %v1820, %v1820
        %v1861 = vpack.c.b16 %v1821, %v1821
        %v1862 = vpack.c.b16 %v1822, %v1822
        %v1863 = vpack.c.b16 %v1823, %v1823
        %v1897 = vsel %vm735, %v1856, 0
        %v1900 = vsel %vm735, %v1857, 0
        %v1903 = vsel %vm735, %v1858, 0
        %v1906 = vsel %vm735, %v1859, 0
        %v1909 = vsel %vm735, %v1860, 0
        %v1912 = vsel %vm735, %v1861, 0
        %v1915 = vsel %vm735, %v1862, 0
        %v1918 = vsel %vm735, %v1863, 0
        %1920 = vmatprep.subr.bf16.mxu0 %v1825
        %1921 = vmatpush1.bf16.msra.mxu0 %v1824
        %1922 = vmatprep.subr.bf16.mxu0 %v1833
        %1923 = vmatpush1.bf16.msra.mxu0 %v1832
        %1924 = vmatprep.subr.bf16.mxu0 %v1841
        %1925 = vmatpush1.bf16.msra.mxu0 %v1840
        %1926 = vmatprep.subr.bf16.mxu0 %v1849
        %1927 = vmatpush1.bf16.msra.mxu0 %v1848
        %1928 = vmatprep.subr.bf16.mxu0 %v1900
        %1929 = vmatpush1.bf16.msra.mxu0 %v1897
        %1930 = vmatprep.subr.bf16.mxu0 0
        %1931 = vmatpush1.bf16.msra.mxu0 0
        %1932 = vmatprep.subr.bf16.mxu0 0
        %1933 = vmatpush1.bf16.msra.mxu0 0
        %1934 = vmatprep.subr.bf16.mxu0 0
        %1935 = vmatpush1.bf16.msra.mxu0 0
        %1936 = vmatprep.subr.bf16.mxu0 0
        %1937 = vmatpush1.bf16.msra.mxu0 0
        %1938 = vmatprep.subr.bf16.mxu0 0
        %1939 = vmatpush1.bf16.msra.mxu0 0
        %1940 = vmatprep.subr.bf16.mxu0 0
        %1941 = vmatpush1.bf16.msra.mxu0 0
        %1942 = vmatprep.subr.bf16.mxu0 0
        %1943 = vmatpush1.bf16.msra.mxu0 0
        %1944 = vmatprep.subr.bf16.mxu0 0
        %1945 = vmatpush1.bf16.msra.mxu0 0
        %1946 = vmatprep.subr.bf16.mxu0 0
        %1947 = vmatpush1.bf16.msra.mxu0 0
        %1948 = vmatprep.subr.bf16.mxu0 0
        %1949 = vmatpush1.bf16.msra.mxu0 0
        %1950 = vmatprep.subr.bf16.mxu0 0
        %1951 = vmatpush1.bf16.msra.mxu0 0
        %1952 = vmatprep.mubr.bf16.mxu0 0
        %1953 = vmatmul.mubr.bf16.gmra.mrb[0].mxu0 %v1321
        %v1954 = vpop.f32.mrb[0].mxu0
        %v1955 = vadd.f32 0.0, %v1954
        %v1956 = vpop.f32.mrb[0].mxu0
        %v1957 = vadd.f32 0.0, %v1956
        %v1958 = vpop.f32.mrb[0].mxu0
        %v1959 = vadd.f32 0.0, %v1958
        %v1960 = vpop.f32.mrb[0].mxu0
        %v1961 = vadd.f32 0.0, %v1960
        %1962 = vmatprep.mubr.bf16.mxu0 0
        %1963 = vmatmul.mubr.bf16.gmra.mrb[0].mxu0 %v1324
        %v1964 = vpop.f32.mrb[0].mxu0
        %v1965 = vadd.f32 0.0, %v1964
        %v1966 = vpop.f32.mrb[0].mxu0
        %v1967 = vadd.f32 0.0, %v1966
        %v1968 = vpop.f32.mrb[0].mxu0
        %v1969 = vadd.f32 0.0, %v1968
        %v1970 = vpop.f32.mrb[0].mxu0
        %v1971 = vadd.f32 0.0, %v1970
        %1972 = vmatprep.mubr.bf16.mxu0 0
        %1973 = vmatmul.mubr.bf16.gmra.mrb[0].mxu0 %v1327
        %v1974 = vpop.f32.mrb[0].mxu0
        %v1975 = vadd.f32 0.0, %v1974
        %v1976 = vpop.f32.mrb[0].mxu0
        %v1977 = vadd.f32 0.0, %v1976
        %v1978 = vpop.f32.mrb[0].mxu0
        %v1979 = vadd.f32 0.0, %v1978
        %v1980 = vpop.f32.mrb[0].mxu0
        %v1981 = vadd.f32 0.0, %v1980
        %1982 = vmatprep.mubr.bf16.mxu0 0
        %1983 = vmatmul.mubr.bf16.gmra.mrb[0].mxu0 %v1330
        %v1984 = vpop.f32.mrb[0].mxu0
        %v1985 = vadd.f32 0.0, %v1984
        %v1986 = vpop.f32.mrb[0].mxu0
        %v1987 = vadd.f32 0.0, %v1986
        %v1988 = vpop.f32.mrb[0].mxu0
        %v1989 = vadd.f32 0.0, %v1988
        %v1990 = vpop.f32.mrb[0].mxu0
        %v1991 = vadd.f32 0.0, %v1990
        %1992 = vdwg.mxu0
        %1993 = vmatprep.subr.bf16.mxu0 %v1827
        %1994 = vmatpush1.bf16.msra.mxu0 %v1826
        %1995 = vmatprep.subr.bf16.mxu0 %v1835
        %1996 = vmatpush1.bf16.msra.mxu0 %v1834
        %1997 = vmatprep.subr.bf16.mxu0 %v1843
        %1998 = vmatpush1.bf16.msra.mxu0 %v1842
        %1999 = vmatprep.subr.bf16.mxu0 %v1851
        %2000 = vmatpush1.bf16.msra.mxu0 %v1850
        %2001 = vmatprep.subr.bf16.mxu0 %v1906
        %2002 = vmatpush1.bf16.msra.mxu0 %v1903
        %2003 = vmatprep.subr.bf16.mxu0 0
        %2004 = vmatpush1.bf16.msra.mxu0 0
        %2005 = vmatprep.subr.bf16.mxu0 0
        %2006 = vmatpush1.bf16.msra.mxu0 0
        %2007 = vmatprep.subr.bf16.mxu0 0
        %2008 = vmatpush1.bf16.msra.mxu0 0
        %2009 = vmatprep.subr.bf16.mxu0 0
        %2010 = vmatpush1.bf16.msra.mxu0 0
        %2011 = vmatprep.subr.bf16.mxu0 0
        %2012 = vmatpush1.bf16.msra.mxu0 0
        %2013 = vmatprep.subr.bf16.mxu0 0
        %2014 = vmatpush1.bf16.msra.mxu0 0
        %2015 = vmatprep.subr.bf16.mxu0 0
        %2016 = vmatpush1.bf16.msra.mxu0 0
        %2017 = vmatprep.subr.bf16.mxu0 0
        %2018 = vmatpush1.bf16.msra.mxu0 0
        %2019 = vmatprep.subr.bf16.mxu0 0
        %2020 = vmatpush1.bf16.msra.mxu0 0
        %2021 = vmatprep.subr.bf16.mxu0 0
        %2022 = vmatpush1.bf16.msra.mxu0 0
        %2023 = vmatprep.subr.bf16.mxu0 0
        %2024 = vmatpush1.bf16.msra.mxu0 0
        %2025 = vmatprep.mubr.bf16.mxu0 0
        %2026 = vmatmul.mubr.bf16.gmra.mrb[0].mxu0 %v1321
        %v2027 = vpop.f32.mrb[0].mxu0
        %v2028 = vadd.f32 0.0, %v2027
        %v2029 = vpop.f32.mrb[0].mxu0
        %v2030 = vadd.f32 0.0, %v2029
        %v2031 = vpop.f32.mrb[0].mxu0
        %v2032 = vadd.f32 0.0, %v2031
        %v2033 = vpop.f32.mrb[0].mxu0
        %v2034 = vadd.f32 0.0, %v2033
        %2035 = vmatprep.mubr.bf16.mxu0 0
        %2036 = vmatmul.mubr.bf16.gmra.mrb[0].mxu0 %v1324
        %v2037 = vpop.f32.mrb[0].mxu0
        %v2038 = vadd.f32 0.0, %v2037
        %v2039 = vpop.f32.mrb[0].mxu0
        %v2040 = vadd.f32 0.0, %v2039
        %v2041 = vpop.f32.mrb[0].mxu0
        %v2042 = vadd.f32 0.0, %v2041
        %v2043 = vpop.f32.mrb[0].mxu0
        %v2044 = vadd.f32 0.0, %v2043
        %2045 = vmatprep.mubr.bf16.mxu0 0
        %2046 = vmatmul.mubr.bf16.gmra.mrb[0].mxu0 %v1327
        %v2047 = vpop.f32.mrb[0].mxu0
        %v2048 = vadd.f32 0.0, %v2047
        %v2049 = vpop.f32.mrb[0].mxu0
        %v2050 = vadd.f32 0.0, %v2049
        %v2051 = vpop.f32.mrb[0].mxu0
        %v2052 = vadd.f32 0.0, %v2051
        %v2053 = vpop.f32.mrb[0].mxu0
        %v2054 = vadd.f32 0.0, %v2053
        %2055 = vmatprep.mubr.bf16.mxu0 0
        %2056 = vmatmul.mubr.bf16.gmra.mrb[0].mxu0 %v1330
        %v2057 = vpop.f32.mrb[0].mxu0
        %v2058 = vadd.f32 0.0, %v2057
        %v2059 = vpop.f32.mrb[0].mxu0
        %v2060 = vadd.f32 0.0, %v2059
        %v2061 = vpop.f32.mrb[0].mxu0
        %v2062 = vadd.f32 0.0, %v2061
        %v2063 = vpop.f32.mrb[0].mxu0
        %v2064 = vadd.f32 0.0, %v2063
        %2065 = vdwg.mxu0
        %2066 = vmatprep.subr.bf16.mxu0 %v1829
        %2067 = vmatpush1.bf16.msra.mxu0 %v1828
        %2068 = vmatprep.subr.bf16.mxu0 %v1837
        %2069 = vmatpush1.bf16.msra.mxu0 %v1836
        %2070 = vmatprep.subr.bf16.mxu0 %v1845
        %2071 = vmatpush1.bf16.msra.mxu0 %v1844
        %2072 = vmatprep.subr.bf16.mxu0 %v1853
        %2073 = vmatpush1.bf16.msra.mxu0 %v1852
        %2074 = vmatprep.subr.bf16.mxu0 %v1912
        %2075 = vmatpush1.bf16.msra.mxu0 %v1909
        %2076 = vmatprep.subr.bf16.mxu0 0
        %2077 = vmatpush1.bf16.msra.mxu0 0
        %2078 = vmatprep.subr.bf16.mxu0 0
        %2079 = vmatpush1.bf16.msra.mxu0 0
        %2080 = vmatprep.subr.bf16.mxu0 0
        %2081 = vmatpush1.bf16.msra.mxu0 0
        %2082 = vmatprep.subr.bf16.mxu0 0
        %2083 = vmatpush1.bf16.msra.mxu0 0
        %2084 = vmatprep.subr.bf16.mxu0 0
        %2085 = vmatpush1.bf16.msra.mxu0 0
        %2086 = vmatprep.subr.bf16.mxu0 0
        %2087 = vmatpush1.bf16.msra.mxu0 0
        %2088 = vmatprep.subr.bf16.mxu0 0
        %2089 = vmatpush1.bf16.msra.mxu0 0
        %2090 = vmatprep.subr.bf16.mxu0 0
        %2091 = vmatpush1.bf16.msra.mxu0 0
        %2092 = vmatprep.subr.bf16.mxu0 0
        %2093 = vmatpush1.bf16.msra.mxu0 0
        %2094 = vmatprep.subr.bf16.mxu0 0
        %2095 = vmatpush1.bf16.msra.mxu0 0
        %2096 = vmatprep.subr.bf16.mxu0 0
        %2097 = vmatpush1.bf16.msra.mxu0 0
        %2098 = vmatprep.mubr.bf16.mxu0 0
        %2099 = vmatmul.mubr.bf16.gmra.mrb[0].mxu0 %v1321
        %v2100 = vpop.f32.mrb[0].mxu0
        %v2101 = vadd.f32 0.0, %v2100
        %v2102 = vpop.f32.mrb[0].mxu0
        %v2103 = vadd.f32 0.0, %v2102
        %v2104 = vpop.f32.mrb[0].mxu0
        %v2105 = vadd.f32 0.0, %v2104
        %v2106 = vpop.f32.mrb[0].mxu0
        %v2107 = vadd.f32 0.0, %v2106
        %2108 = vmatprep.mubr.bf16.mxu0 0
        %2109 = vmatmul.mubr.bf16.gmra.mrb[0].mxu0 %v1324
        %v2110 = vpop.f32.mrb[0].mxu0
        %v2111 = vadd.f32 0.0, %v2110
        %v2112 = vpop.f32.mrb[0].mxu0
        %v2113 = vadd.f32 0.0, %v2112
        %v2114 = vpop.f32.mrb[0].mxu0
        %v2115 = vadd.f32 0.0, %v2114
        %v2116 = vpop.f32.mrb[0].mxu0
        %v2117 = vadd.f32 0.0, %v2116
        %2118 = vmatprep.mubr.bf16.mxu0 0
        %2119 = vmatmul.mubr.bf16.gmra.mrb[0].mxu0 %v1327
        %v2120 = vpop.f32.mrb[0].mxu0
        %v2121 = vadd.f32 0.0, %v2120
        %v2122 = vpop.f32.mrb[0].mxu0
        %v2123 = vadd.f32 0.0, %v2122
        %v2124 = vpop.f32.mrb[0].mxu0
        %v2125 = vadd.f32 0.0, %v2124
        %v2126 = vpop.f32.mrb[0].mxu0
        %v2127 = vadd.f32 0.0, %v2126
        %2128 = vmatprep.mubr.bf16.mxu0 0
        %2129 = vmatmul.mubr.bf16.gmra.mrb[0].mxu0 %v1330
        %v2130 = vpop.f32.mrb[0].mxu0
        %v2131 = vadd.f32 0.0, %v2130
        %v2132 = vpop.f32.mrb[0].mxu0
        %v2133 = vadd.f32 0.0, %v2132
        %v2134 = vpop.f32.mrb[0].mxu0
        %v2135 = vadd.f32 0.0, %v2134
        %v2136 = vpop.f32.mrb[0].mxu0
        %v2137 = vadd.f32 0.0, %v2136
        %2138 = vdwg.mxu0
        %2139 = vmatprep.subr.bf16.mxu0 %v1831
        %2140 = vmatpush1.bf16.msra.mxu0 %v1830
        %2141 = vmatprep.subr.bf16.mxu0 %v1839
        %2142 = vmatpush1.bf16.msra.mxu0 %v1838
        %2143 = vmatprep.subr.bf16.mxu0 %v1847
        %2144 = vmatpush1.bf16.msra.mxu0 %v1846
        %2145 = vmatprep.subr.bf16.mxu0 %v1855
        %2146 = vmatpush1.bf16.msra.mxu0 %v1854
        %2147 = vmatprep.subr.bf16.mxu0 %v1918
        %2148 = vmatpush1.bf16.msra.mxu0 %v1915
        %2149 = vmatprep.subr.bf16.mxu0 0
        %2150 = vmatpush1.bf16.msra.mxu0 0
        %2151 = vmatprep.subr.bf16.mxu0 0
        %2152 = vmatpush1.bf16.msra.mxu0 0
        %2153 = vmatprep.subr.bf16.mxu0 0
        %2154 = vmatpush1.bf16.msra.mxu0 0
        %2155 = vmatprep.subr.bf16.mxu0 0
        %2156 = vmatpush1.bf16.msra.mxu0 0
        %2157 = vmatprep.subr.bf16.mxu0 0
        %2158 = vmatpush1.bf16.msra.mxu0 0
        %2159 = vmatprep.subr.bf16.mxu0 0
        %2160 = vmatpush1.bf16.msra.mxu0 0
        %2161 = vmatprep.subr.bf16.mxu0 0
        %2162 = vmatpush1.bf16.msra.mxu0 0
        %2163 = vmatprep.subr.bf16.mxu0 0
        %2164 = vmatpush1.bf16.msra.mxu0 0
        %2165 = vmatprep.subr.bf16.mxu0 0
        %2166 = vmatpush1.bf16.msra.mxu0 0
        %2167 = vmatprep.subr.bf16.mxu0 0
        %2168 = vmatpush1.bf16.msra.mxu0 0
        %2169 = vmatprep.subr.bf16.mxu0 0
        %2170 = vmatpush1.bf16.msra.mxu0 0
        %2171 = vmatprep.mubr.bf16.mxu0 0
        %2172 = vmatmul.mubr.bf16.gmra.mrb[0].mxu0 %v1321
        %v2173 = vpop.f32.mrb[0].mxu0
        %v2174 = vadd.f32 0.0, %v2173
        %v2175 = vpop.f32.mrb[0].mxu0
        %v2176 = vadd.f32 0.0, %v2175
        %v2177 = vpop.f32.mrb[0].mxu0
        %v2178 = vadd.f32 0.0, %v2177
        %v2179 = vpop.f32.mrb[0].mxu0
        %v2180 = vadd.f32 0.0, %v2179
        %2181 = vmatprep.mubr.bf16.mxu0 0
        %2182 = vmatmul.mubr.bf16.gmra.mrb[0].mxu0 %v1324
        %v2183 = vpop.f32.mrb[0].mxu0
        %v2184 = vadd.f32 0.0, %v2183
        %v2185 = vpop.f32.mrb[0].mxu0
        %v2186 = vadd.f32 0.0, %v2185
        %v2187 = vpop.f32.mrb[0].mxu0
        %v2188 = vadd.f32 0.0, %v2187
        %v2189 = vpop.f32.mrb[0].mxu0
        %v2190 = vadd.f32 0.0, %v2189
        %2191 = vmatprep.mubr.bf16.mxu0 0
        %2192 = vmatmul.mubr.bf16.gmra.mrb[0].mxu0 %v1327
        %v2193 = vpop.f32.mrb[0].mxu0
        %v2194 = vadd.f32 0.0, %v2193
        %v2195 = vpop.f32.mrb[0].mxu0
        %v2196 = vadd.f32 0.0, %v2195
        %v2197 = vpop.f32.mrb[0].mxu0
        %v2198 = vadd.f32 0.0, %v2197
        %v2199 = vpop.f32.mrb[0].mxu0
        %v2200 = vadd.f32 0.0, %v2199
        %2201 = vmatprep.mubr.bf16.mxu0 0
        %2202 = vmatmul.mubr.bf16.gmra.mrb[0].mxu0 %v1330
        %v2203 = vpop.f32.mrb[0].mxu0
        %v2204 = vadd.f32 0.0, %v2203
        %v2205 = vpop.f32.mrb[0].mxu0
        %v2206 = vadd.f32 0.0, %v2205
        %v2207 = vpop.f32.mrb[0].mxu0
        %v2208 = vadd.f32 0.0, %v2207
        %v2209 = vpop.f32.mrb[0].mxu0
        %v2210 = vadd.f32 0.0, %v2209
        %2211 = vdwg.mxu0
        %v2212 = vpack.c.bf16 %v1959, %v1955
        %v2213 = vpack.c.bf16 %v1961, %v1957
        %v2214 = vpack.c.bf16 %v2032, %v2028
        %v2215 = vpack.c.bf16 %v2034, %v2030
        %v2216 = vpack.c.bf16 %v2105, %v2101
        %v2217 = vpack.c.bf16 %v2107, %v2103
        %v2218 = vpack.c.bf16 %v2178, %v2174
        %v2219 = vpack.c.bf16 %v2180, %v2176
        %v2220 = vpack.c.bf16 %v1969, %v1965
        %v2221 = vpack.c.bf16 %v1971, %v1967
        %v2222 = vpack.c.bf16 %v2042, %v2038
        %v2223 = vpack.c.bf16 %v2044, %v2040
        %v2224 = vpack.c.bf16 %v2115, %v2111
        %v2225 = vpack.c.bf16 %v2117, %v2113
        %v2226 = vpack.c.bf16 %v2188, %v2184
        %v2227 = vpack.c.bf16 %v2190, %v2186
        %v2228 = vpack.c.bf16 %v1979, %v1975
        %v2229 = vpack.c.bf16 %v1981, %v1977
        %v2230 = vpack.c.bf16 %v2052, %v2048
        %v2231 = vpack.c.bf16 %v2054, %v2050
        %v2232 = vpack.c.bf16 %v2125, %v2121
        %v2233 = vpack.c.bf16 %v2127, %v2123
        %v2234 = vpack.c.bf16 %v2198, %v2194
        %v2235 = vpack.c.bf16 %v2200, %v2196
        %v2236 = vpack.c.bf16 %v1989, %v1985
        %v2237 = vpack.c.bf16 %v1991, %v1987
        %v2238 = vpack.c.bf16 %v2062, %v2058
        %v2239 = vpack.c.bf16 %v2064, %v2060
        %v2240 = vpack.c.bf16 %v2135, %v2131
        %v2241 = vpack.c.bf16 %v2137, %v2133
        %v2242 = vpack.c.bf16 %v2208, %v2204
        %v2243 = vpack.c.bf16 %v2210, %v2206
        %2244 = vmatprep.subr.bf16.mxu0 0
        %2245 = vmatpush1.bf16.xpose.msra.mxu0 %v1648
        %2246 = vmatprep.subr.bf16.mxu0 0
        %2247 = vmatpush1.bf16.xpose.msra.mxu0 %v1656
        %2248 = vmatprep.subr.bf16.mxu0 0
        %2249 = vmatpush1.bf16.xpose.msra.mxu0 %v1664
        %2250 = vmatprep.subr.bf16.mxu0 0
        %2251 = vmatpush1.bf16.xpose.msra.mxu0 %v1672
        %2252 = vmatprep.subr.bf16.mxu0 0
        %2253 = vmatpush1.bf16.xpose.msra.mxu0 0
        %2254 = vmatprep.subr.bf16.mxu0 0
        %2255 = vmatpush1.bf16.xpose.msra.mxu0 0
        %2256 = vmatprep.subr.bf16.mxu0 0
        %2257 = vmatpush1.bf16.xpose.msra.mxu0 0
        %2258 = vmatprep.subr.bf16.mxu0 0
        %2259 = vmatpush1.bf16.xpose.msra.mxu0 0
        %2260 = vmatprep.subr.bf16.mxu0 0
        %2261 = vmatpush1.bf16.xpose.msra.mxu0 0
        %2262 = vmatprep.subr.bf16.mxu0 0
        %2263 = vmatpush1.bf16.xpose.msra.mxu0 0
        %2264 = vmatprep.subr.bf16.mxu0 0
        %2265 = vmatpush1.bf16.xpose.msra.mxu0 0
        %2266 = vmatprep.subr.bf16.mxu0 0
        %2267 = vmatpush1.bf16.xpose.msra.mxu0 0
        %2268 = vmatprep.subr.bf16.mxu0 0
        %2269 = vmatpush1.bf16.xpose.msra.mxu0 0
        %2270 = vmatprep.subr.bf16.mxu0 0
        %2271 = vmatpush1.bf16.xpose.msra.mxu0 0
        %2272 = vmatprep.subr.bf16.mxu0 0
        %2273 = vmatpush1.bf16.xpose.msra.mxu0 0
        %2274 = vmatprep.subr.bf16.mxu0 0
        %2275 = vmatpush1.bf16.xpose.msra.mxu0 0
        %2276 = vmatprep.mubr.bf16.mxu0 0
        %2277 = vmatmul.mubr.bf16.gmra.mrb[0].mxu0 %v1052
        %v2278 = vpop.f32.mrb[0].mxu0
        %v2279 = vadd.f32 0.0, %v2278
        %v2280 = vpop.f32.mrb[0].mxu0
        %v2281 = vpop.f32.mrb[0].mxu0
        %v2282 = vadd.f32 0.0, %v2281
        %v2283 = vpop.f32.mrb[0].mxu0
        %2284 = vmatprep.mubr.bf16.mxu0 0
        %2285 = vmatmul.mubr.bf16.gmra.mrb[0].mxu0 %v1060
        %v2286 = vpop.f32.mrb[0].mxu0
        %v2287 = vadd.f32 0.0, %v2286
        %v2288 = vpop.f32.mrb[0].mxu0
        %v2289 = vpop.f32.mrb[0].mxu0
        %v2290 = vadd.f32 0.0, %v2289
        %v2291 = vpop.f32.mrb[0].mxu0
        %2292 = vmatprep.mubr.bf16.mxu0 0
        %2293 = vmatmul.mubr.bf16.gmra.mrb[0].mxu0 %v1068
        %v2294 = vpop.f32.mrb[0].mxu0
        %v2295 = vadd.f32 0.0, %v2294
        %v2296 = vpop.f32.mrb[0].mxu0
        %v2297 = vpop.f32.mrb[0].mxu0
        %v2298 = vadd.f32 0.0, %v2297
        %v2299 = vpop.f32.mrb[0].mxu0
        %2300 = vmatprep.mubr.bf16.mxu0 0
        %2301 = vmatmul.mubr.bf16.gmra.mrb[0].mxu0 %v1076
        %v2302 = vpop.f32.mrb[0].mxu0
        %v2303 = vadd.f32 0.0, %v2302
        %v2304 = vpop.f32.mrb[0].mxu0
        %v2305 = vpop.f32.mrb[0].mxu0
        %v2306 = vadd.f32 0.0, %v2305
        %v2307 = vpop.f32.mrb[0].mxu0
        %2308 = vdwg.mxu0
        %vm2309 = vcmask 523264
        %v2310 = vsel %vm2309, %v2279, -inf
        %2311 = vmax.xlane.f32.xlu0 %v2310
        %v2312 = vpop.xlane.xlu0 %2311
        %v2313 = vsel %vm2309, %v2282, -inf
        %2314 = vmax.xlane.f32.xlu0 %v2313
        %v2315 = vpop.xlane.xlu0 %2314
        %v2316 = vsel %vm2309, %v2287, -inf
        %2317 = vmax.xlane.f32.xlu0 %v2316
        %v2318 = vpop.xlane.xlu0 %2317
        %v2319 = vsel %vm2309, %v2290, -inf
        %2320 = vmax.xlane.f32.xlu0 %v2319
        %v2321 = vpop.xlane.xlu0 %2320
        %v2322 = vsel %vm2309, %v2295, -inf
        %2323 = vmax.xlane.f32.xlu0 %v2322
        %v2324 = vpop.xlane.xlu0 %2323
        %v2325 = vsel %vm2309, %v2298, -inf
        %2326 = vmax.xlane.f32.xlu0 %v2325
        %v2327 = vpop.xlane.xlu0 %2326
        %v2328 = vsel %vm2309, %v2303, -inf
        %2329 = vmax.xlane.f32.xlu0 %v2328
        %v2330 = vpop.xlane.xlu0 %2329
        %v2331 = vsel %vm2309, %v2306, -inf
        %2332 = vmax.xlane.f32.xlu0 %v2331
        %v2333 = vpop.xlane.xlu0 %2332
        %v2334 = vsub.f32 %v2279, %v2312
        %v2335 = vsub.f32 %v2282, %v2315
        %v2336 = vsub.f32 %v2287, %v2318
        %v2337 = vsub.f32 %v2290, %v2321
        %v2338 = vsub.f32 %v2295, %v2324
        %v2339 = vsub.f32 %v2298, %v2327
        %v2340 = vsub.f32 %v2303, %v2330
        %v2341 = vsub.f32 %v2306, %v2333
        %v2342 = vmul.f32 %v2334, 1.442695
        %v2343 = vpow.pop %v2342
        %v2344 = vmul.f32 %v2335, 1.442695
        %v2345 = vpow.pop %v2344
        %v2346 = vmul.f32 %v2336, 1.442695
        %v2347 = vpow.pop %v2346
        %v2348 = vmul.f32 %v2337, 1.442695
        %v2349 = vpow.pop %v2348
        %v2350 = vmul.f32 %v2338, 1.442695
        %v2351 = vpow.pop %v2350
        %v2352 = vmul.f32 %v2339, 1.442695
        %v2353 = vpow.pop %v2352
        %v2354 = vmul.f32 %v2340, 1.442695
        %v2355 = vpow.pop %v2354
        %v2356 = vmul.f32 %v2341, 1.442695
        %v2357 = vpow.pop %v2356
        %v2358 = vsel %vm2309, %v2343, 0.0
        %2359 = vadd.xlane.f32.xlu0 %v2358
        %v2360 = vpop.xlane.xlu0 %2359
        %v2361 = vsel %vm2309, %v2345, 0.0
        %2362 = vadd.xlane.f32.xlu0 %v2361
        %v2363 = vpop.xlane.xlu0 %2362
        %v2364 = vsel %vm2309, %v2347, 0.0
        %2365 = vadd.xlane.f32.xlu0 %v2364
        %v2366 = vpop.xlane.xlu0 %2365
        %v2367 = vsel %vm2309, %v2349, 0.0
        %2368 = vadd.xlane.f32.xlu0 %v2367
        %v2369 = vpop.xlane.xlu0 %2368
        %v2370 = vsel %vm2309, %v2351, 0.0
        %2371 = vadd.xlane.f32.xlu0 %v2370
        %v2372 = vpop.xlane.xlu0 %2371
        %v2373 = vsel %vm2309, %v2353, 0.0
        %2374 = vadd.xlane.f32.xlu0 %v2373
        %v2375 = vpop.xlane.xlu0 %2374
        %v2376 = vsel %vm2309, %v2355, 0.0
        %2377 = vadd.xlane.f32.xlu0 %v2376
        %v2378 = vpop.xlane.xlu0 %2377
        %v2379 = vsel %vm2309, %v2357, 0.0
        %2380 = vadd.xlane.f32.xlu0 %v2379
        %v2381 = vpop.xlane.xlu0 %2380
        %v2382 = vpack.c.bf16 %v2345, %v2343
        %v2383 = vpack.c.bf16 %v2349, %v2347
        %v2384 = vpack.c.bf16 %v2353, %v2351
        %v2385 = vpack.c.bf16 %v2357, %v2355
        %v2387 = vsel %vm2309, %v2382, 0
        %v2390 = vsel %vm2309, %v2383, 0
        %v2393 = vsel %vm2309, %v2384, 0
        %v2396 = vsel %vm2309, %v2385, 0
        %2398 = vmatprep.subr.bf16.mxu0 0
        %2399 = vmatpush1.bf16.msra.mxu0 %v2212
        %2400 = vmatprep.subr.bf16.mxu0 0
        %2401 = vmatpush1.bf16.msra.mxu0 %v2220
        %2402 = vmatprep.subr.bf16.mxu0 0
        %2403 = vmatpush1.bf16.msra.mxu0 %v2228
        %2404 = vmatprep.subr.bf16.mxu0 0
        %2405 = vmatpush1.bf16.msra.mxu0 %v2236
        %2406 = vmatprep.subr.bf16.mxu0 0
        %2407 = vmatpush1.bf16.msra.mxu0 0
        %2408 = vmatprep.subr.bf16.mxu0 0
        %2409 = vmatpush1.bf16.msra.mxu0 0
        %2410 = vmatprep.subr.bf16.mxu0 0
        %2411 = vmatpush1.bf16.msra.mxu0 0
        %2412 = vmatprep.subr.bf16.mxu0 0
        %2413 = vmatpush1.bf16.msra.mxu0 0
        %2414 = vmatprep.subr.bf16.mxu0 0
        %2415 = vmatpush1.bf16.msra.mxu0 0
        %2416 = vmatprep.subr.bf16.mxu0 0
        %2417 = vmatpush1.bf16.msra.mxu0 0
        %2418 = vmatprep.subr.bf16.mxu0 0
        %2419 = vmatpush1.bf16.msra.mxu0 0
        %2420 = vmatprep.subr.bf16.mxu0 0
        %2421 = vmatpush1.bf16.msra.mxu0 0
        %2422 = vmatprep.subr.bf16.mxu0 0
        %2423 = vmatpush1.bf16.msra.mxu0 0
        %2424 = vmatprep.subr.bf16.mxu0 0
        %2425 = vmatpush1.bf16.msra.mxu0 0
        %2426 = vmatprep.subr.bf16.mxu0 0
        %2427 = vmatpush1.bf16.msra.mxu0 0
        %2428 = vmatprep.subr.bf16.mxu0 0
        %2429 = vmatpush1.bf16.msra.mxu0 0
        %2430 = vmatprep.mubr.bf16.mxu0 0
        %2431 = vmatmul.mubr.bf16.gmra.mrb[0].mxu0 %v2387
        %v2432 = vpop.f32.mrb[0].mxu0
        %v2433 = vadd.f32 0.0, %v2432
        %v2434 = vpop.f32.mrb[0].mxu0
        %v2435 = vpop.f32.mrb[0].mxu0
        %v2436 = vadd.f32 0.0, %v2435
        %v2437 = vpop.f32.mrb[0].mxu0
        %2438 = vmatprep.mubr.bf16.mxu0 0
        %2439 = vmatmul.mubr.bf16.gmra.mrb[0].mxu0 %v2390
        %v2440 = vpop.f32.mrb[0].mxu0
        %v2441 = vadd.f32 0.0, %v2440
        %v2442 = vpop.f32.mrb[0].mxu0
        %v2443 = vpop.f32.mrb[0].mxu0
        %v2444 = vadd.f32 0.0, %v2443
        %v2445 = vpop.f32.mrb[0].mxu0
        %2446 = vmatprep.mubr.bf16.mxu0 0
        %2447 = vmatmul.mubr.bf16.gmra.mrb[0].mxu0 %v2393
        %v2448 = vpop.f32.mrb[0].mxu0
        %v2449 = vadd.f32 0.0, %v2448
        %v2450 = vpop.f32.mrb[0].mxu0
        %v2451 = vpop.f32.mrb[0].mxu0
        %v2452 = vadd.f32 0.0, %v2451
        %v2453 = vpop.f32.mrb[0].mxu0
        %2454 = vmatprep.mubr.bf16.mxu0 0
        %2455 = vmatmul.mubr.bf16.gmra.mrb[0].mxu0 %v2396
        %v2456 = vpop.f32.mrb[0].mxu0
        %v2457 = vadd.f32 0.0, %v2456
        %v2458 = vpop.f32.mrb[0].mxu0
        %v2459 = vpop.f32.mrb[0].mxu0
        %v2460 = vadd.f32 0.0, %v2459
        %v2461 = vpop.f32.mrb[0].mxu0
        %2462 = vdwg.mxu0
        %v2463 = vrcp.pop %v2360
        %v2464 = vrcp.pop %v2363
        %v2465 = vrcp.pop %v2366
        %v2466 = vrcp.pop %v2369
        %v2467 = vrcp.pop %v2372
        %v2468 = vrcp.pop %v2375
        %v2469 = vrcp.pop %v2378
        %v2470 = vrcp.pop %v2381
        %v2471 = vmul.f32 %v2433, %v2463
        %v2472 = vmul.f32 %v2436, %v2464
        %v2473 = vmul.f32 %v2441, %v2465
        %v2474 = vmul.f32 %v2444, %v2466
        %v2475 = vmul.f32 %v2449, %v2467
        %v2476 = vmul.f32 %v2452, %v2468
        %v2477 = vmul.f32 %v2457, %v2469
        %v2478 = vmul.f32 %v2460, %v2470
        %v2479 = vpack.c.bf16 %v2472, %v2471
        %v2480 = vpack.c.bf16 %v2474, %v2473
        %v2481 = vpack.c.bf16 %v2476, %v2475
        %v2482 = vpack.c.bf16 %v2478, %v2477
        %2483 = vst [vmem:[#allocation2] sm:$0xff] %v2479
        %2484 = vst [vmem:[#allocation2 + $0x40] sm:$0xff] %v2480
        %2485 = vst [vmem:[#allocation2 + $0x80] sm:$0xff] %v2481
        %2486 = vst [vmem:[#allocation2 + $0xc0] sm:$0xff] %v2482
        %2487 = vmatprep.subr.bf16.mxu0 0
        %2488 = vmatpush1.bf16.xpose.msra.mxu0 %v1649
        %2489 = vmatprep.subr.bf16.mxu0 0
        %2490 = vmatpush1.bf16.xpose.msra.mxu0 %v1657
        %2491 = vmatprep.subr.bf16.mxu0 0
        %2492 = vmatpush1.bf16.xpose.msra.mxu0 %v1665
        %2493 = vmatprep.subr.bf16.mxu0 0
        %2494 = vmatpush1.bf16.xpose.msra.mxu0 %v1673
        %2495 = vmatprep.subr.bf16.mxu0 0
        %2496 = vmatpush1.bf16.xpose.msra.mxu0 0
        %2497 = vmatprep.subr.bf16.mxu0 0
        %2498 = vmatpush1.bf16.xpose.msra.mxu0 0
        %2499 = vmatprep.subr.bf16.mxu0 0
        %2500 = vmatpush1.bf16.xpose.msra.mxu0 0
        %2501 = vmatprep.subr.bf16.mxu0 0
        %2502 = vmatpush1.bf16.xpose.msra.mxu0 0
        %2503 = vmatprep.subr.bf16.mxu0 0
        %2504 = vmatpush1.bf16.xpose.msra.mxu0 0
        %2505 = vmatprep.subr.bf16.mxu0 0
        %2506 = vmatpush1.bf16.xpose.msra.mxu0 0
        %2507 = vmatprep.subr.bf16.mxu0 0
        %2508 = vmatpush1.bf16.xpose.msra.mxu0 0
        %2509 = vmatprep.subr.bf16.mxu0 0
        %2510 = vmatpush1.bf16.xpose.msra.mxu0 0
        %2511 = vmatprep.subr.bf16.mxu0 0
        %2512 = vmatpush1.bf16.xpose.msra.mxu0 0
        %2513 = vmatprep.subr.bf16.mxu0 0
        %2514 = vmatpush1.bf16.xpose.msra.mxu0 0
        %2515 = vmatprep.subr.bf16.mxu0 0
        %2516 = vmatpush1.bf16.xpose.msra.mxu0 0
        %2517 = vmatprep.subr.bf16.mxu0 0
        %2518 = vmatpush1.bf16.xpose.msra.mxu0 0
        %2519 = vmatprep.mubr.bf16.mxu0 0
        %2520 = vmatmul.mubr.bf16.gmra.mrb[0].mxu0 %v1053
        %v2521 = vpop.f32.mrb[0].mxu0
        %v2522 = vadd.f32 0.0, %v2521
        %v2523 = vpop.f32.mrb[0].mxu0
        %v2524 = vpop.f32.mrb[0].mxu0
        %v2525 = vadd.f32 0.0, %v2524
        %v2526 = vpop.f32.mrb[0].mxu0
        %2527 = vmatprep.mubr.bf16.mxu0 0
        %2528 = vmatmul.mubr.bf16.gmra.mrb[0].mxu0 %v1061
        %v2529 = vpop.f32.mrb[0].mxu0
        %v2530 = vadd.f32 0.0, %v2529
        %v2531 = vpop.f32.mrb[0].mxu0
        %v2532 = vpop.f32.mrb[0].mxu0
        %v2533 = vadd.f32 0.0, %v2532
        %v2534 = vpop.f32.mrb[0].mxu0
        %2535 = vmatprep.mubr.bf16.mxu0 0
        %2536 = vmatmul.mubr.bf16.gmra.mrb[0].mxu0 %v1069
        %v2537 = vpop.f32.mrb[0].mxu0
        %v2538 = vadd.f32 0.0, %v2537
        %v2539 = vpop.f32.mrb[0].mxu0
        %v2540 = vpop.f32.mrb[0].mxu0
        %v2541 = vadd.f32 0.0, %v2540
        %v2542 = vpop.f32.mrb[0].mxu0
        %2543 = vmatprep.mubr.bf16.mxu0 0
        %2544 = vmatmul.mubr.bf16.gmra.mrb[0].mxu0 %v1077
        %v2545 = vpop.f32.mrb[0].mxu0
        %v2546 = vadd.f32 0.0, %v2545
        %v2547 = vpop.f32.mrb[0].mxu0
        %v2548 = vpop.f32.mrb[0].mxu0
        %v2549 = vadd.f32 0.0, %v2548
        %v2550 = vpop.f32.mrb[0].mxu0
        %2551 = vdwg.mxu0
        %v2552 = vsel %vm2309, %v2522, -inf
        %2553 = vmax.xlane.f32.xlu0 %v2552
        %v2554 = vpop.xlane.xlu0 %2553
        %v2555 = vsel %vm2309, %v2525, -inf
        %2556 = vmax.xlane.f32.xlu0 %v2555
        %v2557 = vpop.xlane.xlu0 %2556
        %v2558 = vsel %vm2309, %v2530, -inf
        %2559 = vmax.xlane.f32.xlu0 %v2558
        %v2560 = vpop.xlane.xlu0 %2559
        %v2561 = vsel %vm2309, %v2533, -inf
        %2562 = vmax.xlane.f32.xlu0 %v2561
        %v2563 = vpop.xlane.xlu0 %2562
        %v2564 = vsel %vm2309, %v2538, -inf
        %2565 = vmax.xlane.f32.xlu0 %v2564
        %v2566 = vpop.xlane.xlu0 %2565
        %v2567 = vsel %vm2309, %v2541, -inf
        %2568 = vmax.xlane.f32.xlu0 %v2567
        %v2569 = vpop.xlane.xlu0 %2568
        %v2570 = vsel %vm2309, %v2546, -inf
        %2571 = vmax.xlane.f32.xlu0 %v2570
        %v2572 = vpop.xlane.xlu0 %2571
        %v2573 = vsel %vm2309, %v2549, -inf
        %2574 = vmax.xlane.f32.xlu0 %v2573
        %v2575 = vpop.xlane.xlu0 %2574
        %v2576 = vsub.f32 %v2522, %v2554
        %v2577 = vsub.f32 %v2525, %v2557
        %v2578 = vsub.f32 %v2530, %v2560
        %v2579 = vsub.f32 %v2533, %v2563
        %v2580 = vsub.f32 %v2538, %v2566
        %v2581 = vsub.f32 %v2541, %v2569
        %v2582 = vsub.f32 %v2546, %v2572
        %v2583 = vsub.f32 %v2549, %v2575
        %v2584 = vmul.f32 %v2576, 1.442695
        %v2585 = vpow.pop %v2584
        %v2586 = vmul.f32 %v2577, 1.442695
        %v2587 = vpow.pop %v2586
        %v2588 = vmul.f32 %v2578, 1.442695
        %v2589 = vpow.pop %v2588
        %v2590 = vmul.f32 %v2579, 1.442695
        %v2591 = vpow.pop %v2590
        %v2592 = vmul.f32 %v2580, 1.442695
        %v2593 = vpow.pop %v2592
        %v2594 = vmul.f32 %v2581, 1.442695
        %v2595 = vpow.pop %v2594
        %v2596 = vmul.f32 %v2582, 1.442695
        %v2597 = vpow.pop %v2596
        %v2598 = vmul.f32 %v2583, 1.442695
        %v2599 = vpow.pop %v2598
        %v2600 = vsel %vm2309, %v2585, 0.0
        %2601 = vadd.xlane.f32.xlu0 %v2600
        %v2602 = vpop.xlane.xlu0 %2601
        %v2603 = vsel %vm2309, %v2587, 0.0
        %2604 = vadd.xlane.f32.xlu0 %v2603
        %v2605 = vpop.xlane.xlu0 %2604
        %v2606 = vsel %vm2309, %v2589, 0.0
        %2607 = vadd.xlane.f32.xlu0 %v2606
        %v2608 = vpop.xlane.xlu0 %2607
        %v2609 = vsel %vm2309, %v2591, 0.0
        %2610 = vadd.xlane.f32.xlu0 %v2609
        %v2611 = vpop.xlane.xlu0 %2610
        %v2612 = vsel %vm2309, %v2593, 0.0
        %2613 = vadd.xlane.f32.xlu0 %v2612
        %v2614 = vpop.xlane.xlu0 %2613
        %v2615 = vsel %vm2309, %v2595, 0.0
        %2616 = vadd.xlane.f32.xlu0 %v2615
        %v2617 = vpop.xlane.xlu0 %2616
        %v2618 = vsel %vm2309, %v2597, 0.0
        %2619 = vadd.xlane.f32.xlu0 %v2618
        %v2620 = vpop.xlane.xlu0 %2619
        %v2621 = vsel %vm2309, %v2599, 0.0
        %2622 = vadd.xlane.f32.xlu0 %v2621
        %v2623 = vpop.xlane.xlu0 %2622
        %v2624 = vpack.c.bf16 %v2587, %v2585
        %v2625 = vpack.c.bf16 %v2591, %v2589
        %v2626 = vpack.c.bf16 %v2595, %v2593
        %v2627 = vpack.c.bf16 %v2599, %v2597
        %v2629 = vsel %vm2309, %v2624, 0
        %v2632 = vsel %vm2309, %v2625, 0
        %v2635 = vsel %vm2309, %v2626, 0
        %v2638 = vsel %vm2309, %v2627, 0
        %2640 = vmatprep.subr.bf16.mxu0 0
        %2641 = vmatpush1.bf16.msra.mxu0 %v2213
        %2642 = vmatprep.subr.bf16.mxu0 0
        %2643 = vmatpush1.bf16.msra.mxu0 %v2221
        %2644 = vmatprep.subr.bf16.mxu0 0
        %2645 = vmatpush1.bf16.msra.mxu0 %v2229
        %2646 = vmatprep.subr.bf16.mxu0 0
        %2647 = vmatpush1.bf16.msra.mxu0 %v2237
        %2648 = vmatprep.subr.bf16.mxu0 0
        %2649 = vmatpush1.bf16.msra.mxu0 0
        %2650 = vmatprep.subr.bf16.mxu0 0
        %2651 = vmatpush1.bf16.msra.mxu0 0
        %2652 = vmatprep.subr.bf16.mxu0 0
        %2653 = vmatpush1.bf16.msra.mxu0 0
        %2654 = vmatprep.subr.bf16.mxu0 0
        %2655 = vmatpush1.bf16.msra.mxu0 0
        %2656 = vmatprep.subr.bf16.mxu0 0
        %2657 = vmatpush1.bf16.msra.mxu0 0
        %2658 = vmatprep.subr.bf16.mxu0 0
        %2659 = vmatpush1.bf16.msra.mxu0 0
        %2660 = vmatprep.subr.bf16.mxu0 0
        %2661 = vmatpush1.bf16.msra.mxu0 0
        %2662 = vmatprep.subr.bf16.mxu0 0
        %2663 = vmatpush1.bf16.msra.mxu0 0
        %2664 = vmatprep.subr.bf16.mxu0 0
        %2665 = vmatpush1.bf16.msra.mxu0 0
        %2666 = vmatprep.subr.bf16.mxu0 0
        %2667 = vmatpush1.bf16.msra.mxu0 0
        %2668 = vmatprep.subr.bf16.mxu0 0
        %2669 = vmatpush1.bf16.msra.mxu0 0
        %2670 = vmatprep.subr.bf16.mxu0 0
        %2671 = vmatpush1.bf16.msra.mxu0 0
        %2672 = vmatprep.mubr.bf16.mxu0 0
        %2673 = vmatmul.mubr.bf16.gmra.mrb[0].mxu0 %v2629
        %v2674 = vpop.f32.mrb[0].mxu0
        %v2675 = vadd.f32 0.0, %v2674
        %v2676 = vpop.f32.mrb[0].mxu0
        %v2677 = vpop.f32.mrb[0].mxu0
        %v2678 = vadd.f32 0.0, %v2677
        %v2679 = vpop.f32.mrb[0].mxu0
        %2680 = vmatprep.mubr.bf16.mxu0 0
        %2681 = vmatmul.mubr.bf16.gmra.mrb[0].mxu0 %v2632
        %v2682 = vpop.f32.mrb[0].mxu0
        %v2683 = vadd.f32 0.0, %v2682
        %v2684 = vpop.f32.mrb[0].mxu0
        %v2685 = vpop.f32.mrb[0].mxu0
        %v2686 = vadd.f32 0.0, %v2685
        %v2687 = vpop.f32.mrb[0].mxu0
        %2688 = vmatprep.mubr.bf16.mxu0 0
        %2689 = vmatmul.mubr.bf16.gmra.mrb[0].mxu0 %v2635
        %v2690 = vpop.f32.mrb[0].mxu0
        %v2691 = vadd.f32 0.0, %v2690
        %v2692 = vpop.f32.mrb[0].mxu0
        %v2693 = vpop.f32.mrb[0].mxu0
        %v2694 = vadd.f32 0.0, %v2693
        %v2695 = vpop.f32.mrb[0].mxu0
        %2696 = vmatprep.mubr.bf16.mxu0 0
        %2697 = vmatmul.mubr.bf16.gmra.mrb[0].mxu0 %v2638
        %v2698 = vpop.f32.mrb[0].mxu0
        %v2699 = vadd.f32 0.0, %v2698
        %v2700 = vpop.f32.mrb[0].mxu0
        %v2701 = vpop.f32.mrb[0].mxu0
        %v2702 = vadd.f32 0.0, %v2701
        %v2703 = vpop.f32.mrb[0].mxu0
        %2704 = vdwg.mxu0
        %v2705 = vrcp.pop %v2602
        %v2706 = vrcp.pop %v2605
        %v2707 = vrcp.pop %v2608
        %v2708 = vrcp.pop %v2611
        %v2709 = vrcp.pop %v2614
        %v2710 = vrcp.pop %v2617
        %v2711 = vrcp.pop %v2620
        %v2712 = vrcp.pop %v2623
        %v2713 = vmul.f32 %v2675, %v2705
        %v2714 = vmul.f32 %v2678, %v2706
        %v2715 = vmul.f32 %v2683, %v2707
        %v2716 = vmul.f32 %v2686, %v2708
        %v2717 = vmul.f32 %v2691, %v2709
        %v2718 = vmul.f32 %v2694, %v2710
        %v2719 = vmul.f32 %v2699, %v2711
        %v2720 = vmul.f32 %v2702, %v2712
        %v2721 = vpack.c.bf16 %v2714, %v2713
        %v2722 = vpack.c.bf16 %v2716, %v2715
        %v2723 = vpack.c.bf16 %v2718, %v2717
        %v2724 = vpack.c.bf16 %v2720, %v2719
        %2725 = vst [vmem:[#allocation2 + $0x8] sm:$0xff] %v2721
        %2726 = vst [vmem:[#allocation2 + $0x48] sm:$0xff] %v2722
        %2727 = vst [vmem:[#allocation2 + $0x88] sm:$0xff] %v2723
        %2728 = vst [vmem:[#allocation2 + $0xc8] sm:$0xff] %v2724
        %2729 = vmatprep.subr.bf16.mxu0 0
        %2730 = vmatpush1.bf16.xpose.msra.mxu0 %v1650
        %2731 = vmatprep.subr.bf16.mxu0 0
        %2732 = vmatpush1.bf16.xpose.msra.mxu0 %v1658
        %2733 = vmatprep.subr.bf16.mxu0 0
        %2734 = vmatpush1.bf16.xpose.msra.mxu0 %v1666
        %2735 = vmatprep.subr.bf16.mxu0 0
        %2736 = vmatpush1.bf16.xpose.msra.mxu0 %v1674
        %2737 = vmatprep.subr.bf16.mxu0 0
        %2738 = vmatpush1.bf16.xpose.msra.mxu0 0
        %2739 = vmatprep.subr.bf16.mxu0 0
        %2740 = vmatpush1.bf16.xpose.msra.mxu0 0
        %2741 = vmatprep.subr.bf16.mxu0 0
        %2742 = vmatpush1.bf16.xpose.msra.mxu0 0
        %2743 = vmatprep.subr.bf16.mxu0 0
        %2744 = vmatpush1.bf16.xpose.msra.mxu0 0
        %2745 = vmatprep.subr.bf16.mxu0 0
        %2746 = vmatpush1.bf16.xpose.msra.mxu0 0
        %2747 = vmatprep.subr.bf16.mxu0 0
        %2748 = vmatpush1.bf16.xpose.msra.mxu0 0
        %2749 = vmatprep.subr.bf16.mxu0 0
        %2750 = vmatpush1.bf16.xpose.msra.mxu0 0
        %2751 = vmatprep.subr.bf16.mxu0 0
        %2752 = vmatpush1.bf16.xpose.msra.mxu0 0
        %2753 = vmatprep.subr.bf16.mxu0 0
        %2754 = vmatpush1.bf16.xpose.msra.mxu0 0
        %2755 = vmatprep.subr.bf16.mxu0 0
        %2756 = vmatpush1.bf16.xpose.msra.mxu0 0
        %2757 = vmatprep.subr.bf16.mxu0 0
        %2758 = vmatpush1.bf16.xpose.msra.mxu0 0
        %2759 = vmatprep.subr.bf16.mxu0 0
        %2760 = vmatpush1.bf16.xpose.msra.mxu0 0
        %2761 = vmatprep.mubr.bf16.mxu0 0
        %2762 = vmatmul.mubr.bf16.gmra.mrb[0].mxu0 %v1054
        %v2763 = vpop.f32.mrb[0].mxu0
        %v2764 = vadd.f32 0.0, %v2763
        %v2765 = vpop.f32.mrb[0].mxu0
        %v2766 = vpop.f32.mrb[0].mxu0
        %v2767 = vadd.f32 0.0, %v2766
        %v2768 = vpop.f32.mrb[0].mxu0
        %2769 = vmatprep.mubr.bf16.mxu0 0
        %2770 = vmatmul.mubr.bf16.gmra.mrb[0].mxu0 %v1062
        %v2771 = vpop.f32.mrb[0].mxu0
        %v2772 = vadd.f32 0.0, %v2771
        %v2773 = vpop.f32.mrb[0].mxu0
        %v2774 = vpop.f32.mrb[0].mxu0
        %v2775 = vadd.f32 0.0, %v2774
        %v2776 = vpop.f32.mrb[0].mxu0
        %2777 = vmatprep.mubr.bf16.mxu0 0
        %2778 = vmatmul.mubr.bf16.gmra.mrb[0].mxu0 %v1070
        %v2779 = vpop.f32.mrb[0].mxu0
        %v2780 = vadd.f32 0.0, %v2779
        %v2781 = vpop.f32.mrb[0].mxu0
        %v2782 = vpop.f32.mrb[0].mxu0
        %v2783 = vadd.f32 0.0, %v2782
        %v2784 = vpop.f32.mrb[0].mxu0
        %2785 = vmatprep.mubr.bf16.mxu0 0
        %2786 = vmatmul.mubr.bf16.gmra.mrb[0].mxu0 %v1078
        %v2787 = vpop.f32.mrb[0].mxu0
        %v2788 = vadd.f32 0.0, %v2787
        %v2789 = vpop.f32.mrb[0].mxu0
        %v2790 = vpop.f32.mrb[0].mxu0
        %v2791 = vadd.f32 0.0, %v2790
        %v2792 = vpop.f32.mrb[0].mxu0
        %2793 = vdwg.mxu0
        %v2794 = vsel %vm2309, %v2764, -inf
        %2795 = vmax.xlane.f32.xlu0 %v2794
        %v2796 = vpop.xlane.xlu0 %2795
        %v2797 = vsel %vm2309, %v2767, -inf
        %2798 = vmax.xlane.f32.xlu0 %v2797
        %v2799 = vpop.xlane.xlu0 %2798
        %v2800 = vsel %vm2309, %v2772, -inf
        %2801 = vmax.xlane.f32.xlu0 %v2800
        %v2802 = vpop.xlane.xlu0 %2801
        %v2803 = vsel %vm2309, %v2775, -inf
        %2804 = vmax.xlane.f32.xlu0 %v2803
        %v2805 = vpop.xlane.xlu0 %2804
        %v2806 = vsel %vm2309, %v2780, -inf
        %2807 = vmax.xlane.f32.xlu0 %v2806
        %v2808 = vpop.xlane.xlu0 %2807
        %v2809 = vsel %vm2309, %v2783, -inf
        %2810 = vmax.xlane.f32.xlu0 %v2809
        %v2811 = vpop.xlane.xlu0 %2810
        %v2812 = vsel %vm2309, %v2788, -inf
        %2813 = vmax.xlane.f32.xlu0 %v2812
        %v2814 = vpop.xlane.xlu0 %2813
        %v2815 = vsel %vm2309, %v2791, -inf
        %2816 = vmax.xlane.f32.xlu0 %v2815
        %v2817 = vpop.xlane.xlu0 %2816
        %v2818 = vsub.f32 %v2764, %v2796
        %v2819 = vsub.f32 %v2767, %v2799
        %v2820 = vsub.f32 %v2772, %v2802
        %v2821 = vsub.f32 %v2775, %v2805
        %v2822 = vsub.f32 %v2780, %v2808
        %v2823 = vsub.f32 %v2783, %v2811
        %v2824 = vsub.f32 %v2788, %v2814
        %v2825 = vsub.f32 %v2791, %v2817
        %v2826 = vmul.f32 %v2818, 1.442695
        %v2827 = vpow.pop %v2826
        %v2828 = vmul.f32 %v2819, 1.442695
        %v2829 = vpow.pop %v2828
        %v2830 = vmul.f32 %v2820, 1.442695
        %v2831 = vpow.pop %v2830
        %v2832 = vmul.f32 %v2821, 1.442695
        %v2833 = vpow.pop %v2832
        %v2834 = vmul.f32 %v2822, 1.442695
        %v2835 = vpow.pop %v2834
        %v2836 = vmul.f32 %v2823, 1.442695
        %v2837 = vpow.pop %v2836
        %v2838 = vmul.f32 %v2824, 1.442695
        %v2839 = vpow.pop %v2838
        %v2840 = vmul.f32 %v2825, 1.442695
        %v2841 = vpow.pop %v2840
        %v2842 = vsel %vm2309, %v2827, 0.0
        %2843 = vadd.xlane.f32.xlu0 %v2842
        %v2844 = vpop.xlane.xlu0 %2843
        %v2845 = vsel %vm2309, %v2829, 0.0
        %2846 = vadd.xlane.f32.xlu0 %v2845
        %v2847 = vpop.xlane.xlu0 %2846
        %v2848 = vsel %vm2309, %v2831, 0.0
        %2849 = vadd.xlane.f32.xlu0 %v2848
        %v2850 = vpop.xlane.xlu0 %2849
        %v2851 = vsel %vm2309, %v2833, 0.0
        %2852 = vadd.xlane.f32.xlu0 %v2851
        %v2853 = vpop.xlane.xlu0 %2852
        %v2854 = vsel %vm2309, %v2835, 0.0
        %2855 = vadd.xlane.f32.xlu0 %v2854
        %v2856 = vpop.xlane.xlu0 %2855
        %v2857 = vsel %vm2309, %v2837, 0.0
        %2858 = vadd.xlane.f32.xlu0 %v2857
        %v2859 = vpop.xlane.xlu0 %2858
        %v2860 = vsel %vm2309, %v2839, 0.0
        %2861 = vadd.xlane.f32.xlu0 %v2860
        %v2862 = vpop.xlane.xlu0 %2861
        %v2863 = vsel %vm2309, %v2841, 0.0
        %2864 = vadd.xlane.f32.xlu0 %v2863
        %v2865 = vpop.xlane.xlu0 %2864
        %v2866 = vpack.c.bf16 %v2829, %v2827
        %v2867 = vpack.c.bf16 %v2833, %v2831
        %v2868 = vpack.c.bf16 %v2837, %v2835
        %v2869 = vpack.c.bf16 %v2841, %v2839
        %v2871 = vsel %vm2309, %v2866, 0
        %v2874 = vsel %vm2309, %v2867, 0
        %v2877 = vsel %vm2309, %v2868, 0
        %v2880 = vsel %vm2309, %v2869, 0
        %2882 = vmatprep.subr.bf16.mxu0 0
        %2883 = vmatpush1.bf16.msra.mxu0 %v2214
        %2884 = vmatprep.subr.bf16.mxu0 0
        %2885 = vmatpush1.bf16.msra.mxu0 %v2222
        %2886 = vmatprep.subr.bf16.mxu0 0
        %2887 = vmatpush1.bf16.msra.mxu0 %v2230
        %2888 = vmatprep.subr.bf16.mxu0 0
        %2889 = vmatpush1.bf16.msra.mxu0 %v2238
        %2890 = vmatprep.subr.bf16.mxu0 0
        %2891 = vmatpush1.bf16.msra.mxu0 0
        %2892 = vmatprep.subr.bf16.mxu0 0
        %2893 = vmatpush1.bf16.msra.mxu0 0
        %2894 = vmatprep.subr.bf16.mxu0 0
        %2895 = vmatpush1.bf16.msra.mxu0 0
        %2896 = vmatprep.subr.bf16.mxu0 0
        %2897 = vmatpush1.bf16.msra.mxu0 0
        %2898 = vmatprep.subr.bf16.mxu0 0
        %2899 = vmatpush1.bf16.msra.mxu0 0
        %2900 = vmatprep.subr.bf16.mxu0 0
        %2901 = vmatpush1.bf16.msra.mxu0 0
        %2902 = vmatprep.subr.bf16.mxu0 0
        %2903 = vmatpush1.bf16.msra.mxu0 0
        %2904 = vmatprep.subr.bf16.mxu0 0
        %2905 = vmatpush1.bf16.msra.mxu0 0
        %2906 = vmatprep.subr.bf16.mxu0 0
        %2907 = vmatpush1.bf16.msra.mxu0 0
        %2908 = vmatprep.subr.bf16.mxu0 0
        %2909 = vmatpush1.bf16.msra.mxu0 0
        %2910 = vmatprep.subr.bf16.mxu0 0
        %2911 = vmatpush1.bf16.msra.mxu0 0
        %2912 = vmatprep.subr.bf16.mxu0 0
        %2913 = vmatpush1.bf16.msra.mxu0 0
        %2914 = vmatprep.mubr.bf16.mxu0 0
        %2915 = vmatmul.mubr.bf16.gmra.mrb[0].mxu0 %v2871
        %v2916 = vpop.f32.mrb[0].mxu0
        %v2917 = vadd.f32 0.0, %v2916
        %v2918 = vpop.f32.mrb[0].mxu0
        %v2919 = vpop.f32.mrb[0].mxu0
        %v2920 = vadd.f32 0.0, %v2919
        %v2921 = vpop.f32.mrb[0].mxu0
        %2922 = vmatprep.mubr.bf16.mxu0 0
        %2923 = vmatmul.mubr.bf16.gmra.mrb[0].mxu0 %v2874
        %v2924 = vpop.f32.mrb[0].mxu0
        %v2925 = vadd.f32 0.0, %v2924
        %v2926 = vpop.f32.mrb[0].mxu0
        %v2927 = vpop.f32.mrb[0].mxu0
        %v2928 = vadd.f32 0.0, %v2927
        %v2929 = vpop.f32.mrb[0].mxu0
        %2930 = vmatprep.mubr.bf16.mxu0 0
        %2931 = vmatmul.mubr.bf16.gmra.mrb[0].mxu0 %v2877
        %v2932 = vpop.f32.mrb[0].mxu0
        %v2933 = vadd.f32 0.0, %v2932
        %v2934 = vpop.f32.mrb[0].mxu0
        %v2935 = vpop.f32.mrb[0].mxu0
        %v2936 = vadd.f32 0.0, %v2935
        %v2937 = vpop.f32.mrb[0].mxu0
        %2938 = vmatprep.mubr.bf16.mxu0 0
        %2939 = vmatmul.mubr.bf16.gmra.mrb[0].mxu0 %v2880
        %v2940 = vpop.f32.mrb[0].mxu0
        %v2941 = vadd.f32 0.0, %v2940
        %v2942 = vpop.f32.mrb[0].mxu0
        %v2943 = vpop.f32.mrb[0].mxu0
        %v2944 = vadd.f32 0.0, %v2943
        %v2945 = vpop.f32.mrb[0].mxu0
        %2946 = vdwg.mxu0
        %v2947 = vrcp.pop %v2844
        %v2948 = vrcp.pop %v2847
        %v2949 = vrcp.pop %v2850
        %v2950 = vrcp.pop %v2853
        %v2951 = vrcp.pop %v2856
        %v2952 = vrcp.pop %v2859
        %v2953 = vrcp.pop %v2862
        %v2954 = vrcp.pop %v2865
        %v2955 = vmul.f32 %v2917, %v2947
        %v2956 = vmul.f32 %v2920, %v2948
        %v2957 = vmul.f32 %v2925, %v2949
        %v2958 = vmul.f32 %v2928, %v2950
        %v2959 = vmul.f32 %v2933, %v2951
        %v2960 = vmul.f32 %v2936, %v2952
        %v2961 = vmul.f32 %v2941, %v2953
        %v2962 = vmul.f32 %v2944, %v2954
        %v2963 = vpack.c.bf16 %v2956, %v2955
        %v2964 = vpack.c.bf16 %v2958, %v2957
        %v2965 = vpack.c.bf16 %v2960, %v2959
        %v2966 = vpack.c.bf16 %v2962, %v2961
        %2967 = vst [vmem:[#allocation2 + $0x10] sm:$0xff] %v2963
        %2968 = vst [vmem:[#allocation2 + $0x50] sm:$0xff] %v2964
        %2969 = vst [vmem:[#allocation2 + $0x90] sm:$0xff] %v2965
        %2970 = vst [vmem:[#allocation2 + $0xd0] sm:$0xff] %v2966
        %2971 = vmatprep.subr.bf16.mxu0 0
        %2972 = vmatpush1.bf16.xpose.msra.mxu0 %v1651
        %2973 = vmatprep.subr.bf16.mxu0 0
        %2974 = vmatpush1.bf16.xpose.msra.mxu0 %v1659
        %2975 = vmatprep.subr.bf16.mxu0 0
        %2976 = vmatpush1.bf16.xpose.msra.mxu0 %v1667
        %2977 = vmatprep.subr.bf16.mxu0 0
        %2978 = vmatpush1.bf16.xpose.msra.mxu0 %v1675
        %2979 = vmatprep.subr.bf16.mxu0 0
        %2980 = vmatpush1.bf16.xpose.msra.mxu0 0
        %2981 = vmatprep.subr.bf16.mxu0 0
        %2982 = vmatpush1.bf16.xpose.msra.mxu0 0
        %2983 = vmatprep.subr.bf16.mxu0 0
        %2984 = vmatpush1.bf16.xpose.msra.mxu0 0
        %2985 = vmatprep.subr.bf16.mxu0 0
        %2986 = vmatpush1.bf16.xpose.msra.mxu0 0
        %2987 = vmatprep.subr.bf16.mxu0 0
        %2988 = vmatpush1.bf16.xpose.msra.mxu0 0
        %2989 = vmatprep.subr.bf16.mxu0 0
        %2990 = vmatpush1.bf16.xpose.msra.mxu0 0
        %2991 = vmatprep.subr.bf16.mxu0 0
        %2992 = vmatpush1.bf16.xpose.msra.mxu0 0
        %2993 = vmatprep.subr.bf16.mxu0 0
        %2994 = vmatpush1.bf16.xpose.msra.mxu0 0
        %2995 = vmatprep.subr.bf16.mxu0 0
        %2996 = vmatpush1.bf16.xpose.msra.mxu0 0
        %2997 = vmatprep.subr.bf16.mxu0 0
        %2998 = vmatpush1.bf16.xpose.msra.mxu0 0
        %2999 = vmatprep.subr.bf16.mxu0 0
        %3000 = vmatpush1.bf16.xpose.msra.mxu0 0
        %3001 = vmatprep.subr.bf16.mxu0 0
        %3002 = vmatpush1.bf16.xpose.msra.mxu0 0
        %3003 = vmatprep.mubr.bf16.mxu0 0
        %3004 = vmatmul.mubr.bf16.gmra.mrb[0].mxu0 %v1055
        %v3005 = vpop.f32.mrb[0].mxu0
        %v3006 = vadd.f32 0.0, %v3005
        %v3007 = vpop.f32.mrb[0].mxu0
        %v3008 = vpop.f32.mrb[0].mxu0
        %v3009 = vadd.f32 0.0, %v3008
        %v3010 = vpop.f32.mrb[0].mxu0
        %3011 = vmatprep.mubr.bf16.mxu0 0
        %3012 = vmatmul.mubr.bf16.gmra.mrb[0].mxu0 %v1063
        %v3013 = vpop.f32.mrb[0].mxu0
        %v3014 = vadd.f32 0.0, %v3013
        %v3015 = vpop.f32.mrb[0].mxu0
        %v3016 = vpop.f32.mrb[0].mxu0
        %v3017 = vadd.f32 0.0, %v3016
        %v3018 = vpop.f32.mrb[0].mxu0
        %3019 = vmatprep.mubr.bf16.mxu0 0
        %3020 = vmatmul.mubr.bf16.gmra.mrb[0].mxu0 %v1071
        %v3021 = vpop.f32.mrb[0].mxu0
        %v3022 = vadd.f32 0.0, %v3021
        %v3023 = vpop.f32.mrb[0].mxu0
        %v3024 = vpop.f32.mrb[0].mxu0
        %v3025 = vadd.f32 0.0, %v3024
        %v3026 = vpop.f32.mrb[0].mxu0
        %3027 = vmatprep.mubr.bf16.mxu0 0
        %3028 = vmatmul.mubr.bf16.gmra.mrb[0].mxu0 %v1079
        %v3029 = vpop.f32.mrb[0].mxu0
        %v3030 = vadd.f32 0.0, %v3029
        %v3031 = vpop.f32.mrb[0].mxu0
        %v3032 = vpop.f32.mrb[0].mxu0
        %v3033 = vadd.f32 0.0, %v3032
        %v3034 = vpop.f32.mrb[0].mxu0
        %3035 = vdwg.mxu0
        %v3036 = vsel %vm2309, %v3006, -inf
        %3037 = vmax.xlane.f32.xlu0 %v3036
        %v3038 = vpop.xlane.xlu0 %3037
        %v3039 = vsel %vm2309, %v3009, -inf
        %3040 = vmax.xlane.f32.xlu0 %v3039
        %v3041 = vpop.xlane.xlu0 %3040
        %v3042 = vsel %vm2309, %v3014, -inf
        %3043 = vmax.xlane.f32.xlu0 %v3042
        %v3044 = vpop.xlane.xlu0 %3043
        %v3045 = vsel %vm2309, %v3017, -inf
        %3046 = vmax.xlane.f32.xlu0 %v3045
        %v3047 = vpop.xlane.xlu0 %3046
        %v3048 = vsel %vm2309, %v3022, -inf
        %3049 = vmax.xlane.f32.xlu0 %v3048
        %v3050 = vpop.xlane.xlu0 %3049
        %v3051 = vsel %vm2309, %v3025, -inf
        %3052 = vmax.xlane.f32.xlu0 %v3051
        %v3053 = vpop.xlane.xlu0 %3052
        %v3054 = vsel %vm2309, %v3030, -inf
        %3055 = vmax.xlane.f32.xlu0 %v3054
        %v3056 = vpop.xlane.xlu0 %3055
        %v3057 = vsel %vm2309, %v3033, -inf
        %3058 = vmax.xlane.f32.xlu0 %v3057
        %v3059 = vpop.xlane.xlu0 %3058
        %v3060 = vsub.f32 %v3006, %v3038
        %v3061 = vsub.f32 %v3009, %v3041
        %v3062 = vsub.f32 %v3014, %v3044
        %v3063 = vsub.f32 %v3017, %v3047
        %v3064 = vsub.f32 %v3022, %v3050
        %v3065 = vsub.f32 %v3025, %v3053
        %v3066 = vsub.f32 %v3030, %v3056
        %v3067 = vsub.f32 %v3033, %v3059
        %v3068 = vmul.f32 %v3060, 1.442695
        %v3069 = vpow.pop %v3068
        %v3070 = vmul.f32 %v3061, 1.442695
        %v3071 = vpow.pop %v3070
        %v3072 = vmul.f32 %v3062, 1.442695
        %v3073 = vpow.pop %v3072
        %v3074 = vmul.f32 %v3063, 1.442695
        %v3075 = vpow.pop %v3074
        %v3076 = vmul.f32 %v3064, 1.442695
        %v3077 = vpow.pop %v3076
        %v3078 = vmul.f32 %v3065, 1.442695
        %v3079 = vpow.pop %v3078
        %v3080 = vmul.f32 %v3066, 1.442695
        %v3081 = vpow.pop %v3080
        %v3082 = vmul.f32 %v3067, 1.442695
        %v3083 = vpow.pop %v3082
        %v3084 = vsel %vm2309, %v3069, 0.0
        %3085 = vadd.xlane.f32.xlu0 %v3084
        %v3086 = vpop.xlane.xlu0 %3085
        %v3087 = vsel %vm2309, %v3071, 0.0
        %3088 = vadd.xlane.f32.xlu0 %v3087
        %v3089 = vpop.xlane.xlu0 %3088
        %v3090 = vsel %vm2309, %v3073, 0.0
        %3091 = vadd.xlane.f32.xlu0 %v3090
        %v3092 = vpop.xlane.xlu0 %3091
        %v3093 = vsel %vm2309, %v3075, 0.0
        %3094 = vadd.xlane.f32.xlu0 %v3093
        %v3095 = vpop.xlane.xlu0 %3094
        %v3096 = vsel %vm2309, %v3077, 0.0
        %3097 = vadd.xlane.f32.xlu0 %v3096
        %v3098 = vpop.xlane.xlu0 %3097
        %v3099 = vsel %vm2309, %v3079, 0.0
        %3100 = vadd.xlane.f32.xlu0 %v3099
        %v3101 = vpop.xlane.xlu0 %3100
        %v3102 = vsel %vm2309, %v3081, 0.0
        %3103 = vadd.xlane.f32.xlu0 %v3102
        %v3104 = vpop.xlane.xlu0 %3103
        %v3105 = vsel %vm2309, %v3083, 0.0
        %3106 = vadd.xlane.f32.xlu0 %v3105
        %v3107 = vpop.xlane.xlu0 %3106
        %v3108 = vpack.c.bf16 %v3071, %v3069
        %v3109 = vpack.c.bf16 %v3075, %v3073
        %v3110 = vpack.c.bf16 %v3079, %v3077
        %v3111 = vpack.c.bf16 %v3083, %v3081
        %v3113 = vsel %vm2309, %v3108, 0
        %v3116 = vsel %vm2309, %v3109, 0
        %v3119 = vsel %vm2309, %v3110, 0
        %v3122 = vsel %vm2309, %v3111, 0
        %3124 = vmatprep.subr.bf16.mxu0 0
        %3125 = vmatpush1.bf16.msra.mxu0 %v2215
        %3126 = vmatprep.subr.bf16.mxu0 0
        %3127 = vmatpush1.bf16.msra.mxu0 %v2223
        %3128 = vmatprep.subr.bf16.mxu0 0
        %3129 = vmatpush1.bf16.msra.mxu0 %v2231
        %3130 = vmatprep.subr.bf16.mxu0 0
        %3131 = vmatpush1.bf16.msra.mxu0 %v2239
        %3132 = vmatprep.subr.bf16.mxu0 0
        %3133 = vmatpush1.bf16.msra.mxu0 0
        %3134 = vmatprep.subr.bf16.mxu0 0
        %3135 = vmatpush1.bf16.msra.mxu0 0
        %3136 = vmatprep.subr.bf16.mxu0 0
        %3137 = vmatpush1.bf16.msra.mxu0 0
        %3138 = vmatprep.subr.bf16.mxu0 0
        %3139 = vmatpush1.bf16.msra.mxu0 0
        %3140 = vmatprep.subr.bf16.mxu0 0
        %3141 = vmatpush1.bf16.msra.mxu0 0
        %3142 = vmatprep.subr.bf16.mxu0 0
        %3143 = vmatpush1.bf16.msra.mxu0 0
        %3144 = vmatprep.subr.bf16.mxu0 0
        %3145 = vmatpush1.bf16.msra.mxu0 0
        %3146 = vmatprep.subr.bf16.mxu0 0
        %3147 = vmatpush1.bf16.msra.mxu0 0
        %3148 = vmatprep.subr.bf16.mxu0 0
        %3149 = vmatpush1.bf16.msra.mxu0 0
        %3150 = vmatprep.subr.bf16.mxu0 0
        %3151 = vmatpush1.bf16.msra.mxu0 0
        %3152 = vmatprep.subr.bf16.mxu0 0
        %3153 = vmatpush1.bf16.msra.mxu0 0
        %3154 = vmatprep.subr.bf16.mxu0 0
        %3155 = vmatpush1.bf16.msra.mxu0 0
        %3156 = vmatprep.mubr.bf16.mxu0 0
        %3157 = vmatmul.mubr.bf16.gmra.mrb[0].mxu0 %v3113
        %v3158 = vpop.f32.mrb[0].mxu0
        %v3159 = vadd.f32 0.0, %v3158
        %v3160 = vpop.f32.mrb[0].mxu0
        %v3161 = vpop.f32.mrb[0].mxu0
        %v3162 = vadd.f32 0.0, %v3161
        %v3163 = vpop.f32.mrb[0].mxu0
        %3164 = vmatprep.mubr.bf16.mxu0 0
        %3165 = vmatmul.mubr.bf16.gmra.mrb[0].mxu0 %v3116
        %v3166 = vpop.f32.mrb[0].mxu0
        %v3167 = vadd.f32 0.0, %v3166
        %v3168 = vpop.f32.mrb[0].mxu0
        %v3169 = vpop.f32.mrb[0].mxu0
        %v3170 = vadd.f32 0.0, %v3169
        %v3171 = vpop.f32.mrb[0].mxu0
        %3172 = vmatprep.mubr.bf16.mxu0 0
        %3173 = vmatmul.mubr.bf16.gmra.mrb[0].mxu0 %v3119
        %v3174 = vpop.f32.mrb[0].mxu0
        %v3175 = vadd.f32 0.0, %v3174
        %v3176 = vpop.f32.mrb[0].mxu0
        %v3177 = vpop.f32.mrb[0].mxu0
        %v3178 = vadd.f32 0.0, %v3177
        %v3179 = vpop.f32.mrb[0].mxu0
        %3180 = vmatprep.mubr.bf16.mxu0 0
        %3181 = vmatmul.mubr.bf16.gmra.mrb[0].mxu0 %v3122
        %v3182 = vpop.f32.mrb[0].mxu0
        %v3183 = vadd.f32 0.0, %v3182
        %v3184 = vpop.f32.mrb[0].mxu0
        %v3185 = vpop.f32.mrb[0].mxu0
        %v3186 = vadd.f32 0.0, %v3185
        %v3187 = vpop.f32.mrb[0].mxu0
        %3188 = vdwg.mxu0
        %v3189 = vrcp.pop %v3086
        %v3190 = vrcp.pop %v3089
        %v3191 = vrcp.pop %v3092
        %v3192 = vrcp.pop %v3095
        %v3193 = vrcp.pop %v3098
        %v3194 = vrcp.pop %v3101
        %v3195 = vrcp.pop %v3104
        %v3196 = vrcp.pop %v3107
        %v3197 = vmul.f32 %v3159, %v3189
        %v3198 = vmul.f32 %v3162, %v3190
        %v3199 = vmul.f32 %v3167, %v3191
        %v3200 = vmul.f32 %v3170, %v3192
        %v3201 = vmul.f32 %v3175, %v3193
        %v3202 = vmul.f32 %v3178, %v3194
        %v3203 = vmul.f32 %v3183, %v3195
        %v3204 = vmul.f32 %v3186, %v3196
        %v3205 = vpack.c.bf16 %v3198, %v3197
        %v3206 = vpack.c.bf16 %v3200, %v3199
        %v3207 = vpack.c.bf16 %v3202, %v3201
        %v3208 = vpack.c.bf16 %v3204, %v3203
        %3209 = vst [vmem:[#allocation2 + $0x18] sm:$0xff] %v3205
        %3210 = vst [vmem:[#allocation2 + $0x58] sm:$0xff] %v3206
        %3211 = vst [vmem:[#allocation2 + $0x98] sm:$0xff] %v3207
        %3212 = vst [vmem:[#allocation2 + $0xd8] sm:$0xff] %v3208
        %3213 = vmatprep.subr.bf16.mxu0 0
        %3214 = vmatpush1.bf16.xpose.msra.mxu0 %v1652
        %3215 = vmatprep.subr.bf16.mxu0 0
        %3216 = vmatpush1.bf16.xpose.msra.mxu0 %v1660
        %3217 = vmatprep.subr.bf16.mxu0 0
        %3218 = vmatpush1.bf16.xpose.msra.mxu0 %v1668
        %3219 = vmatprep.subr.bf16.mxu0 0
        %3220 = vmatpush1.bf16.xpose.msra.mxu0 %v1676
        %3221 = vmatprep.subr.bf16.mxu0 0
        %3222 = vmatpush1.bf16.xpose.msra.mxu0 0
        %3223 = vmatprep.subr.bf16.mxu0 0
        %3224 = vmatpush1.bf16.xpose.msra.mxu0 0
        %3225 = vmatprep.subr.bf16.mxu0 0
        %3226 = vmatpush1.bf16.xpose.msra.mxu0 0
        %3227 = vmatprep.subr.bf16.mxu0 0
        %3228 = vmatpush1.bf16.xpose.msra.mxu0 0
        %3229 = vmatprep.subr.bf16.mxu0 0
        %3230 = vmatpush1.bf16.xpose.msra.mxu0 0
        %3231 = vmatprep.subr.bf16.mxu0 0
        %3232 = vmatpush1.bf16.xpose.msra.mxu0 0
        %3233 = vmatprep.subr.bf16.mxu0 0
        %3234 = vmatpush1.bf16.xpose.msra.mxu0 0
        %3235 = vmatprep.subr.bf16.mxu0 0
        %3236 = vmatpush1.bf16.xpose.msra.mxu0 0
        %3237 = vmatprep.subr.bf16.mxu0 0
        %3238 = vmatpush1.bf16.xpose.msra.mxu0 0
        %3239 = vmatprep.subr.bf16.mxu0 0
        %3240 = vmatpush1.bf16.xpose.msra.mxu0 0
        %3241 = vmatprep.subr.bf16.mxu0 0
        %3242 = vmatpush1.bf16.xpose.msra.mxu0 0
        %3243 = vmatprep.subr.bf16.mxu0 0
        %3244 = vmatpush1.bf16.xpose.msra.mxu0 0
        %3245 = vmatprep.mubr.bf16.mxu0 0
        %3246 = vmatmul.mubr.bf16.gmra.mrb[0].mxu0 %v1056
        %v3247 = vpop.f32.mrb[0].mxu0
        %v3248 = vadd.f32 0.0, %v3247
        %v3249 = vpop.f32.mrb[0].mxu0
        %v3250 = vpop.f32.mrb[0].mxu0
        %v3251 = vadd.f32 0.0, %v3250
        %v3252 = vpop.f32.mrb[0].mxu0
        %3253 = vmatprep.mubr.bf16.mxu0 0
        %3254 = vmatmul.mubr.bf16.gmra.mrb[0].mxu0 %v1064
        %v3255 = vpop.f32.mrb[0].mxu0
        %v3256 = vadd.f32 0.0, %v3255
        %v3257 = vpop.f32.mrb[0].mxu0
        %v3258 = vpop.f32.mrb[0].mxu0
        %v3259 = vadd.f32 0.0, %v3258
        %v3260 = vpop.f32.mrb[0].mxu0
        %3261 = vmatprep.mubr.bf16.mxu0 0
        %3262 = vmatmul.mubr.bf16.gmra.mrb[0].mxu0 %v1072
        %v3263 = vpop.f32.mrb[0].mxu0
        %v3264 = vadd.f32 0.0, %v3263
        %v3265 = vpop.f32.mrb[0].mxu0
        %v3266 = vpop.f32.mrb[0].mxu0
        %v3267 = vadd.f32 0.0, %v3266
        %v3268 = vpop.f32.mrb[0].mxu0
        %3269 = vmatprep.mubr.bf16.mxu0 0
        %3270 = vmatmul.mubr.bf16.gmra.mrb[0].mxu0 %v1080
        %v3271 = vpop.f32.mrb[0].mxu0
        %v3272 = vadd.f32 0.0, %v3271
        %v3273 = vpop.f32.mrb[0].mxu0
        %v3274 = vpop.f32.mrb[0].mxu0
        %v3275 = vadd.f32 0.0, %v3274
        %v3276 = vpop.f32.mrb[0].mxu0
        %3277 = vdwg.mxu0
        %v3278 = vsel %vm2309, %v3248, -inf
        %3279 = vmax.xlane.f32.xlu0 %v3278
        %v3280 = vpop.xlane.xlu0 %3279
        %v3281 = vsel %vm2309, %v3251, -inf
        %3282 = vmax.xlane.f32.xlu0 %v3281
        %v3283 = vpop.xlane.xlu0 %3282
        %v3284 = vsel %vm2309, %v3256, -inf
        %3285 = vmax.xlane.f32.xlu0 %v3284
        %v3286 = vpop.xlane.xlu0 %3285
        %v3287 = vsel %vm2309, %v3259, -inf
        %3288 = vmax.xlane.f32.xlu0 %v3287
        %v3289 = vpop.xlane.xlu0 %3288
        %v3290 = vsel %vm2309, %v3264, -inf
        %3291 = vmax.xlane.f32.xlu0 %v3290
        %v3292 = vpop.xlane.xlu0 %3291
        %v3293 = vsel %vm2309, %v3267, -inf
        %3294 = vmax.xlane.f32.xlu0 %v3293
        %v3295 = vpop.xlane.xlu0 %3294
        %v3296 = vsel %vm2309, %v3272, -inf
        %3297 = vmax.xlane.f32.xlu0 %v3296
        %v3298 = vpop.xlane.xlu0 %3297
        %v3299 = vsel %vm2309, %v3275, -inf
        %3300 = vmax.xlane.f32.xlu0 %v3299
        %v3301 = vpop.xlane.xlu0 %3300
        %v3302 = vsub.f32 %v3248, %v3280
        %v3303 = vsub.f32 %v3251, %v3283
        %v3304 = vsub.f32 %v3256, %v3286
        %v3305 = vsub.f32 %v3259, %v3289
        %v3306 = vsub.f32 %v3264, %v3292
        %v3307 = vsub.f32 %v3267, %v3295
        %v3308 = vsub.f32 %v3272, %v3298
        %v3309 = vsub.f32 %v3275, %v3301
        %v3310 = vmul.f32 %v3302, 1.442695
        %v3311 = vpow.pop %v3310
        %v3312 = vmul.f32 %v3303, 1.442695
        %v3313 = vpow.pop %v3312
        %v3314 = vmul.f32 %v3304, 1.442695
        %v3315 = vpow.pop %v3314
        %v3316 = vmul.f32 %v3305, 1.442695
        %v3317 = vpow.pop %v3316
        %v3318 = vmul.f32 %v3306, 1.442695
        %v3319 = vpow.pop %v3318
        %v3320 = vmul.f32 %v3307, 1.442695
        %v3321 = vpow.pop %v3320
        %v3322 = vmul.f32 %v3308, 1.442695
        %v3323 = vpow.pop %v3322
        %v3324 = vmul.f32 %v3309, 1.442695
        %v3325 = vpow.pop %v3324
        %v3326 = vsel %vm2309, %v3311, 0.0
        %3327 = vadd.xlane.f32.xlu0 %v3326
        %v3328 = vpop.xlane.xlu0 %3327
        %v3329 = vsel %vm2309, %v3313, 0.0
        %3330 = vadd.xlane.f32.xlu0 %v3329
        %v3331 = vpop.xlane.xlu0 %3330
        %v3332 = vsel %vm2309, %v3315, 0.0
        %3333 = vadd.xlane.f32.xlu0 %v3332
        %v3334 = vpop.xlane.xlu0 %3333
        %v3335 = vsel %vm2309, %v3317, 0.0
        %3336 = vadd.xlane.f32.xlu0 %v3335
        %v3337 = vpop.xlane.xlu0 %3336
        %v3338 = vsel %vm2309, %v3319, 0.0
        %3339 = vadd.xlane.f32.xlu0 %v3338
        %v3340 = vpop.xlane.xlu0 %3339
        %v3341 = vsel %vm2309, %v3321, 0.0
        %3342 = vadd.xlane.f32.xlu0 %v3341
        %v3343 = vpop.xlane.xlu0 %3342
        %v3344 = vsel %vm2309, %v3323, 0.0
        %3345 = vadd.xlane.f32.xlu0 %v3344
        %v3346 = vpop.xlane.xlu0 %3345
        %v3347 = vsel %vm2309, %v3325, 0.0
        %3348 = vadd.xlane.f32.xlu0 %v3347
        %v3349 = vpop.xlane.xlu0 %3348
        %v3350 = vpack.c.bf16 %v3313, %v3311
        %v3351 = vpack.c.bf16 %v3317, %v3315
        %v3352 = vpack.c.bf16 %v3321, %v3319
        %v3353 = vpack.c.bf16 %v3325, %v3323
        %v3355 = vsel %vm2309, %v3350, 0
        %v3358 = vsel %vm2309, %v3351, 0
        %v3361 = vsel %vm2309, %v3352, 0
        %v3364 = vsel %vm2309, %v3353, 0
        %3366 = vmatprep.subr.bf16.mxu0 0
        %3367 = vmatpush1.bf16.msra.mxu0 %v2216
        %3368 = vmatprep.subr.bf16.mxu0 0
        %3369 = vmatpush1.bf16.msra.mxu0 %v2224
        %3370 = vmatprep.subr.bf16.mxu0 0
        %3371 = vmatpush1.bf16.msra.mxu0 %v2232
        %3372 = vmatprep.subr.bf16.mxu0 0
        %3373 = vmatpush1.bf16.msra.mxu0 %v2240
        %3374 = vmatprep.subr.bf16.mxu0 0
        %3375 = vmatpush1.bf16.msra.mxu0 0
        %3376 = vmatprep.subr.bf16.mxu0 0
        %3377 = vmatpush1.bf16.msra.mxu0 0
        %3378 = vmatprep.subr.bf16.mxu0 0
        %3379 = vmatpush1.bf16.msra.mxu0 0
        %3380 = vmatprep.subr.bf16.mxu0 0
        %3381 = vmatpush1.bf16.msra.mxu0 0
        %3382 = vmatprep.subr.bf16.mxu0 0
        %3383 = vmatpush1.bf16.msra.mxu0 0
        %3384 = vmatprep.subr.bf16.mxu0 0
        %3385 = vmatpush1.bf16.msra.mxu0 0
        %3386 = vmatprep.subr.bf16.mxu0 0
        %3387 = vmatpush1.bf16.msra.mxu0 0
        %3388 = vmatprep.subr.bf16.mxu0 0
        %3389 = vmatpush1.bf16.msra.mxu0 0
        %3390 = vmatprep.subr.bf16.mxu0 0
        %3391 = vmatpush1.bf16.msra.mxu0 0
        %3392 = vmatprep.subr.bf16.mxu0 0
        %3393 = vmatpush1.bf16.msra.mxu0 0
        %3394 = vmatprep.subr.bf16.mxu0 0
        %3395 = vmatpush1.bf16.msra.mxu0 0
        %3396 = vmatprep.subr.bf16.mxu0 0
        %3397 = vmatpush1.bf16.msra.mxu0 0
        %3398 = vmatprep.mubr.bf16.mxu0 0
        %3399 = vmatmul.mubr.bf16.gmra.mrb[0].mxu0 %v3355
        %v3400 = vpop.f32.mrb[0].mxu0
        %v3401 = vadd.f32 0.0, %v3400
        %v3402 = vpop.f32.mrb[0].mxu0
        %v3403 = vpop.f32.mrb[0].mxu0
        %v3404 = vadd.f32 0.0, %v3403
        %v3405 = vpop.f32.mrb[0].mxu0
        %3406 = vmatprep.mubr.bf16.mxu0 0
        %3407 = vmatmul.mubr.bf16.gmra.mrb[0].mxu0 %v3358
        %v3408 = vpop.f32.mrb[0].mxu0
        %v3409 = vadd.f32 0.0, %v3408
        %v3410 = vpop.f32.mrb[0].mxu0
        %v3411 = vpop.f32.mrb[0].mxu0
        %v3412 = vadd.f32 0.0, %v3411
        %v3413 = vpop.f32.mrb[0].mxu0
        %3414 = vmatprep.mubr.bf16.mxu0 0
        %3415 = vmatmul.mubr.bf16.gmra.mrb[0].mxu0 %v3361
        %v3416 = vpop.f32.mrb[0].mxu0
        %v3417 = vadd.f32 0.0, %v3416
        %v3418 = vpop.f32.mrb[0].mxu0
        %v3419 = vpop.f32.mrb[0].mxu0
        %v3420 = vadd.f32 0.0, %v3419
        %v3421 = vpop.f32.mrb[0].mxu0
        %3422 = vmatprep.mubr.bf16.mxu0 0
        %3423 = vmatmul.mubr.bf16.gmra.mrb[0].mxu0 %v3364
        %v3424 = vpop.f32.mrb[0].mxu0
        %v3425 = vadd.f32 0.0, %v3424
        %v3426 = vpop.f32.mrb[0].mxu0
        %v3427 = vpop.f32.mrb[0].mxu0
        %v3428 = vadd.f32 0.0, %v3427
        %v3429 = vpop.f32.mrb[0].mxu0
        %3430 = vdwg.mxu0
        %v3431 = vrcp.pop %v3328
        %v3432 = vrcp.pop %v3331
        %v3433 = vrcp.pop %v3334
        %v3434 = vrcp.pop %v3337
        %v3435 = vrcp.pop %v3340
        %v3436 = vrcp.pop %v3343
        %v3437 = vrcp.pop %v3346
        %v3438 = vrcp.pop %v3349
        %v3439 = vmul.f32 %v3401, %v3431
        %v3440 = vmul.f32 %v3404, %v3432
        %v3441 = vmul.f32 %v3409, %v3433
        %v3442 = vmul.f32 %v3412, %v3434
        %v3443 = vmul.f32 %v3417, %v3435
        %v3444 = vmul.f32 %v3420, %v3436
        %v3445 = vmul.f32 %v3425, %v3437
        %v3446 = vmul.f32 %v3428, %v3438
        %v3447 = vpack.c.bf16 %v3440, %v3439
        %v3448 = vpack.c.bf16 %v3442, %v3441
        %v3449 = vpack.c.bf16 %v3444, %v3443
        %v3450 = vpack.c.bf16 %v3446, %v3445
        %3451 = vst [vmem:[#allocation2 + $0x20] sm:$0xff] %v3447
        %3452 = vst [vmem:[#allocation2 + $0x60] sm:$0xff] %v3448
        %3453 = vst [vmem:[#allocation2 + $0xa0] sm:$0xff] %v3449
        %3454 = vst [vmem:[#allocation2 + $0xe0] sm:$0xff] %v3450
        %3455 = vmatprep.subr.bf16.mxu0 0
        %3456 = vmatpush1.bf16.xpose.msra.mxu0 %v1653
        %3457 = vmatprep.subr.bf16.mxu0 0
        %3458 = vmatpush1.bf16.xpose.msra.mxu0 %v1661
        %3459 = vmatprep.subr.bf16.mxu0 0
        %3460 = vmatpush1.bf16.xpose.msra.mxu0 %v1669
        %3461 = vmatprep.subr.bf16.mxu0 0
        %3462 = vmatpush1.bf16.xpose.msra.mxu0 %v1677
        %3463 = vmatprep.subr.bf16.mxu0 0
        %3464 = vmatpush1.bf16.xpose.msra.mxu0 0
        %3465 = vmatprep.subr.bf16.mxu0 0
        %3466 = vmatpush1.bf16.xpose.msra.mxu0 0
        %3467 = vmatprep.subr.bf16.mxu0 0
        %3468 = vmatpush1.bf16.xpose.msra.mxu0 0
        %3469 = vmatprep.subr.bf16.mxu0 0
        %3470 = vmatpush1.bf16.xpose.msra.mxu0 0
        %3471 = vmatprep.subr.bf16.mxu0 0
        %3472 = vmatpush1.bf16.xpose.msra.mxu0 0
        %3473 = vmatprep.subr.bf16.mxu0 0
        %3474 = vmatpush1.bf16.xpose.msra.mxu0 0
        %3475 = vmatprep.subr.bf16.mxu0 0
        %3476 = vmatpush1.bf16.xpose.msra.mxu0 0
        %3477 = vmatprep.subr.bf16.mxu0 0
        %3478 = vmatpush1.bf16.xpose.msra.mxu0 0
        %3479 = vmatprep.subr.bf16.mxu0 0
        %3480 = vmatpush1.bf16.xpose.msra.mxu0 0
        %3481 = vmatprep.subr.bf16.mxu0 0
        %3482 = vmatpush1.bf16.xpose.msra.mxu0 0
        %3483 = vmatprep.subr.bf16.mxu0 0
        %3484 = vmatpush1.bf16.xpose.msra.mxu0 0
        %3485 = vmatprep.subr.bf16.mxu0 0
        %3486 = vmatpush1.bf16.xpose.msra.mxu0 0
        %3487 = vmatprep.mubr.bf16.mxu0 0
        %3488 = vmatmul.mubr.bf16.gmra.mrb[0].mxu0 %v1057
        %v3489 = vpop.f32.mrb[0].mxu0
        %v3490 = vadd.f32 0.0, %v3489
        %v3491 = vpop.f32.mrb[0].mxu0
        %v3492 = vpop.f32.mrb[0].mxu0
        %v3493 = vadd.f32 0.0, %v3492
        %v3494 = vpop.f32.mrb[0].mxu0
        %3495 = vmatprep.mubr.bf16.mxu0 0
        %3496 = vmatmul.mubr.bf16.gmra.mrb[0].mxu0 %v1065
        %v3497 = vpop.f32.mrb[0].mxu0
        %v3498 = vadd.f32 0.0, %v3497
        %v3499 = vpop.f32.mrb[0].mxu0
        %v3500 = vpop.f32.mrb[0].mxu0
        %v3501 = vadd.f32 0.0, %v3500
        %v3502 = vpop.f32.mrb[0].mxu0
        %3503 = vmatprep.mubr.bf16.mxu0 0
        %3504 = vmatmul.mubr.bf16.gmra.mrb[0].mxu0 %v1073
        %v3505 = vpop.f32.mrb[0].mxu0
        %v3506 = vadd.f32 0.0, %v3505
        %v3507 = vpop.f32.mrb[0].mxu0
        %v3508 = vpop.f32.mrb[0].mxu0
        %v3509 = vadd.f32 0.0, %v3508
        %v3510 = vpop.f32.mrb[0].mxu0
        %3511 = vmatprep.mubr.bf16.mxu0 0
        %3512 = vmatmul.mubr.bf16.gmra.mrb[0].mxu0 %v1081
        %v3513 = vpop.f32.mrb[0].mxu0
        %v3514 = vadd.f32 0.0, %v3513
        %v3515 = vpop.f32.mrb[0].mxu0
        %v3516 = vpop.f32.mrb[0].mxu0
        %v3517 = vadd.f32 0.0, %v3516
        %v3518 = vpop.f32.mrb[0].mxu0
        %3519 = vdwg.mxu0
        %v3520 = vsel %vm2309, %v3490, -inf
        %3521 = vmax.xlane.f32.xlu0 %v3520
        %v3522 = vpop.xlane.xlu0 %3521
        %v3523 = vsel %vm2309, %v3493, -inf
        %3524 = vmax.xlane.f32.xlu0 %v3523
        %v3525 = vpop.xlane.xlu0 %3524
        %v3526 = vsel %vm2309, %v3498, -inf
        %3527 = vmax.xlane.f32.xlu0 %v3526
        %v3528 = vpop.xlane.xlu0 %3527
        %v3529 = vsel %vm2309, %v3501, -inf
        %3530 = vmax.xlane.f32.xlu0 %v3529
        %v3531 = vpop.xlane.xlu0 %3530
        %v3532 = vsel %vm2309, %v3506, -inf
        %3533 = vmax.xlane.f32.xlu0 %v3532
        %v3534 = vpop.xlane.xlu0 %3533
        %v3535 = vsel %vm2309, %v3509, -inf
        %3536 = vmax.xlane.f32.xlu0 %v3535
        %v3537 = vpop.xlane.xlu0 %3536
        %v3538 = vsel %vm2309, %v3514, -inf
        %3539 = vmax.xlane.f32.xlu0 %v3538
        %v3540 = vpop.xlane.xlu0 %3539
        %v3541 = vsel %vm2309, %v3517, -inf
        %3542 = vmax.xlane.f32.xlu0 %v3541
        %v3543 = vpop.xlane.xlu0 %3542
        %v3544 = vsub.f32 %v3490, %v3522
        %v3545 = vsub.f32 %v3493, %v3525
        %v3546 = vsub.f32 %v3498, %v3528
        %v3547 = vsub.f32 %v3501, %v3531
        %v3548 = vsub.f32 %v3506, %v3534
        %v3549 = vsub.f32 %v3509, %v3537
        %v3550 = vsub.f32 %v3514, %v3540
        %v3551 = vsub.f32 %v3517, %v3543
        %v3552 = vmul.f32 %v3544, 1.442695
        %v3553 = vpow.pop %v3552
        %v3554 = vmul.f32 %v3545, 1.442695
        %v3555 = vpow.pop %v3554
        %v3556 = vmul.f32 %v3546, 1.442695
        %v3557 = vpow.pop %v3556
        %v3558 = vmul.f32 %v3547, 1.442695
        %v3559 = vpow.pop %v3558
        %v3560 = vmul.f32 %v3548, 1.442695
        %v3561 = vpow.pop %v3560
        %v3562 = vmul.f32 %v3549, 1.442695
        %v3563 = vpow.pop %v3562
        %v3564 = vmul.f32 %v3550, 1.442695
        %v3565 = vpow.pop %v3564
        %v3566 = vmul.f32 %v3551, 1.442695
        %v3567 = vpow.pop %v3566
        %v3568 = vsel %vm2309, %v3553, 0.0
        %3569 = vadd.xlane.f32.xlu0 %v3568
        %v3570 = vpop.xlane.xlu0 %3569
        %v3571 = vsel %vm2309, %v3555, 0.0
        %3572 = vadd.xlane.f32.xlu0 %v3571
        %v3573 = vpop.xlane.xlu0 %3572
        %v3574 = vsel %vm2309, %v3557, 0.0
        %3575 = vadd.xlane.f32.xlu0 %v3574
        %v3576 = vpop.xlane.xlu0 %3575
        %v3577 = vsel %vm2309, %v3559, 0.0
        %3578 = vadd.xlane.f32.xlu0 %v3577
        %v3579 = vpop.xlane.xlu0 %3578
        %v3580 = vsel %vm2309, %v3561, 0.0
        %3581 = vadd.xlane.f32.xlu0 %v3580
        %v3582 = vpop.xlane.xlu0 %3581
        %v3583 = vsel %vm2309, %v3563, 0.0
        %3584 = vadd.xlane.f32.xlu0 %v3583
        %v3585 = vpop.xlane.xlu0 %3584
        %v3586 = vsel %vm2309, %v3565, 0.0
        %3587 = vadd.xlane.f32.xlu0 %v3586
        %v3588 = vpop.xlane.xlu0 %3587
        %v3589 = vsel %vm2309, %v3567, 0.0
        %3590 = vadd.xlane.f32.xlu0 %v3589
        %v3591 = vpop.xlane.xlu0 %3590
        %v3592 = vpack.c.bf16 %v3555, %v3553
        %v3593 = vpack.c.bf16 %v3559, %v3557
        %v3594 = vpack.c.bf16 %v3563, %v3561
        %v3595 = vpack.c.bf16 %v3567, %v3565
        %v3597 = vsel %vm2309, %v3592, 0
        %v3600 = vsel %vm2309, %v3593, 0
        %v3603 = vsel %vm2309, %v3594, 0
        %v3606 = vsel %vm2309, %v3595, 0
        %3608 = vmatprep.subr.bf16.mxu0 0
        %3609 = vmatpush1.bf16.msra.mxu0 %v2217
        %3610 = vmatprep.subr.bf16.mxu0 0
        %3611 = vmatpush1.bf16.msra.mxu0 %v2225
        %3612 = vmatprep.subr.bf16.mxu0 0
        %3613 = vmatpush1.bf16.msra.mxu0 %v2233
        %3614 = vmatprep.subr.bf16.mxu0 0
        %3615 = vmatpush1.bf16.msra.mxu0 %v2241
        %3616 = vmatprep.subr.bf16.mxu0 0
        %3617 = vmatpush1.bf16.msra.mxu0 0
        %3618 = vmatprep.subr.bf16.mxu0 0
        %3619 = vmatpush1.bf16.msra.mxu0 0
        %3620 = vmatprep.subr.bf16.mxu0 0
        %3621 = vmatpush1.bf16.msra.mxu0 0
        %3622 = vmatprep.subr.bf16.mxu0 0
        %3623 = vmatpush1.bf16.msra.mxu0 0
        %3624 = vmatprep.subr.bf16.mxu0 0
        %3625 = vmatpush1.bf16.msra.mxu0 0
        %3626 = vmatprep.subr.bf16.mxu0 0
        %3627 = vmatpush1.bf16.msra.mxu0 0
        %3628 = vmatprep.subr.bf16.mxu0 0
        %3629 = vmatpush1.bf16.msra.mxu0 0
        %3630 = vmatprep.subr.bf16.mxu0 0
        %3631 = vmatpush1.bf16.msra.mxu0 0
        %3632 = vmatprep.subr.bf16.mxu0 0
        %3633 = vmatpush1.bf16.msra.mxu0 0
        %3634 = vmatprep.subr.bf16.mxu0 0
        %3635 = vmatpush1.bf16.msra.mxu0 0
        %3636 = vmatprep.subr.bf16.mxu0 0
        %3637 = vmatpush1.bf16.msra.mxu0 0
        %3638 = vmatprep.subr.bf16.mxu0 0
        %3639 = vmatpush1.bf16.msra.mxu0 0
        %3640 = vmatprep.mubr.bf16.mxu0 0
        %3641 = vmatmul.mubr.bf16.gmra.mrb[0].mxu0 %v3597
        %v3642 = vpop.f32.mrb[0].mxu0
        %v3643 = vadd.f32 0.0, %v3642
        %v3644 = vpop.f32.mrb[0].mxu0
        %v3645 = vpop.f32.mrb[0].mxu0
        %v3646 = vadd.f32 0.0, %v3645
        %v3647 = vpop.f32.mrb[0].mxu0
        %3648 = vmatprep.mubr.bf16.mxu0 0
        %3649 = vmatmul.mubr.bf16.gmra.mrb[0].mxu0 %v3600
        %v3650 = vpop.f32.mrb[0].mxu0
        %v3651 = vadd.f32 0.0, %v3650
        %v3652 = vpop.f32.mrb[0].mxu0
        %v3653 = vpop.f32.mrb[0].mxu0
        %v3654 = vadd.f32 0.0, %v3653
        %v3655 = vpop.f32.mrb[0].mxu0
        %3656 = vmatprep.mubr.bf16.mxu0 0
        %3657 = vmatmul.mubr.bf16.gmra.mrb[0].mxu0 %v3603
        %v3658 = vpop.f32.mrb[0].mxu0
        %v3659 = vadd.f32 0.0, %v3658
        %v3660 = vpop.f32.mrb[0].mxu0
        %v3661 = vpop.f32.mrb[0].mxu0
        %v3662 = vadd.f32 0.0, %v3661
        %v3663 = vpop.f32.mrb[0].mxu0
        %3664 = vmatprep.mubr.bf16.mxu0 0
        %3665 = vmatmul.mubr.bf16.gmra.mrb[0].mxu0 %v3606
        %v3666 = vpop.f32.mrb[0].mxu0
        %v3667 = vadd.f32 0.0, %v3666
        %v3668 = vpop.f32.mrb[0].mxu0
        %v3669 = vpop.f32.mrb[0].mxu0
        %v3670 = vadd.f32 0.0, %v3669
        %v3671 = vpop.f32.mrb[0].mxu0
        %3672 = vdwg.mxu0
        %v3673 = vrcp.pop %v3570
        %v3674 = vrcp.pop %v3573
        %v3675 = vrcp.pop %v3576
        %v3676 = vrcp.pop %v3579
        %v3677 = vrcp.pop %v3582
        %v3678 = vrcp.pop %v3585
        %v3679 = vrcp.pop %v3588
        %v3680 = vrcp.pop %v3591
        %v3681 = vmul.f32 %v3643, %v3673
        %v3682 = vmul.f32 %v3646, %v3674
        %v3683 = vmul.f32 %v3651, %v3675
        %v3684 = vmul.f32 %v3654, %v3676
        %v3685 = vmul.f32 %v3659, %v3677
        %v3686 = vmul.f32 %v3662, %v3678
        %v3687 = vmul.f32 %v3667, %v3679
        %v3688 = vmul.f32 %v3670, %v3680
        %v3689 = vpack.c.bf16 %v3682, %v3681
        %v3690 = vpack.c.bf16 %v3684, %v3683
        %v3691 = vpack.c.bf16 %v3686, %v3685
        %v3692 = vpack.c.bf16 %v3688, %v3687
        %3693 = vst [vmem:[#allocation2 + $0x28] sm:$0xff] %v3689
        %3694 = vst [vmem:[#allocation2 + $0x68] sm:$0xff] %v3690
        %3695 = vst [vmem:[#allocation2 + $0xa8] sm:$0xff] %v3691
        %3696 = vst [vmem:[#allocation2 + $0xe8] sm:$0xff] %v3692
        %3697 = vmatprep.subr.bf16.mxu0 0
        %3698 = vmatpush1.bf16.xpose.msra.mxu0 %v1654
        %3699 = vmatprep.subr.bf16.mxu0 0
        %3700 = vmatpush1.bf16.xpose.msra.mxu0 %v1662
        %3701 = vmatprep.subr.bf16.mxu0 0
        %3702 = vmatpush1.bf16.xpose.msra.mxu0 %v1670
        %3703 = vmatprep.subr.bf16.mxu0 0
        %3704 = vmatpush1.bf16.xpose.msra.mxu0 %v1678
        %3705 = vmatprep.subr.bf16.mxu0 0
        %3706 = vmatpush1.bf16.xpose.msra.mxu0 0
        %3707 = vmatprep.subr.bf16.mxu0 0
        %3708 = vmatpush1.bf16.xpose.msra.mxu0 0
        %3709 = vmatprep.subr.bf16.mxu0 0
        %3710 = vmatpush1.bf16.xpose.msra.mxu0 0
        %3711 = vmatprep.subr.bf16.mxu0 0
        %3712 = vmatpush1.bf16.xpose.msra.mxu0 0
        %3713 = vmatprep.subr.bf16.mxu0 0
        %3714 = vmatpush1.bf16.xpose.msra.mxu0 0
        %3715 = vmatprep.subr.bf16.mxu0 0
        %3716 = vmatpush1.bf16.xpose.msra.mxu0 0
        %3717 = vmatprep.subr.bf16.mxu0 0
        %3718 = vmatpush1.bf16.xpose.msra.mxu0 0
        %3719 = vmatprep.subr.bf16.mxu0 0
        %3720 = vmatpush1.bf16.xpose.msra.mxu0 0
        %3721 = vmatprep.subr.bf16.mxu0 0
        %3722 = vmatpush1.bf16.xpose.msra.mxu0 0
        %3723 = vmatprep.subr.bf16.mxu0 0
        %3724 = vmatpush1.bf16.xpose.msra.mxu0 0
        %3725 = vmatprep.subr.bf16.mxu0 0
        %3726 = vmatpush1.bf16.xpose.msra.mxu0 0
        %3727 = vmatprep.subr.bf16.mxu0 0
        %3728 = vmatpush1.bf16.xpose.msra.mxu0 0
        %3729 = vmatprep.mubr.bf16.mxu0 0
        %3730 = vmatmul.mubr.bf16.gmra.mrb[0].mxu0 %v1058
        %v3731 = vpop.f32.mrb[0].mxu0
        %v3732 = vadd.f32 0.0, %v3731
        %v3733 = vpop.f32.mrb[0].mxu0
        %v3734 = vpop.f32.mrb[0].mxu0
        %v3735 = vadd.f32 0.0, %v3734
        %v3736 = vpop.f32.mrb[0].mxu0
        %3737 = vmatprep.mubr.bf16.mxu0 0
        %3738 = vmatmul.mubr.bf16.gmra.mrb[0].mxu0 %v1066
        %v3739 = vpop.f32.mrb[0].mxu0
        %v3740 = vadd.f32 0.0, %v3739
        %v3741 = vpop.f32.mrb[0].mxu0
        %v3742 = vpop.f32.mrb[0].mxu0
        %v3743 = vadd.f32 0.0, %v3742
        %v3744 = vpop.f32.mrb[0].mxu0
        %3745 = vmatprep.mubr.bf16.mxu0 0
        %3746 = vmatmul.mubr.bf16.gmra.mrb[0].mxu0 %v1074
        %v3747 = vpop.f32.mrb[0].mxu0
        %v3748 = vadd.f32 0.0, %v3747
        %v3749 = vpop.f32.mrb[0].mxu0
        %v3750 = vpop.f32.mrb[0].mxu0
        %v3751 = vadd.f32 0.0, %v3750
        %v3752 = vpop.f32.mrb[0].mxu0
        %3753 = vmatprep.mubr.bf16.mxu0 0
        %3754 = vmatmul.mubr.bf16.gmra.mrb[0].mxu0 %v1082
        %v3755 = vpop.f32.mrb[0].mxu0
        %v3756 = vadd.f32 0.0, %v3755
        %v3757 = vpop.f32.mrb[0].mxu0
        %v3758 = vpop.f32.mrb[0].mxu0
        %v3759 = vadd.f32 0.0, %v3758
        %v3760 = vpop.f32.mrb[0].mxu0
        %3761 = vdwg.mxu0
        %v3762 = vsel %vm2309, %v3732, -inf
        %3763 = vmax.xlane.f32.xlu0 %v3762
        %v3764 = vpop.xlane.xlu0 %3763
        %v3765 = vsel %vm2309, %v3735, -inf
        %3766 = vmax.xlane.f32.xlu0 %v3765
        %v3767 = vpop.xlane.xlu0 %3766
        %v3768 = vsel %vm2309, %v3740, -inf
        %3769 = vmax.xlane.f32.xlu0 %v3768
        %v3770 = vpop.xlane.xlu0 %3769
        %v3771 = vsel %vm2309, %v3743, -inf
        %3772 = vmax.xlane.f32.xlu0 %v3771
        %v3773 = vpop.xlane.xlu0 %3772
        %v3774 = vsel %vm2309, %v3748, -inf
        %3775 = vmax.xlane.f32.xlu0 %v3774
        %v3776 = vpop.xlane.xlu0 %3775
        %v3777 = vsel %vm2309, %v3751, -inf
        %3778 = vmax.xlane.f32.xlu0 %v3777
        %v3779 = vpop.xlane.xlu0 %3778
        %v3780 = vsel %vm2309, %v3756, -inf
        %3781 = vmax.xlane.f32.xlu0 %v3780
        %v3782 = vpop.xlane.xlu0 %3781
        %v3783 = vsel %vm2309, %v3759, -inf
        %3784 = vmax.xlane.f32.xlu0 %v3783
        %v3785 = vpop.xlane.xlu0 %3784
        %v3786 = vsub.f32 %v3732, %v3764
        %v3787 = vsub.f32 %v3735, %v3767
        %v3788 = vsub.f32 %v3740, %v3770
        %v3789 = vsub.f32 %v3743, %v3773
        %v3790 = vsub.f32 %v3748, %v3776
        %v3791 = vsub.f32 %v3751, %v3779
        %v3792 = vsub.f32 %v3756, %v3782
        %v3793 = vsub.f32 %v3759, %v3785
        %v3794 = vmul.f32 %v3786, 1.442695
        %v3795 = vpow.pop %v3794
        %v3796 = vmul.f32 %v3787, 1.442695
        %v3797 = vpow.pop %v3796
        %v3798 = vmul.f32 %v3788, 1.442695
        %v3799 = vpow.pop %v3798
        %v3800 = vmul.f32 %v3789, 1.442695
        %v3801 = vpow.pop %v3800
        %v3802 = vmul.f32 %v3790, 1.442695
        %v3803 = vpow.pop %v3802
        %v3804 = vmul.f32 %v3791, 1.442695
        %v3805 = vpow.pop %v3804
        %v3806 = vmul.f32 %v3792, 1.442695
        %v3807 = vpow.pop %v3806
        %v3808 = vmul.f32 %v3793, 1.442695
        %v3809 = vpow.pop %v3808
        %v3810 = vsel %vm2309, %v3795, 0.0
        %3811 = vadd.xlane.f32.xlu0 %v3810
        %v3812 = vpop.xlane.xlu0 %3811
        %v3813 = vsel %vm2309, %v3797, 0.0
        %3814 = vadd.xlane.f32.xlu0 %v3813
        %v3815 = vpop.xlane.xlu0 %3814
        %v3816 = vsel %vm2309, %v3799, 0.0
        %3817 = vadd.xlane.f32.xlu0 %v3816
        %v3818 = vpop.xlane.xlu0 %3817
        %v3819 = vsel %vm2309, %v3801, 0.0
        %3820 = vadd.xlane.f32.xlu0 %v3819
        %v3821 = vpop.xlane.xlu0 %3820
        %v3822 = vsel %vm2309, %v3803, 0.0
        %3823 = vadd.xlane.f32.xlu0 %v3822
        %v3824 = vpop.xlane.xlu0 %3823
        %v3825 = vsel %vm2309, %v3805, 0.0
        %3826 = vadd.xlane.f32.xlu0 %v3825
        %v3827 = vpop.xlane.xlu0 %3826
        %v3828 = vsel %vm2309, %v3807, 0.0
        %3829 = vadd.xlane.f32.xlu0 %v3828
        %v3830 = vpop.xlane.xlu0 %3829
        %v3831 = vsel %vm2309, %v3809, 0.0
        %3832 = vadd.xlane.f32.xlu0 %v3831
        %v3833 = vpop.xlane.xlu0 %3832
        %v3834 = vpack.c.bf16 %v3797, %v3795
        %v3835 = vpack.c.bf16 %v3801, %v3799
        %v3836 = vpack.c.bf16 %v3805, %v3803
        %v3837 = vpack.c.bf16 %v3809, %v3807
        %v3839 = vsel %vm2309, %v3834, 0
        %v3842 = vsel %vm2309, %v3835, 0
        %v3845 = vsel %vm2309, %v3836, 0
        %v3848 = vsel %vm2309, %v3837, 0
        %3850 = vmatprep.subr.bf16.mxu0 0
        %3851 = vmatpush1.bf16.msra.mxu0 %v2218
        %3852 = vmatprep.subr.bf16.mxu0 0
        %3853 = vmatpush1.bf16.msra.mxu0 %v2226
        %3854 = vmatprep.subr.bf16.mxu0 0
        %3855 = vmatpush1.bf16.msra.mxu0 %v2234
        %3856 = vmatprep.subr.bf16.mxu0 0
        %3857 = vmatpush1.bf16.msra.mxu0 %v2242
        %3858 = vmatprep.subr.bf16.mxu0 0
        %3859 = vmatpush1.bf16.msra.mxu0 0
        %3860 = vmatprep.subr.bf16.mxu0 0
        %3861 = vmatpush1.bf16.msra.mxu0 0
        %3862 = vmatprep.subr.bf16.mxu0 0
        %3863 = vmatpush1.bf16.msra.mxu0 0
        %3864 = vmatprep.subr.bf16.mxu0 0
        %3865 = vmatpush1.bf16.msra.mxu0 0
        %3866 = vmatprep.subr.bf16.mxu0 0
        %3867 = vmatpush1.bf16.msra.mxu0 0
        %3868 = vmatprep.subr.bf16.mxu0 0
        %3869 = vmatpush1.bf16.msra.mxu0 0
        %3870 = vmatprep.subr.bf16.mxu0 0
        %3871 = vmatpush1.bf16.msra.mxu0 0
        %3872 = vmatprep.subr.bf16.mxu0 0
        %3873 = vmatpush1.bf16.msra.mxu0 0
        %3874 = vmatprep.subr.bf16.mxu0 0
        %3875 = vmatpush1.bf16.msra.mxu0 0
        %3876 = vmatprep.subr.bf16.mxu0 0
        %3877 = vmatpush1.bf16.msra.mxu0 0
        %3878 = vmatprep.subr.bf16.mxu0 0
        %3879 = vmatpush1.bf16.msra.mxu0 0
        %3880 = vmatprep.subr.bf16.mxu0 0
        %3881 = vmatpush1.bf16.msra.mxu0 0
        %3882 = vmatprep.mubr.bf16.mxu0 0
        %3883 = vmatmul.mubr.bf16.gmra.mrb[0].mxu0 %v3839
        %v3884 = vpop.f32.mrb[0].mxu0
        %v3885 = vadd.f32 0.0, %v3884
        %v3886 = vpop.f32.mrb[0].mxu0
        %v3887 = vpop.f32.mrb[0].mxu0
        %v3888 = vadd.f32 0.0, %v3887
        %v3889 = vpop.f32.mrb[0].mxu0
        %3890 = vmatprep.mubr.bf16.mxu0 0
        %3891 = vmatmul.mubr.bf16.gmra.mrb[0].mxu0 %v3842
        %v3892 = vpop.f32.mrb[0].mxu0
        %v3893 = vadd.f32 0.0, %v3892
        %v3894 = vpop.f32.mrb[0].mxu0
        %v3895 = vpop.f32.mrb[0].mxu0
        %v3896 = vadd.f32 0.0, %v3895
        %v3897 = vpop.f32.mrb[0].mxu0
        %3898 = vmatprep.mubr.bf16.mxu0 0
        %3899 = vmatmul.mubr.bf16.gmra.mrb[0].mxu0 %v3845
        %v3900 = vpop.f32.mrb[0].mxu0
        %v3901 = vadd.f32 0.0, %v3900
        %v3902 = vpop.f32.mrb[0].mxu0
        %v3903 = vpop.f32.mrb[0].mxu0
        %v3904 = vadd.f32 0.0, %v3903
        %v3905 = vpop.f32.mrb[0].mxu0
        %3906 = vmatprep.mubr.bf16.mxu0 0
        %3907 = vmatmul.mubr.bf16.gmra.mrb[0].mxu0 %v3848
        %v3908 = vpop.f32.mrb[0].mxu0
        %v3909 = vadd.f32 0.0, %v3908
        %v3910 = vpop.f32.mrb[0].mxu0
        %v3911 = vpop.f32.mrb[0].mxu0
        %v3912 = vadd.f32 0.0, %v3911
        %v3913 = vpop.f32.mrb[0].mxu0
        %3914 = vdwg.mxu0
        %v3915 = vrcp.pop %v3812
        %v3916 = vrcp.pop %v3815
        %v3917 = vrcp.pop %v3818
        %v3918 = vrcp.pop %v3821
        %v3919 = vrcp.pop %v3824
        %v3920 = vrcp.pop %v3827
        %v3921 = vrcp.pop %v3830
        %v3922 = vrcp.pop %v3833
        %v3923 = vmul.f32 %v3885, %v3915
        %v3924 = vmul.f32 %v3888, %v3916
        %v3925 = vmul.f32 %v3893, %v3917
        %v3926 = vmul.f32 %v3896, %v3918
        %v3927 = vmul.f32 %v3901, %v3919
        %v3928 = vmul.f32 %v3904, %v3920
        %v3929 = vmul.f32 %v3909, %v3921
        %v3930 = vmul.f32 %v3912, %v3922
        %v3931 = vpack.c.bf16 %v3924, %v3923
        %v3932 = vpack.c.bf16 %v3926, %v3925
        %v3933 = vpack.c.bf16 %v3928, %v3927
        %v3934 = vpack.c.bf16 %v3930, %v3929
        %3935 = vst [vmem:[#allocation2 + $0x30] sm:$0xff] %v3931
        %3936 = vst [vmem:[#allocation2 + $0x70] sm:$0xff] %v3932
        %3937 = vst [vmem:[#allocation2 + $0xb0] sm:$0xff] %v3933
        %3938 = vst [vmem:[#allocation2 + $0xf0] sm:$0xff] %v3934
        %3939 = vmatprep.subr.bf16.mxu0 0
        %3940 = vmatpush1.bf16.xpose.msra.mxu0 %v1655
        %3941 = vmatprep.subr.bf16.mxu0 0
        %3942 = vmatpush1.bf16.xpose.msra.mxu0 %v1663
        %3943 = vmatprep.subr.bf16.mxu0 0
        %3944 = vmatpush1.bf16.xpose.msra.mxu0 %v1671
        %3945 = vmatprep.subr.bf16.mxu0 0
        %3946 = vmatpush1.bf16.xpose.msra.mxu0 %v1679
        %3947 = vmatprep.subr.bf16.mxu0 0
        %3948 = vmatpush1.bf16.xpose.msra.mxu0 0
        %3949 = vmatprep.subr.bf16.mxu0 0
        %3950 = vmatpush1.bf16.xpose.msra.mxu0 0
        %3951 = vmatprep.subr.bf16.mxu0 0
        %3952 = vmatpush1.bf16.xpose.msra.mxu0 0
        %3953 = vmatprep.subr.bf16.mxu0 0
        %3954 = vmatpush1.bf16.xpose.msra.mxu0 0
        %3955 = vmatprep.subr.bf16.mxu0 0
        %3956 = vmatpush1.bf16.xpose.msra.mxu0 0
        %3957 = vmatprep.subr.bf16.mxu0 0
        %3958 = vmatpush1.bf16.xpose.msra.mxu0 0
        %3959 = vmatprep.subr.bf16.mxu0 0
        %3960 = vmatpush1.bf16.xpose.msra.mxu0 0
        %3961 = vmatprep.subr.bf16.mxu0 0
        %3962 = vmatpush1.bf16.xpose.msra.mxu0 0
        %3963 = vmatprep.subr.bf16.mxu0 0
        %3964 = vmatpush1.bf16.xpose.msra.mxu0 0
        %3965 = vmatprep.subr.bf16.mxu0 0
        %3966 = vmatpush1.bf16.xpose.msra.mxu0 0
        %3967 = vmatprep.subr.bf16.mxu0 0
        %3968 = vmatpush1.bf16.xpose.msra.mxu0 0
        %3969 = vmatprep.subr.bf16.mxu0 0
        %3970 = vmatpush1.bf16.xpose.msra.mxu0 0
        %3971 = vmatprep.mubr.bf16.mxu0 0
        %3972 = vmatmul.mubr.bf16.gmra.mrb[0].mxu0 %v1059
        %v3973 = vpop.f32.mrb[0].mxu0
        %v3974 = vadd.f32 0.0, %v3973
        %v3975 = vpop.f32.mrb[0].mxu0
        %v3976 = vpop.f32.mrb[0].mxu0
        %v3977 = vadd.f32 0.0, %v3976
        %v3978 = vpop.f32.mrb[0].mxu0
        %3979 = vmatprep.mubr.bf16.mxu0 0
        %3980 = vmatmul.mubr.bf16.gmra.mrb[0].mxu0 %v1067
        %v3981 = vpop.f32.mrb[0].mxu0
        %v3982 = vadd.f32 0.0, %v3981
        %v3983 = vpop.f32.mrb[0].mxu0
        %v3984 = vpop.f32.mrb[0].mxu0
        %v3985 = vadd.f32 0.0, %v3984
        %v3986 = vpop.f32.mrb[0].mxu0
        %3987 = vmatprep.mubr.bf16.mxu0 0
        %3988 = vmatmul.mubr.bf16.gmra.mrb[0].mxu0 %v1075
        %v3989 = vpop.f32.mrb[0].mxu0
        %v3990 = vadd.f32 0.0, %v3989
        %v3991 = vpop.f32.mrb[0].mxu0
        %v3992 = vpop.f32.mrb[0].mxu0
        %v3993 = vadd.f32 0.0, %v3992
        %v3994 = vpop.f32.mrb[0].mxu0
        %3995 = vmatprep.mubr.bf16.mxu0 0
        %3996 = vmatmul.mubr.bf16.gmra.mrb[0].mxu0 %v1083
        %v3997 = vpop.f32.mrb[0].mxu0
        %v3998 = vadd.f32 0.0, %v3997
        %v3999 = vpop.f32.mrb[0].mxu0
        %v4000 = vpop.f32.mrb[0].mxu0
        %v4001 = vadd.f32 0.0, %v4000
        %v4002 = vpop.f32.mrb[0].mxu0
        %4003 = vdwg.mxu0
        %v4004 = vsel %vm2309, %v3974, -inf
        %4005 = vmax.xlane.f32.xlu0 %v4004
        %v4006 = vpop.xlane.xlu0 %4005
        %v4007 = vsel %vm2309, %v3977, -inf
        %4008 = vmax.xlane.f32.xlu0 %v4007
        %v4009 = vpop.xlane.xlu0 %4008
        %v4010 = vsel %vm2309, %v3982, -inf
        %4011 = vmax.xlane.f32.xlu0 %v4010
        %v4012 = vpop.xlane.xlu0 %4011
        %v4013 = vsel %vm2309, %v3985, -inf
        %4014 = vmax.xlane.f32.xlu0 %v4013
        %v4015 = vpop.xlane.xlu0 %4014
        %v4016 = vsel %vm2309, %v3990, -inf
        %4017 = vmax.xlane.f32.xlu0 %v4016
        %v4018 = vpop.xlane.xlu0 %4017
        %v4019 = vsel %vm2309, %v3993, -inf
        %4020 = vmax.xlane.f32.xlu0 %v4019
        %v4021 = vpop.xlane.xlu0 %4020
        %v4022 = vsel %vm2309, %v3998, -inf
        %4023 = vmax.xlane.f32.xlu0 %v4022
        %v4024 = vpop.xlane.xlu0 %4023
        %v4025 = vsel %vm2309, %v4001, -inf
        %4026 = vmax.xlane.f32.xlu0 %v4025
        %v4027 = vpop.xlane.xlu0 %4026
        %v4028 = vsub.f32 %v3974, %v4006
        %v4029 = vsub.f32 %v3977, %v4009
        %v4030 = vsub.f32 %v3982, %v4012
        %v4031 = vsub.f32 %v3985, %v4015
        %v4032 = vsub.f32 %v3990, %v4018
        %v4033 = vsub.f32 %v3993, %v4021
        %v4034 = vsub.f32 %v3998, %v4024
        %v4035 = vsub.f32 %v4001, %v4027
        %v4036 = vmul.f32 %v4028, 1.442695
        %v4037 = vpow.pop %v4036
        %v4038 = vmul.f32 %v4029, 1.442695
        %v4039 = vpow.pop %v4038
        %v4040 = vmul.f32 %v4030, 1.442695
        %v4041 = vpow.pop %v4040
        %v4042 = vmul.f32 %v4031, 1.442695
        %v4043 = vpow.pop %v4042
        %v4044 = vmul.f32 %v4032, 1.442695
        %v4045 = vpow.pop %v4044
        %v4046 = vmul.f32 %v4033, 1.442695
        %v4047 = vpow.pop %v4046
        %v4048 = vmul.f32 %v4034, 1.442695
        %v4049 = vpow.pop %v4048
        %v4050 = vmul.f32 %v4035, 1.442695
        %v4051 = vpow.pop %v4050
        %v4052 = vsel %vm2309, %v4037, 0.0
        %4053 = vadd.xlane.f32.xlu0 %v4052
        %v4054 = vpop.xlane.xlu0 %4053
        %v4055 = vsel %vm2309, %v4039, 0.0
        %4056 = vadd.xlane.f32.xlu0 %v4055
        %v4057 = vpop.xlane.xlu0 %4056
        %v4058 = vsel %vm2309, %v4041, 0.0
        %4059 = vadd.xlane.f32.xlu0 %v4058
        %v4060 = vpop.xlane.xlu0 %4059
        %v4061 = vsel %vm2309, %v4043, 0.0
        %4062 = vadd.xlane.f32.xlu0 %v4061
        %v4063 = vpop.xlane.xlu0 %4062
        %v4064 = vsel %vm2309, %v4045, 0.0
        %4065 = vadd.xlane.f32.xlu0 %v4064
        %v4066 = vpop.xlane.xlu0 %4065
        %v4067 = vsel %vm2309, %v4047, 0.0
        %4068 = vadd.xlane.f32.xlu0 %v4067
        %v4069 = vpop.xlane.xlu0 %4068
        %v4070 = vsel %vm2309, %v4049, 0.0
        %4071 = vadd.xlane.f32.xlu0 %v4070
        %v4072 = vpop.xlane.xlu0 %4071
        %v4073 = vsel %vm2309, %v4051, 0.0
        %4074 = vadd.xlane.f32.xlu0 %v4073
        %v4075 = vpop.xlane.xlu0 %4074
        %v4076 = vpack.c.bf16 %v4039, %v4037
        %v4077 = vpack.c.bf16 %v4043, %v4041
        %v4078 = vpack.c.bf16 %v4047, %v4045
        %v4079 = vpack.c.bf16 %v4051, %v4049
        %v4081 = vsel %vm2309, %v4076, 0
        %v4084 = vsel %vm2309, %v4077, 0
        %v4087 = vsel %vm2309, %v4078, 0
        %v4090 = vsel %vm2309, %v4079, 0
        %4092 = vmatprep.subr.bf16.mxu0 0
        %4093 = vmatpush1.bf16.msra.mxu0 %v2219
        %4094 = vmatprep.subr.bf16.mxu0 0
        %4095 = vmatpush1.bf16.msra.mxu0 %v2227
        %4096 = vmatprep.subr.bf16.mxu0 0
        %4097 = vmatpush1.bf16.msra.mxu0 %v2235
        %4098 = vmatprep.subr.bf16.mxu0 0
        %4099 = vmatpush1.bf16.msra.mxu0 %v2243
        %4100 = vmatprep.subr.bf16.mxu0 0
        %4101 = vmatpush1.bf16.msra.mxu0 0
        %4102 = vmatprep.subr.bf16.mxu0 0
        %4103 = vmatpush1.bf16.msra.mxu0 0
        %4104 = vmatprep.subr.bf16.mxu0 0
        %4105 = vmatpush1.bf16.msra.mxu0 0
        %4106 = vmatprep.subr.bf16.mxu0 0
        %4107 = vmatpush1.bf16.msra.mxu0 0
        %4108 = vmatprep.subr.bf16.mxu0 0
        %4109 = vmatpush1.bf16.msra.mxu0 0
        %4110 = vmatprep.subr.bf16.mxu0 0
        %4111 = vmatpush1.bf16.msra.mxu0 0
        %4112 = vmatprep.subr.bf16.mxu0 0
        %4113 = vmatpush1.bf16.msra.mxu0 0
        %4114 = vmatprep.subr.bf16.mxu0 0
        %4115 = vmatpush1.bf16.msra.mxu0 0
        %4116 = vmatprep.subr.bf16.mxu0 0
        %4117 = vmatpush1.bf16.msra.mxu0 0
        %4118 = vmatprep.subr.bf16.mxu0 0
        %4119 = vmatpush1.bf16.msra.mxu0 0
        %4120 = vmatprep.subr.bf16.mxu0 0
        %4121 = vmatpush1.bf16.msra.mxu0 0
        %4122 = vmatprep.subr.bf16.mxu0 0
        %4123 = vmatpush1.bf16.msra.mxu0 0
        %4124 = vmatprep.mubr.bf16.mxu0 0
        %4125 = vmatmul.mubr.bf16.gmra.mrb[0].mxu0 %v4081
        %v4126 = vpop.f32.mrb[0].mxu0
        %v4127 = vadd.f32 0.0, %v4126
        %v4128 = vpop.f32.mrb[0].mxu0
        %v4129 = vpop.f32.mrb[0].mxu0
        %v4130 = vadd.f32 0.0, %v4129
        %v4131 = vpop.f32.mrb[0].mxu0
        %4132 = vmatprep.mubr.bf16.mxu0 0
        %4133 = vmatmul.mubr.bf16.gmra.mrb[0].mxu0 %v4084
        %v4134 = vpop.f32.mrb[0].mxu0
        %v4135 = vadd.f32 0.0, %v4134
        %v4136 = vpop.f32.mrb[0].mxu0
        %v4137 = vpop.f32.mrb[0].mxu0
        %v4138 = vadd.f32 0.0, %v4137
        %v4139 = vpop.f32.mrb[0].mxu0
        %4140 = vmatprep.mubr.bf16.mxu0 0
        %4141 = vmatmul.mubr.bf16.gmra.mrb[0].mxu0 %v4087
        %v4142 = vpop.f32.mrb[0].mxu0
        %v4143 = vadd.f32 0.0, %v4142
        %v4144 = vpop.f32.mrb[0].mxu0
        %v4145 = vpop.f32.mrb[0].mxu0
        %v4146 = vadd.f32 0.0, %v4145
        %v4147 = vpop.f32.mrb[0].mxu0
        %4148 = vmatprep.mubr.bf16.mxu0 0
        %4149 = vmatmul.mubr.bf16.gmra.mrb[0].mxu0 %v4090
        %v4150 = vpop.f32.mrb[0].mxu0
        %v4151 = vadd.f32 0.0, %v4150
        %v4152 = vpop.f32.mrb[0].mxu0
        %v4153 = vpop.f32.mrb[0].mxu0
        %v4154 = vadd.f32 0.0, %v4153
        %v4155 = vpop.f32.mrb[0].mxu0
        %4156 = vdwg.mxu0
        %v4157 = vrcp.pop %v4054
        %v4158 = vrcp.pop %v4057
        %v4159 = vrcp.pop %v4060
        %v4160 = vrcp.pop %v4063
        %v4161 = vrcp.pop %v4066
        %v4162 = vrcp.pop %v4069
        %v4163 = vrcp.pop %v4072
        %v4164 = vrcp.pop %v4075
        %v4165 = vmul.f32 %v4127, %v4157
        %v4166 = vmul.f32 %v4130, %v4158
        %v4167 = vmul.f32 %v4135, %v4159
        %v4168 = vmul.f32 %v4138, %v4160
        %v4169 = vmul.f32 %v4143, %v4161
        %v4170 = vmul.f32 %v4146, %v4162
        %v4171 = vmul.f32 %v4151, %v4163
        %v4172 = vmul.f32 %v4154, %v4164
        %v4173 = vpack.c.bf16 %v4166, %v4165
        %v4174 = vpack.c.bf16 %v4168, %v4167
        %v4175 = vpack.c.bf16 %v4170, %v4169
        %v4176 = vpack.c.bf16 %v4172, %v4171
        %4177 = vst [vmem:[#allocation2 + $0x38] sm:$0xff] %v4173
        %4178 = vst [vmem:[#allocation2 + $0x78] sm:$0xff] %v4174
        %4179 = vst [vmem:[#allocation2 + $0xb8] sm:$0xff] %v4175
        %4180 = vst [vmem:[#allocation2 + $0xf8] sm:$0xff] %v4176
        %v4181 = vld [vmem:[#allocation2] sm:$0xff]
        %v4182 = vld [vmem:[#allocation2 + $0x8] sm:$0xff]
        %v4183 = vld [vmem:[#allocation2 + $0x10] sm:$0xff]
        %v4184 = vld [vmem:[#allocation2 + $0x18] sm:$0xff]
        %v4185 = vld [vmem:[#allocation2 + $0x20] sm:$0xff]
        %v4186 = vld [vmem:[#allocation2 + $0x28] sm:$0xff]
        %v4187 = vld [vmem:[#allocation2 + $0x30] sm:$0xff]
        %v4188 = vld [vmem:[#allocation2 + $0x38] sm:$0xff]
        %v4189 = vld [vmem:[#allocation2 + $0x40] sm:$0xff]
        %v4190 = vld [vmem:[#allocation2 + $0x48] sm:$0xff]
        %v4191 = vld [vmem:[#allocation2 + $0x50] sm:$0xff]
        %v4192 = vld [vmem:[#allocation2 + $0x58] sm:$0xff]
        %v4193 = vld [vmem:[#allocation2 + $0x60] sm:$0xff]
        %v4194 = vld [vmem:[#allocation2 + $0x68] sm:$0xff]
        %v4195 = vld [vmem:[#allocation2 + $0x70] sm:$0xff]
        %v4196 = vld [vmem:[#allocation2 + $0x78] sm:$0xff]
        %v4197 = vld [vmem:[#allocation2 + $0x80] sm:$0xff]
        %v4198 = vld [vmem:[#allocation2 + $0x88] sm:$0xff]
        %v4199 = vld [vmem:[#allocation2 + $0x90] sm:$0xff]
        %v4200 = vld [vmem:[#allocation2 + $0x98] sm:$0xff]
        %v4201 = vld [vmem:[#allocation2 + $0xa0] sm:$0xff]
        %v4202 = vld [vmem:[#allocation2 + $0xa8] sm:$0xff]
        %v4203 = vld [vmem:[#allocation2 + $0xb0] sm:$0xff]
        %v4204 = vld [vmem:[#allocation2 + $0xb8] sm:$0xff]
        %v4205 = vld [vmem:[#allocation2 + $0xc0] sm:$0xff]
        %v4206 = vld [vmem:[#allocation2 + $0xc8] sm:$0xff]
        %v4207 = vld [vmem:[#allocation2 + $0xd0] sm:$0xff]
        %v4208 = vld [vmem:[#allocation2 + $0xd8] sm:$0xff]
        %v4209 = vld [vmem:[#allocation2 + $0xe0] sm:$0xff]
        %v4210 = vld [vmem:[#allocation2 + $0xe8] sm:$0xff]
        %v4211 = vld [vmem:[#allocation2 + $0xf0] sm:$0xff]
        %v4212 = vld [vmem:[#allocation2 + $0xf8] sm:$0xff]
        %v4213 = vld [vmem:[#allocation12] sm:$0xf]
        %v4214 = vld [vmem:[#allocation12 + $0x4] sm:$0xf]
        %v4215 = vld [vmem:[#allocation12 + $0x8] sm:$0xf]
        %v4216 = vld [vmem:[#allocation12 + $0xc] sm:$0xf]
        %v4217 = vld [vmem:[#allocation12 + $0x10] sm:$0xf]
        %v4218 = vld [vmem:[#allocation12 + $0x14] sm:$0xf]
        %v4219 = vld [vmem:[#allocation12 + $0x18] sm:$0xf]
        %v4220 = vld [vmem:[#allocation12 + $0x1c] sm:$0xf]
        %v4221 = vld [vmem:[#allocation12 + $0x20] sm:$0xf]
        %v4222 = vld [vmem:[#allocation12 + $0x24] sm:$0xf]
        %v4223 = vld [vmem:[#allocation12 + $0x28] sm:$0xf]
        %v4224 = vld [vmem:[#allocation12 + $0x2c] sm:$0xf]
        %v4225 = vld [vmem:[#allocation12 + $0x30] sm:$0xf]
        %v4226 = vld [vmem:[#allocation12 + $0x34] sm:$0xf]
        %v4227 = vld [vmem:[#allocation12 + $0x38] sm:$0xf]
        %v4228 = vld [vmem:[#allocation12 + $0x3c] sm:$0xf]
        %v4229 = vld [vmem:[#allocation12 + $0x40] sm:$0xf]
        %v4230 = vld [vmem:[#allocation12 + $0x44] sm:$0xf]
        %v4231 = vld [vmem:[#allocation12 + $0x48] sm:$0xf]
        %v4232 = vld [vmem:[#allocation12 + $0x4c] sm:$0xf]
        %v4233 = vld [vmem:[#allocation12 + $0x50] sm:$0xf]
        %v4234 = vld [vmem:[#allocation12 + $0x54] sm:$0xf]
        %v4235 = vld [vmem:[#allocation12 + $0x58] sm:$0xf]
        %v4236 = vld [vmem:[#allocation12 + $0x5c] sm:$0xf]
        %v4237 = vld [vmem:[#allocation12 + $0x60] sm:$0xf]
        %v4238 = vld [vmem:[#allocation12 + $0x64] sm:$0xf]
        %v4239 = vld [vmem:[#allocation12 + $0x68] sm:$0xf]
        %v4240 = vld [vmem:[#allocation12 + $0x6c] sm:$0xf]
        %v4241 = vld [vmem:[#allocation12 + $0x70] sm:$0xf]
        %v4242 = vld [vmem:[#allocation12 + $0x74] sm:$0xf]
        %v4243 = vld [vmem:[#allocation12 + $0x78] sm:$0xf]
        %v4244 = vld [vmem:[#allocation12 + $0x7c] sm:$0xf]
        %v4245 = vld [vmem:[#allocation12 + $0x80] sm:$0xf]
        %v4246 = vld [vmem:[#allocation12 + $0x84] sm:$0xf]
        %v4247 = vld [vmem:[#allocation12 + $0x88] sm:$0xf]
        %v4248 = vld [vmem:[#allocation12 + $0x8c] sm:$0xf]
        %v4249 = vld [vmem:[#allocation12 + $0x90] sm:$0xf]
        %v4250 = vld [vmem:[#allocation12 + $0x94] sm:$0xf]
        %v4251 = vld [vmem:[#allocation12 + $0x98] sm:$0xf]
        %v4252 = vld [vmem:[#allocation12 + $0x9c] sm:$0xf]
        %v4253 = vld [vmem:[#allocation12 + $0xa0] sm:$0xf]
        %v4254 = vld [vmem:[#allocation12 + $0xa4] sm:$0xf]
        %v4255 = vld [vmem:[#allocation12 + $0xa8] sm:$0xf]
        %v4256 = vld [vmem:[#allocation12 + $0xac] sm:$0xf]
        %v4257 = vld [vmem:[#allocation12 + $0xb0] sm:$0xf]
        %v4258 = vld [vmem:[#allocation12 + $0xb4] sm:$0xf]
        %v4259 = vld [vmem:[#allocation12 + $0xb8] sm:$0xf]
        %v4260 = vld [vmem:[#allocation12 + $0xbc] sm:$0xf]
        %v4261 = vld [vmem:[#allocation12 + $0xc0] sm:$0xf]
        %v4262 = vld [vmem:[#allocation12 + $0xc4] sm:$0xf]
        %v4263 = vld [vmem:[#allocation12 + $0xc8] sm:$0xf]
        %v4264 = vld [vmem:[#allocation12 + $0xcc] sm:$0xf]
        %v4265 = vld [vmem:[#allocation12 + $0xd0] sm:$0xf]
        %v4266 = vld [vmem:[#allocation12 + $0xd4] sm:$0xf]
        %v4267 = vld [vmem:[#allocation12 + $0xd8] sm:$0xf]
        %v4268 = vld [vmem:[#allocation12 + $0xdc] sm:$0xf]
        %v4269 = vld [vmem:[#allocation12 + $0xe0] sm:$0xf]
        %v4270 = vld [vmem:[#allocation12 + $0xe4] sm:$0xf]
        %v4271 = vld [vmem:[#allocation12 + $0xe8] sm:$0xf]
        %v4272 = vld [vmem:[#allocation12 + $0xec] sm:$0xf]
        %v4273 = vld [vmem:[#allocation12 + $0xf0] sm:$0xf]
        %v4274 = vld [vmem:[#allocation12 + $0xf4] sm:$0xf]
        %v4275 = vld [vmem:[#allocation12 + $0xf8] sm:$0xf]
        %v4276 = vld [vmem:[#allocation12 + $0xfc] sm:$0xf]
        %v4277 = vld [vmem:[#allocation12 + $0x100] sm:$0xf]
        %v4278 = vld [vmem:[#allocation12 + $0x104] sm:$0xf]
        %v4279 = vld [vmem:[#allocation12 + $0x108] sm:$0xf]
        %v4280 = vld [vmem:[#allocation12 + $0x10c] sm:$0xf]
        %v4281 = vld [vmem:[#allocation12 + $0x110] sm:$0xf]
        %v4282 = vld [vmem:[#allocation12 + $0x114] sm:$0xf]
        %v4283 = vld [vmem:[#allocation12 + $0x118] sm:$0xf]
        %v4284 = vld [vmem:[#allocation12 + $0x11c] sm:$0xf]
        %v4285 = vld [vmem:[#allocation12 + $0x120] sm:$0xf]
        %v4286 = vld [vmem:[#allocation12 + $0x124] sm:$0xf]
        %v4287 = vld [vmem:[#allocation12 + $0x128] sm:$0xf]
        %v4288 = vld [vmem:[#allocation12 + $0x12c] sm:$0xf]
        %v4289 = vld [vmem:[#allocation12 + $0x130] sm:$0xf]
        %v4290 = vld [vmem:[#allocation12 + $0x134] sm:$0xf]
        %v4291 = vld [vmem:[#allocation12 + $0x138] sm:$0xf]
        %v4292 = vld [vmem:[#allocation12 + $0x13c] sm:$0xf]
        %v4293 = vld [vmem:[#allocation12 + $0x140] sm:$0xf]
        %v4294 = vld [vmem:[#allocation12 + $0x144] sm:$0xf]
        %v4295 = vld [vmem:[#allocation12 + $0x148] sm:$0xf]
        %v4296 = vld [vmem:[#allocation12 + $0x14c] sm:$0xf]
        %v4297 = vld [vmem:[#allocation12 + $0x150] sm:$0xf]
        %v4298 = vld [vmem:[#allocation12 + $0x154] sm:$0xf]
        %v4299 = vld [vmem:[#allocation12 + $0x158] sm:$0xf]
        %v4300 = vld [vmem:[#allocation12 + $0x15c] sm:$0xf]
        %v4301 = vld [vmem:[#allocation12 + $0x160] sm:$0xf]
        %v4302 = vld [vmem:[#allocation12 + $0x164] sm:$0xf]
        %v4303 = vld [vmem:[#allocation12 + $0x168] sm:$0xf]
        %v4304 = vld [vmem:[#allocation12 + $0x16c] sm:$0xf]
        %v4305 = vld [vmem:[#allocation12 + $0x170] sm:$0xf]
        %v4306 = vld [vmem:[#allocation12 + $0x174] sm:$0xf]
        %v4307 = vld [vmem:[#allocation12 + $0x178] sm:$0xf]
        %v4308 = vld [vmem:[#allocation12 + $0x17c] sm:$0xf]
        %v4309 = vld [vmem:[#allocation12 + $0x180] sm:$0xf]
        %v4310 = vld [vmem:[#allocation12 + $0x184] sm:$0xf]
        %v4311 = vld [vmem:[#allocation12 + $0x188] sm:$0xf]
        %v4312 = vld [vmem:[#allocation12 + $0x18c] sm:$0xf]
        %v4313 = vld [vmem:[#allocation12 + $0x190] sm:$0xf]
        %v4314 = vld [vmem:[#allocation12 + $0x194] sm:$0xf]
        %v4315 = vld [vmem:[#allocation12 + $0x198] sm:$0xf]
        %v4316 = vld [vmem:[#allocation12 + $0x19c] sm:$0xf]
        %v4317 = vld [vmem:[#allocation12 + $0x1a0] sm:$0xf]
        %v4318 = vld [vmem:[#allocation12 + $0x1a4] sm:$0xf]
        %v4319 = vld [vmem:[#allocation12 + $0x1a8] sm:$0xf]
        %v4320 = vld [vmem:[#allocation12 + $0x1ac] sm:$0xf]
        %v4321 = vld [vmem:[#allocation12 + $0x1b0] sm:$0xf]
        %v4322 = vld [vmem:[#allocation12 + $0x1b4] sm:$0xf]
        %v4323 = vld [vmem:[#allocation12 + $0x1b8] sm:$0xf]
        %v4324 = vld [vmem:[#allocation12 + $0x1bc] sm:$0xf]
        %v4325 = vld [vmem:[#allocation12 + $0x1c0] sm:$0xf]
        %v4326 = vld [vmem:[#allocation12 + $0x1c4] sm:$0xf]
        %v4327 = vld [vmem:[#allocation12 + $0x1c8] sm:$0xf]
        %v4328 = vld [vmem:[#allocation12 + $0x1cc] sm:$0xf]
        %v4329 = vld [vmem:[#allocation12 + $0x1d0] sm:$0xf]
        %v4330 = vld [vmem:[#allocation12 + $0x1d4] sm:$0xf]
        %v4331 = vld [vmem:[#allocation12 + $0x1d8] sm:$0xf]
        %v4332 = vld [vmem:[#allocation12 + $0x1dc] sm:$0xf]
        %v4333 = vld [vmem:[#allocation12 + $0x1e0] sm:$0xf]
        %v4334 = vld [vmem:[#allocation12 + $0x1e4] sm:$0xf]
        %v4335 = vld [vmem:[#allocation12 + $0x1e8] sm:$0xf]
        %v4336 = vld [vmem:[#allocation12 + $0x1ec] sm:$0xf]
        %v4337 = vld [vmem:[#allocation12 + $0x1f0] sm:$0xf]
        %v4338 = vld [vmem:[#allocation12 + $0x1f4] sm:$0xf]
        %v4339 = vld [vmem:[#allocation12 + $0x1f8] sm:$0xf]
        %v4340 = vld [vmem:[#allocation12 + $0x1fc] sm:$0xf]
        %v4341 = vld [vmem:[#allocation14] sm:$0x1]
        %v4343 = vlaneseq
        %v4344 = vshrl.u32 %v4343, 7
        %v4345 = vsub.s32 0, %v4344
        %v4346 = vrot.slane %v4341, %v4345
        %v4476 = vunpack.c.l.b16 %v4213
        %v4477 = vunpack.c.l.b16 %v4214
        %v4478 = vunpack.c.l.b16 %v4215
        %v4479 = vunpack.c.l.b16 %v4216
        %v4480 = vunpack.c.l.b16 %v4217
        %v4481 = vunpack.c.l.b16 %v4218
        %v4482 = vunpack.c.l.b16 %v4219
        %v4483 = vunpack.c.l.b16 %v4220
        %v4484 = vunpack.c.l.b16 %v4221
        %v4485 = vunpack.c.l.b16 %v4222
        %v4486 = vunpack.c.l.b16 %v4223
        %v4487 = vunpack.c.l.b16 %v4224
        %v4488 = vunpack.c.l.b16 %v4225
        %v4489 = vunpack.c.l.b16 %v4226
        %v4490 = vunpack.c.l.b16 %v4227
        %v4491 = vunpack.c.l.b16 %v4228
        %v4492 = vunpack.c.l.b16 %v4229
        %v4493 = vunpack.c.l.b16 %v4230
        %v4494 = vunpack.c.l.b16 %v4231
        %v4495 = vunpack.c.l.b16 %v4232
        %v4496 = vunpack.c.l.b16 %v4233
        %v4497 = vunpack.c.l.b16 %v4234
        %v4498 = vunpack.c.l.b16 %v4235
        %v4499 = vunpack.c.l.b16 %v4236
        %v4500 = vunpack.c.l.b16 %v4237
        %v4501 = vunpack.c.l.b16 %v4238
        %v4502 = vunpack.c.l.b16 %v4239
        %v4503 = vunpack.c.l.b16 %v4240
        %v4504 = vunpack.c.l.b16 %v4241
        %v4505 = vunpack.c.l.b16 %v4242
        %v4506 = vunpack.c.l.b16 %v4243
        %v4507 = vunpack.c.l.b16 %v4244
        %v4508 = vunpack.c.l.b16 %v4245
        %v4509 = vunpack.c.l.b16 %v4246
        %v4510 = vunpack.c.l.b16 %v4247
        %v4511 = vunpack.c.l.b16 %v4248
        %v4512 = vunpack.c.l.b16 %v4249
        %v4513 = vunpack.c.l.b16 %v4250
        %v4514 = vunpack.c.l.b16 %v4251
        %v4515 = vunpack.c.l.b16 %v4252
        %v4516 = vunpack.c.l.b16 %v4253
        %v4517 = vunpack.c.l.b16 %v4254
        %v4518 = vunpack.c.l.b16 %v4255
        %v4519 = vunpack.c.l.b16 %v4256
        %v4520 = vunpack.c.l.b16 %v4257
        %v4521 = vunpack.c.l.b16 %v4258
        %v4522 = vunpack.c.l.b16 %v4259
        %v4523 = vunpack.c.l.b16 %v4260
        %v4524 = vunpack.c.l.b16 %v4261
        %v4525 = vunpack.c.l.b16 %v4262
        %v4526 = vunpack.c.l.b16 %v4263
        %v4527 = vunpack.c.l.b16 %v4264
        %v4528 = vunpack.c.l.b16 %v4265
        %v4529 = vunpack.c.l.b16 %v4266
        %v4530 = vunpack.c.l.b16 %v4267
        %v4531 = vunpack.c.l.b16 %v4268
        %v4532 = vunpack.c.l.b16 %v4269
        %v4533 = vunpack.c.l.b16 %v4270
        %v4534 = vunpack.c.l.b16 %v4271
        %v4535 = vunpack.c.l.b16 %v4272
        %v4536 = vunpack.c.l.b16 %v4273
        %v4537 = vunpack.c.l.b16 %v4274
        %v4538 = vunpack.c.l.b16 %v4275
        %v4539 = vunpack.c.l.b16 %v4276
        %v4540 = vunpack.c.l.b16 %v4277
        %v4541 = vunpack.c.l.b16 %v4278
        %v4542 = vunpack.c.l.b16 %v4279
        %v4543 = vunpack.c.l.b16 %v4280
        %v4544 = vunpack.c.l.b16 %v4281
        %v4545 = vunpack.c.l.b16 %v4282
        %v4546 = vunpack.c.l.b16 %v4283
        %v4547 = vunpack.c.l.b16 %v4284
        %v4548 = vunpack.c.l.b16 %v4285
        %v4549 = vunpack.c.l.b16 %v4286
        %v4550 = vunpack.c.l.b16 %v4287
        %v4551 = vunpack.c.l.b16 %v4288
        %v4552 = vunpack.c.l.b16 %v4289
        %v4553 = vunpack.c.l.b16 %v4290
        %v4554 = vunpack.c.l.b16 %v4291
        %v4555 = vunpack.c.l.b16 %v4292
        %v4556 = vunpack.c.l.b16 %v4293
        %v4557 = vunpack.c.l.b16 %v4294
        %v4558 = vunpack.c.l.b16 %v4295
        %v4559 = vunpack.c.l.b16 %v4296
        %v4560 = vunpack.c.l.b16 %v4297
        %v4561 = vunpack.c.l.b16 %v4298
        %v4562 = vunpack.c.l.b16 %v4299
        %v4563 = vunpack.c.l.b16 %v4300
        %v4564 = vunpack.c.l.b16 %v4301
        %v4565 = vunpack.c.l.b16 %v4302
        %v4566 = vunpack.c.l.b16 %v4303
        %v4567 = vunpack.c.l.b16 %v4304
        %v4568 = vunpack.c.l.b16 %v4305
        %v4569 = vunpack.c.l.b16 %v4306
        %v4570 = vunpack.c.l.b16 %v4307
        %v4571 = vunpack.c.l.b16 %v4308
        %v4572 = vunpack.c.l.b16 %v4309
        %v4573 = vunpack.c.l.b16 %v4310
        %v4574 = vunpack.c.l.b16 %v4311
        %v4575 = vunpack.c.l.b16 %v4312
        %v4576 = vunpack.c.l.b16 %v4313
        %v4577 = vunpack.c.l.b16 %v4314
        %v4578 = vunpack.c.l.b16 %v4315
        %v4579 = vunpack.c.l.b16 %v4316
        %v4580 = vunpack.c.l.b16 %v4317
        %v4581 = vunpack.c.l.b16 %v4318
        %v4582 = vunpack.c.l.b16 %v4319
        %v4583 = vunpack.c.l.b16 %v4320
        %v4584 = vunpack.c.l.b16 %v4321
        %v4585 = vunpack.c.l.b16 %v4322
        %v4586 = vunpack.c.l.b16 %v4323
        %v4587 = vunpack.c.l.b16 %v4324
        %v4588 = vunpack.c.l.b16 %v4325
        %v4589 = vunpack.c.l.b16 %v4326
        %v4590 = vunpack.c.l.b16 %v4327
        %v4591 = vunpack.c.l.b16 %v4328
        %v4592 = vunpack.c.l.b16 %v4329
        %v4593 = vunpack.c.l.b16 %v4330
        %v4594 = vunpack.c.l.b16 %v4331
        %v4595 = vunpack.c.l.b16 %v4332
        %v4596 = vunpack.c.l.b16 %v4333
        %v4597 = vunpack.c.l.b16 %v4334
        %v4598 = vunpack.c.l.b16 %v4335
        %v4599 = vunpack.c.l.b16 %v4336
        %v4600 = vunpack.c.l.b16 %v4337
        %v4601 = vunpack.c.l.b16 %v4338
        %v4602 = vunpack.c.l.b16 %v4339
        %v4603 = vunpack.c.l.b16 %v4340
        %v4604 = vpack.c.b16 %v4477, %v4476
        %v4605 = vpack.c.b16 %v4479, %v4478
        %v4606 = vpack.c.b16 %v4481, %v4480
        %v4607 = vpack.c.b16 %v4483, %v4482
        %v4608 = vpack.c.b16 %v4485, %v4484
        %v4609 = vpack.c.b16 %v4487, %v4486
        %v4610 = vpack.c.b16 %v4489, %v4488
        %v4611 = vpack.c.b16 %v4491, %v4490
        %v4612 = vpack.c.b16 %v4493, %v4492
        %v4613 = vpack.c.b16 %v4495, %v4494
        %v4614 = vpack.c.b16 %v4497, %v4496
        %v4615 = vpack.c.b16 %v4499, %v4498
        %v4616 = vpack.c.b16 %v4501, %v4500
        %v4617 = vpack.c.b16 %v4503, %v4502
        %v4618 = vpack.c.b16 %v4505, %v4504
        %v4619 = vpack.c.b16 %v4507, %v4506
        %v4620 = vpack.c.b16 %v4509, %v4508
        %v4621 = vpack.c.b16 %v4511, %v4510
        %v4622 = vpack.c.b16 %v4513, %v4512
        %v4623 = vpack.c.b16 %v4515, %v4514
        %v4624 = vpack.c.b16 %v4517, %v4516
        %v4625 = vpack.c.b16 %v4519, %v4518
        %v4626 = vpack.c.b16 %v4521, %v4520
        %v4627 = vpack.c.b16 %v4523, %v4522
        %v4628 = vpack.c.b16 %v4525, %v4524
        %v4629 = vpack.c.b16 %v4527, %v4526
        %v4630 = vpack.c.b16 %v4529, %v4528
        %v4631 = vpack.c.b16 %v4531, %v4530
        %v4632 = vpack.c.b16 %v4533, %v4532
        %v4633 = vpack.c.b16 %v4535, %v4534
        %v4634 = vpack.c.b16 %v4537, %v4536
        %v4635 = vpack.c.b16 %v4539, %v4538
        %v4636 = vpack.c.b16 %v4541, %v4540
        %v4637 = vpack.c.b16 %v4543, %v4542
        %v4638 = vpack.c.b16 %v4545, %v4544
        %v4639 = vpack.c.b16 %v4547, %v4546
        %v4640 = vpack.c.b16 %v4549, %v4548
        %v4641 = vpack.c.b16 %v4551, %v4550
        %v4642 = vpack.c.b16 %v4553, %v4552
        %v4643 = vpack.c.b16 %v4555, %v4554
        %v4644 = vpack.c.b16 %v4557, %v4556
        %v4645 = vpack.c.b16 %v4559, %v4558
        %v4646 = vpack.c.b16 %v4561, %v4560
        %v4647 = vpack.c.b16 %v4563, %v4562
        %v4648 = vpack.c.b16 %v4565, %v4564
        %v4649 = vpack.c.b16 %v4567, %v4566
        %v4650 = vpack.c.b16 %v4569, %v4568
        %v4651 = vpack.c.b16 %v4571, %v4570
        %v4652 = vpack.c.b16 %v4573, %v4572
        %v4653 = vpack.c.b16 %v4575, %v4574
        %v4654 = vpack.c.b16 %v4577, %v4576
        %v4655 = vpack.c.b16 %v4579, %v4578
        %v4656 = vpack.c.b16 %v4581, %v4580
        %v4657 = vpack.c.b16 %v4583, %v4582
        %v4658 = vpack.c.b16 %v4585, %v4584
        %v4659 = vpack.c.b16 %v4587, %v4586
        %v4660 = vpack.c.b16 %v4589, %v4588
        %v4661 = vpack.c.b16 %v4591, %v4590
        %v4662 = vpack.c.b16 %v4593, %v4592
        %v4663 = vpack.c.b16 %v4595, %v4594
        %v4664 = vpack.c.b16 %v4597, %v4596
        %v4665 = vpack.c.b16 %v4599, %v4598
        %v4666 = vpack.c.b16 %v4601, %v4600
        %v4667 = vpack.c.b16 %v4603, %v4602
        %4732 = vmatprep.subr.bf16.mxu0 0
        %4733 = vmatpush1.bf16.msra.mxu0 %v4604
        %4734 = vmatprep.subr.bf16.mxu0 0
        %4735 = vmatpush1.bf16.msra.mxu0 %v4605
        %4736 = vmatprep.subr.bf16.mxu0 0
        %4737 = vmatpush1.bf16.msra.mxu0 %v4606
        %4738 = vmatprep.subr.bf16.mxu0 0
        %4739 = vmatpush1.bf16.msra.mxu0 %v4607
        %4740 = vmatprep.subr.bf16.mxu0 0
        %4741 = vmatpush1.bf16.msra.mxu0 %v4608
        %4742 = vmatprep.subr.bf16.mxu0 0
        %4743 = vmatpush1.bf16.msra.mxu0 %v4609
        %4744 = vmatprep.subr.bf16.mxu0 0
        %4745 = vmatpush1.bf16.msra.mxu0 %v4610
        %4746 = vmatprep.subr.bf16.mxu0 0
        %4747 = vmatpush1.bf16.msra.mxu0 %v4611
        %4748 = vmatprep.subr.bf16.mxu0 0
        %4749 = vmatpush1.bf16.msra.mxu0 %v4612
        %4750 = vmatprep.subr.bf16.mxu0 0
        %4751 = vmatpush1.bf16.msra.mxu0 %v4613
        %4752 = vmatprep.subr.bf16.mxu0 0
        %4753 = vmatpush1.bf16.msra.mxu0 %v4614
        %4754 = vmatprep.subr.bf16.mxu0 0
        %4755 = vmatpush1.bf16.msra.mxu0 %v4615
        %4756 = vmatprep.subr.bf16.mxu0 0
        %4757 = vmatpush1.bf16.msra.mxu0 %v4616
        %4758 = vmatprep.subr.bf16.mxu0 0
        %4759 = vmatpush1.bf16.msra.mxu0 %v4617
        %4760 = vmatprep.subr.bf16.mxu0 0
        %4761 = vmatpush1.bf16.msra.mxu0 %v4618
        %4762 = vmatprep.subr.bf16.mxu0 0
        %4763 = vmatpush1.bf16.msra.mxu0 %v4619
        %4764 = vmatprep.mubr.bf16.mxu0 %v4182
        %4765 = vmatmul.mubr.bf16.gmra.mrb[0].mxu0 %v4181
        %v4766 = vpop.f32.mrb[0].mxu0
        %v4767 = vadd.f32 %v4346, %v4766
        %v4768 = vpop.f32.mrb[0].mxu0
        %v4769 = vpop.f32.mrb[0].mxu0
        %v4770 = vadd.f32 %v4346, %v4769
        %v4771 = vpop.f32.mrb[0].mxu0
        %4772 = vmatprep.mubr.bf16.mxu0 %v4190
        %4773 = vmatmul.mubr.bf16.gmra.mrb[0].mxu0 %v4189
        %v4774 = vpop.f32.mrb[0].mxu0
        %v4775 = vadd.f32 %v4346, %v4774
        %v4776 = vpop.f32.mrb[0].mxu0
        %v4777 = vpop.f32.mrb[0].mxu0
        %v4778 = vadd.f32 %v4346, %v4777
        %v4779 = vpop.f32.mrb[0].mxu0
        %4780 = vmatprep.mubr.bf16.mxu0 %v4198
        %4781 = vmatmul.mubr.bf16.gmra.mrb[0].mxu0 %v4197
        %v4782 = vpop.f32.mrb[0].mxu0
        %v4783 = vadd.f32 %v4346, %v4782
        %v4784 = vpop.f32.mrb[0].mxu0
        %v4785 = vpop.f32.mrb[0].mxu0
        %v4786 = vadd.f32 %v4346, %v4785
        %v4787 = vpop.f32.mrb[0].mxu0
        %4788 = vmatprep.mubr.bf16.mxu0 %v4206
        %4789 = vmatmul.mubr.bf16.gmra.mrb[0].mxu0 %v4205
        %v4790 = vpop.f32.mrb[0].mxu0
        %v4791 = vadd.f32 %v4346, %v4790
        %v4792 = vpop.f32.mrb[0].mxu0
        %v4793 = vpop.f32.mrb[0].mxu0
        %v4794 = vadd.f32 %v4346, %v4793
        %v4795 = vpop.f32.mrb[0].mxu0
        %4796 = vdwg.mxu0
        %4797 = vmatprep.subr.bf16.mxu0 0
        %4798 = vmatpush1.bf16.msra.mxu0 %v4620
        %4799 = vmatprep.subr.bf16.mxu0 0
        %4800 = vmatpush1.bf16.msra.mxu0 %v4621
        %4801 = vmatprep.subr.bf16.mxu0 0
        %4802 = vmatpush1.bf16.msra.mxu0 %v4622
        %4803 = vmatprep.subr.bf16.mxu0 0
        %4804 = vmatpush1.bf16.msra.mxu0 %v4623
        %4805 = vmatprep.subr.bf16.mxu0 0
        %4806 = vmatpush1.bf16.msra.mxu0 %v4624
        %4807 = vmatprep.subr.bf16.mxu0 0
        %4808 = vmatpush1.bf16.msra.mxu0 %v4625
        %4809 = vmatprep.subr.bf16.mxu0 0
        %4810 = vmatpush1.bf16.msra.mxu0 %v4626
        %4811 = vmatprep.subr.bf16.mxu0 0
        %4812 = vmatpush1.bf16.msra.mxu0 %v4627
        %4813 = vmatprep.subr.bf16.mxu0 0
        %4814 = vmatpush1.bf16.msra.mxu0 %v4628
        %4815 = vmatprep.subr.bf16.mxu0 0
        %4816 = vmatpush1.bf16.msra.mxu0 %v4629
        %4817 = vmatprep.subr.bf16.mxu0 0
        %4818 = vmatpush1.bf16.msra.mxu0 %v4630
        %4819 = vmatprep.subr.bf16.mxu0 0
        %4820 = vmatpush1.bf16.msra.mxu0 %v4631
        %4821 = vmatprep.subr.bf16.mxu0 0
        %4822 = vmatpush1.bf16.msra.mxu0 %v4632
        %4823 = vmatprep.subr.bf16.mxu0 0
        %4824 = vmatpush1.bf16.msra.mxu0 %v4633
        %4825 = vmatprep.subr.bf16.mxu0 0
        %4826 = vmatpush1.bf16.msra.mxu0 %v4634
        %4827 = vmatprep.subr.bf16.mxu0 0
        %4828 = vmatpush1.bf16.msra.mxu0 %v4635
        %4829 = vmatprep.mubr.bf16.mxu0 %v4184
        %4830 = vmatmul.mubr.bf16.gmra.mrb[0].mxu0 %v4183
        %v4831 = vpop.f32.mrb[0].mxu0
        %v4832 = vadd.f32 %v4767, %v4831
        %v4833 = vpop.f32.mrb[0].mxu0
        %v4834 = vpop.f32.mrb[0].mxu0
        %v4835 = vadd.f32 %v4770, %v4834
        %v4836 = vpop.f32.mrb[0].mxu0
        %4837 = vmatprep.mubr.bf16.mxu0 %v4192
        %4838 = vmatmul.mubr.bf16.gmra.mrb[0].mxu0 %v4191
        %v4839 = vpop.f32.mrb[0].mxu0
        %v4840 = vadd.f32 %v4775, %v4839
        %v4841 = vpop.f32.mrb[0].mxu0
        %v4842 = vpop.f32.mrb[0].mxu0
        %v4843 = vadd.f32 %v4778, %v4842
        %v4844 = vpop.f32.mrb[0].mxu0
        %4845 = vmatprep.mubr.bf16.mxu0 %v4200
        %4846 = vmatmul.mubr.bf16.gmra.mrb[0].mxu0 %v4199
        %v4847 = vpop.f32.mrb[0].mxu0
        %v4848 = vadd.f32 %v4783, %v4847
        %v4849 = vpop.f32.mrb[0].mxu0
        %v4850 = vpop.f32.mrb[0].mxu0
        %v4851 = vadd.f32 %v4786, %v4850
        %v4852 = vpop.f32.mrb[0].mxu0
        %4853 = vmatprep.mubr.bf16.mxu0 %v4208
        %4854 = vmatmul.mubr.bf16.gmra.mrb[0].mxu0 %v4207
        %v4855 = vpop.f32.mrb[0].mxu0
        %v4856 = vadd.f32 %v4791, %v4855
        %v4857 = vpop.f32.mrb[0].mxu0
        %v4858 = vpop.f32.mrb[0].mxu0
        %v4859 = vadd.f32 %v4794, %v4858
        %v4860 = vpop.f32.mrb[0].mxu0
        %4861 = vdwg.mxu0
        %4862 = vmatprep.subr.bf16.mxu0 0
        %4863 = vmatpush1.bf16.msra.mxu0 %v4636
        %4864 = vmatprep.subr.bf16.mxu0 0
        %4865 = vmatpush1.bf16.msra.mxu0 %v4637
        %4866 = vmatprep.subr.bf16.mxu0 0
        %4867 = vmatpush1.bf16.msra.mxu0 %v4638
        %4868 = vmatprep.subr.bf16.mxu0 0
        %4869 = vmatpush1.bf16.msra.mxu0 %v4639
        %4870 = vmatprep.subr.bf16.mxu0 0
        %4871 = vmatpush1.bf16.msra.mxu0 %v4640
        %4872 = vmatprep.subr.bf16.mxu0 0
        %4873 = vmatpush1.bf16.msra.mxu0 %v4641
        %4874 = vmatprep.subr.bf16.mxu0 0
        %4875 = vmatpush1.bf16.msra.mxu0 %v4642
        %4876 = vmatprep.subr.bf16.mxu0 0
        %4877 = vmatpush1.bf16.msra.mxu0 %v4643
        %4878 = vmatprep.subr.bf16.mxu0 0
        %4879 = vmatpush1.bf16.msra.mxu0 %v4644
        %4880 = vmatprep.subr.bf16.mxu0 0
        %4881 = vmatpush1.bf16.msra.mxu0 %v4645
        %4882 = vmatprep.subr.bf16.mxu0 0
        %4883 = vmatpush1.bf16.msra.mxu0 %v4646
        %4884 = vmatprep.subr.bf16.mxu0 0
        %4885 = vmatpush1.bf16.msra.mxu0 %v4647
        %4886 = vmatprep.subr.bf16.mxu0 0
        %4887 = vmatpush1.bf16.msra.mxu0 %v4648
        %4888 = vmatprep.subr.bf16.mxu0 0
        %4889 = vmatpush1.bf16.msra.mxu0 %v4649
        %4890 = vmatprep.subr.bf16.mxu0 0
        %4891 = vmatpush1.bf16.msra.mxu0 %v4650
        %4892 = vmatprep.subr.bf16.mxu0 0
        %4893 = vmatpush1.bf16.msra.mxu0 %v4651
        %4894 = vmatprep.mubr.bf16.mxu0 %v4186
        %4895 = vmatmul.mubr.bf16.gmra.mrb[0].mxu0 %v4185
        %v4896 = vpop.f32.mrb[0].mxu0
        %v4897 = vadd.f32 %v4832, %v4896
        %v4898 = vpop.f32.mrb[0].mxu0
        %v4899 = vpop.f32.mrb[0].mxu0
        %v4900 = vadd.f32 %v4835, %v4899
        %v4901 = vpop.f32.mrb[0].mxu0
        %4902 = vmatprep.mubr.bf16.mxu0 %v4194
        %4903 = vmatmul.mubr.bf16.gmra.mrb[0].mxu0 %v4193
        %v4904 = vpop.f32.mrb[0].mxu0
        %v4905 = vadd.f32 %v4840, %v4904
        %v4906 = vpop.f32.mrb[0].mxu0
        %v4907 = vpop.f32.mrb[0].mxu0
        %v4908 = vadd.f32 %v4843, %v4907
        %v4909 = vpop.f32.mrb[0].mxu0
        %4910 = vmatprep.mubr.bf16.mxu0 %v4202
        %4911 = vmatmul.mubr.bf16.gmra.mrb[0].mxu0 %v4201
        %v4912 = vpop.f32.mrb[0].mxu0
        %v4913 = vadd.f32 %v4848, %v4912
        %v4914 = vpop.f32.mrb[0].mxu0
        %v4915 = vpop.f32.mrb[0].mxu0
        %v4916 = vadd.f32 %v4851, %v4915
        %v4917 = vpop.f32.mrb[0].mxu0
        %4918 = vmatprep.mubr.bf16.mxu0 %v4210
        %4919 = vmatmul.mubr.bf16.gmra.mrb[0].mxu0 %v4209
        %v4920 = vpop.f32.mrb[0].mxu0
        %v4921 = vadd.f32 %v4856, %v4920
        %v4922 = vpop.f32.mrb[0].mxu0
        %v4923 = vpop.f32.mrb[0].mxu0
        %v4924 = vadd.f32 %v4859, %v4923
        %v4925 = vpop.f32.mrb[0].mxu0
        %4926 = vdwg.mxu0
        %4927 = vmatprep.subr.bf16.mxu0 0
        %4928 = vmatpush1.bf16.msra.mxu0 %v4652
        %4929 = vmatprep.subr.bf16.mxu0 0
        %4930 = vmatpush1.bf16.msra.mxu0 %v4653
        %4931 = vmatprep.subr.bf16.mxu0 0
        %4932 = vmatpush1.bf16.msra.mxu0 %v4654
        %4933 = vmatprep.subr.bf16.mxu0 0
        %4934 = vmatpush1.bf16.msra.mxu0 %v4655
        %4935 = vmatprep.subr.bf16.mxu0 0
        %4936 = vmatpush1.bf16.msra.mxu0 %v4656
        %4937 = vmatprep.subr.bf16.mxu0 0
        %4938 = vmatpush1.bf16.msra.mxu0 %v4657
        %4939 = vmatprep.subr.bf16.mxu0 0
        %4940 = vmatpush1.bf16.msra.mxu0 %v4658
        %4941 = vmatprep.subr.bf16.mxu0 0
        %4942 = vmatpush1.bf16.msra.mxu0 %v4659
        %4943 = vmatprep.subr.bf16.mxu0 0
        %4944 = vmatpush1.bf16.msra.mxu0 %v4660
        %4945 = vmatprep.subr.bf16.mxu0 0
        %4946 = vmatpush1.bf16.msra.mxu0 %v4661
        %4947 = vmatprep.subr.bf16.mxu0 0
        %4948 = vmatpush1.bf16.msra.mxu0 %v4662
        %4949 = vmatprep.subr.bf16.mxu0 0
        %4950 = vmatpush1.bf16.msra.mxu0 %v4663
        %4951 = vmatprep.subr.bf16.mxu0 0
        %4952 = vmatpush1.bf16.msra.mxu0 %v4664
        %4953 = vmatprep.subr.bf16.mxu0 0
        %4954 = vmatpush1.bf16.msra.mxu0 %v4665
        %4955 = vmatprep.subr.bf16.mxu0 0
        %4956 = vmatpush1.bf16.msra.mxu0 %v4666
        %4957 = vmatprep.subr.bf16.mxu0 0
        %4958 = vmatpush1.bf16.msra.mxu0 %v4667
        %4959 = vmatprep.mubr.bf16.mxu0 %v4188
        %4960 = vmatmul.mubr.bf16.gmra.mrb[0].mxu0 %v4187
        %v4961 = vpop.f32.mrb[0].mxu0
        %v4962 = vadd.f32 %v4897, %v4961
        %v4963 = vpop.f32.mrb[0].mxu0
        %v4964 = vpop.f32.mrb[0].mxu0
        %v4965 = vadd.f32 %v4900, %v4964
        %v4966 = vpop.f32.mrb[0].mxu0
        %4967 = vmatprep.mubr.bf16.mxu0 %v4196
        %4968 = vmatmul.mubr.bf16.gmra.mrb[0].mxu0 %v4195
        %v4969 = vpop.f32.mrb[0].mxu0
        %v4970 = vadd.f32 %v4905, %v4969
        %v4971 = vpop.f32.mrb[0].mxu0
        %v4972 = vpop.f32.mrb[0].mxu0
        %v4973 = vadd.f32 %v4908, %v4972
        %v4974 = vpop.f32.mrb[0].mxu0
        %4975 = vmatprep.mubr.bf16.mxu0 %v4204
        %4976 = vmatmul.mubr.bf16.gmra.mrb[0].mxu0 %v4203
        %v4977 = vpop.f32.mrb[0].mxu0
        %v4978 = vadd.f32 %v4913, %v4977
        %v4979 = vpop.f32.mrb[0].mxu0
        %v4980 = vpop.f32.mrb[0].mxu0
        %v4981 = vadd.f32 %v4916, %v4980
        %v4982 = vpop.f32.mrb[0].mxu0
        %4983 = vmatprep.mubr.bf16.mxu0 %v4212
        %4984 = vmatmul.mubr.bf16.gmra.mrb[0].mxu0 %v4211
        %v4985 = vpop.f32.mrb[0].mxu0
        %v4986 = vadd.f32 %v4921, %v4985
        %v4987 = vpop.f32.mrb[0].mxu0
        %v4988 = vpop.f32.mrb[0].mxu0
        %v4989 = vadd.f32 %v4924, %v4988
        %v4990 = vpop.f32.mrb[0].mxu0
        %4991 = vdwg.mxu0
        %v4992 = vunpack.c.l.bf16 %v470
        %v4993 = vunpack.c.l.bf16 %v471
        %v4994 = vunpack.c.l.bf16 %v472
        %v4995 = vunpack.c.l.bf16 %v473
        %v4996 = vunpack.c.l.bf16 %v474
        %v4997 = vunpack.c.l.bf16 %v475
        %v4998 = vunpack.c.l.bf16 %v476
        %v4999 = vunpack.c.l.bf16 %v477
        %v5000 = vadd.f32 %v4962, %v4992
        %v5001 = vadd.f32 %v4965, %v4993
        %v5002 = vadd.f32 %v4970, %v4994
        %v5003 = vadd.f32 %v4973, %v4995
        %v5004 = vadd.f32 %v4978, %v4996
        %v5005 = vadd.f32 %v4981, %v4997
        %v5006 = vadd.f32 %v4986, %v4998
        %v5007 = vadd.f32 %v4989, %v4999
        %v5008 = vpack.c.bf16 %v5001, %v5000
        %v5009 = vpack.c.bf16 %v5003, %v5002
        %v5010 = vpack.c.bf16 %v5005, %v5004
        %v5011 = vpack.c.bf16 %v5007, %v5006
        %v5012 = vld [vmem:[#allocation15] sm:$0xf]
        %v5013 = vld [vmem:[#allocation15 + $0x4] sm:$0xf]
        %v5014 = vld [vmem:[#allocation15 + $0x8] sm:$0xf]
        %v5015 = vld [vmem:[#allocation15 + $0xc] sm:$0xf]
        %v5016 = vld [vmem:[#allocation15 + $0x10] sm:$0xf]
        %v5017 = vld [vmem:[#allocation15 + $0x14] sm:$0xf]
        %v5018 = vld [vmem:[#allocation15 + $0x18] sm:$0xf]
        %v5019 = vld [vmem:[#allocation15 + $0x1c] sm:$0xf]
        %v5020 = vld [vmem:[#allocation15 + $0x20] sm:$0xf]
        %v5030 = vunpack.c.l.b16 %v5012
        %v5031 = vunpack.c.l.b16 %v5013
        %v5032 = vunpack.c.l.b16 %v5014
        %v5033 = vunpack.c.l.b16 %v5015
        %v5034 = vunpack.c.l.b16 %v5016
        %v5035 = vunpack.c.l.b16 %v5017
        %v5036 = vunpack.c.l.b16 %v5018
        %v5037 = vunpack.c.l.b16 %v5019
        %v5038 = vunpack.c.l.b16 %v5020
        %v5039 = vpack.c.b16 %v5031, %v5030
        %v5040 = vpack.c.b16 %v5033, %v5032
        %v5041 = vpack.c.b16 %v5035, %v5034
        %v5042 = vpack.c.b16 %v5037, %v5036
        %v5043 = vpack.c.b16 %v5038, %v5038
        %v5049 = vsel %vm722, %v5008, 0
        %v5052 = vsel %vm722, %v5009, 0
        %v5055 = vsel %vm722, %v5010, 0
        %v5058 = vsel %vm722, %v5011, 0
        %v5061 = vsel %vm735, %v5043, 0
        %5063 = vmatprep.subr.bf16.mxu0 0
        %5064 = vmatpush1.bf16.msra.mxu0 %v5039
        %5065 = vmatprep.subr.bf16.mxu0 0
        %5066 = vmatpush1.bf16.msra.mxu0 %v5040
        %5067 = vmatprep.subr.bf16.mxu0 0
        %5068 = vmatpush1.bf16.msra.mxu0 %v5041
        %5069 = vmatprep.subr.bf16.mxu0 0
        %5070 = vmatpush1.bf16.msra.mxu0 %v5042
        %5071 = vmatprep.subr.bf16.mxu0 0
        %5072 = vmatpush1.bf16.msra.mxu0 %v5061
        %5073 = vmatprep.subr.bf16.mxu0 0
        %5074 = vmatpush1.bf16.msra.mxu0 0
        %5075 = vmatprep.subr.bf16.mxu0 0
        %5076 = vmatpush1.bf16.msra.mxu0 0
        %5077 = vmatprep.subr.bf16.mxu0 0
        %5078 = vmatpush1.bf16.msra.mxu0 0
        %5079 = vmatprep.subr.bf16.mxu0 0
        %5080 = vmatpush1.bf16.msra.mxu0 0
        %5081 = vmatprep.subr.bf16.mxu0 0
        %5082 = vmatpush1.bf16.msra.mxu0 0
        %5083 = vmatprep.subr.bf16.mxu0 0
        %5084 = vmatpush1.bf16.msra.mxu0 0
        %5085 = vmatprep.subr.bf16.mxu0 0
        %5086 = vmatpush1.bf16.msra.mxu0 0
        %5087 = vmatprep.subr.bf16.mxu0 0
        %5088 = vmatpush1.bf16.msra.mxu0 0
        %5089 = vmatprep.subr.bf16.mxu0 0
        %5090 = vmatpush1.bf16.msra.mxu0 0
        %5091 = vmatprep.subr.bf16.mxu0 0
        %5092 = vmatpush1.bf16.msra.mxu0 0
        %5093 = vmatprep.subr.bf16.mxu0 0
        %5094 = vmatpush1.bf16.msra.mxu0 0
        %5095 = vmatprep.mubr.bf16.mxu0 0
        %5096 = vmatmul.mubr.bf16.gmra.mrb[0].mxu0 %v5049
        %v5097 = vpop.f32.mrb[0].mxu0
        %v5098 = vadd.f32 0.0, %v5097
        %v5099 = vpop.f32.mrb[0].mxu0
        %v5100 = vpop.f32.mrb[0].mxu0
        %v5101 = vadd.f32 0.0, %v5100
        %v5102 = vpop.f32.mrb[0].mxu0
        %5103 = vmatprep.mubr.bf16.mxu0 0
        %5104 = vmatmul.mubr.bf16.gmra.mrb[0].mxu0 %v5052
        %v5105 = vpop.f32.mrb[0].mxu0
        %v5106 = vadd.f32 0.0, %v5105
        %v5107 = vpop.f32.mrb[0].mxu0
        %v5108 = vpop.f32.mrb[0].mxu0
        %v5109 = vadd.f32 0.0, %v5108
        %v5110 = vpop.f32.mrb[0].mxu0
        %5111 = vmatprep.mubr.bf16.mxu0 0
        %5112 = vmatmul.mubr.bf16.gmra.mrb[0].mxu0 %v5055
        %v5113 = vpop.f32.mrb[0].mxu0
        %v5114 = vadd.f32 0.0, %v5113
        %v5115 = vpop.f32.mrb[0].mxu0
        %v5116 = vpop.f32.mrb[0].mxu0
        %v5117 = vadd.f32 0.0, %v5116
        %v5118 = vpop.f32.mrb[0].mxu0
        %5119 = vmatprep.mubr.bf16.mxu0 0
        %5120 = vmatmul.mubr.bf16.gmra.mrb[0].mxu0 %v5058
        %v5121 = vpop.f32.mrb[0].mxu0
        %v5122 = vadd.f32 0.0, %v5121
        %v5123 = vpop.f32.mrb[0].mxu0
        %v5124 = vpop.f32.mrb[0].mxu0
        %v5125 = vadd.f32 0.0, %v5124
        %v5126 = vpop.f32.mrb[0].mxu0
        %5127 = vdwg.mxu0
        %v5128 = vxor.u32 %v5098, 2147483648
        %v5129 = vxor.u32 %v5101, 2147483648
        %v5130 = vxor.u32 %v5106, 2147483648
        %v5131 = vxor.u32 %v5109, 2147483648
        %v5132 = vxor.u32 %v5114, 2147483648
        %v5133 = vxor.u32 %v5117, 2147483648
        %v5134 = vxor.u32 %v5122, 2147483648
        %v5135 = vxor.u32 %v5125, 2147483648
        %v5136 = vmul.f32 %v5128, 1.442695
        %v5137 = vpow.pop %v5136
        %v5138 = vmul.f32 %v5129, 1.442695
        %v5139 = vpow.pop %v5138
        %v5140 = vmul.f32 %v5130, 1.442695
        %v5141 = vpow.pop %v5140
        %v5142 = vmul.f32 %v5131, 1.442695
        %v5143 = vpow.pop %v5142
        %v5144 = vmul.f32 %v5132, 1.442695
        %v5145 = vpow.pop %v5144
        %v5146 = vmul.f32 %v5133, 1.442695
        %v5147 = vpow.pop %v5146
        %v5148 = vmul.f32 %v5134, 1.442695
        %v5149 = vpow.pop %v5148
        %v5150 = vmul.f32 %v5135, 1.442695
        %v5151 = vpow.pop %v5150
        %v5152 = vadd.f32 %v5137, 1.0
        %v5153 = vadd.f32 %v5139, 1.0
        %v5154 = vadd.f32 %v5141, 1.0
        %v5155 = vadd.f32 %v5143, 1.0
        %v5156 = vadd.f32 %v5145, 1.0
        %v5157 = vadd.f32 %v5147, 1.0
        %v5158 = vadd.f32 %v5149, 1.0
        %v5159 = vadd.f32 %v5151, 1.0
        %v5160 = vrcp.pop %v5152
        %v5161 = vmul.f32 1.0, %v5160
        %v5162 = vrcp.pop %v5153
        %v5163 = vmul.f32 1.0, %v5162
        %v5164 = vrcp.pop %v5154
        %v5165 = vmul.f32 1.0, %v5164
        %v5166 = vrcp.pop %v5155
        %v5167 = vmul.f32 1.0, %v5166
        %v5168 = vrcp.pop %v5156
        %v5169 = vmul.f32 1.0, %v5168
        %v5170 = vrcp.pop %v5157
        %v5171 = vmul.f32 1.0, %v5170
        %v5172 = vrcp.pop %v5158
        %v5173 = vmul.f32 1.0, %v5172
        %v5174 = vrcp.pop %v5159
        %v5175 = vmul.f32 1.0, %v5174
        %v5176 = vmul.f32 %v5098, %v5161
        %v5177 = vmul.f32 %v5101, %v5163
        %v5178 = vmul.f32 %v5106, %v5165
        %v5179 = vmul.f32 %v5109, %v5167
        %v5180 = vmul.f32 %v5114, %v5169
        %v5181 = vmul.f32 %v5117, %v5171
        %v5182 = vmul.f32 %v5122, %v5173
        %v5183 = vmul.f32 %v5125, %v5175
        %5184 = vst [vmem:[%s466] sm:$0xff] %v5176
        %5185 = vst [vmem:[%s466 + $0x8] sm:$0xff] %v5177
        %5186 = vst [vmem:[%s466 + $0x10] sm:$0xff] %v5178
        %5187 = vst [vmem:[%s466 + $0x18] sm:$0xff] %v5179
        %5188 = vst [vmem:[%s466 + $0x20] sm:$0xff] %v5180
        %5189 = vst [vmem:[%s466 + $0x28] sm:$0xff] %v5181
        %5190 = vst [vmem:[%s466 + $0x30] sm:$0xff] %v5182
        %5191 = vst [vmem:[%s466 + $0x38] sm:$0xff] %v5183
        %s5192 = sand.u32 %s233, 1
        %s5193 = scalar_lea.sflag [#allocation5], %s5192
        %s5194 = sand.u32 %s233, 1
        %s5195 = smul.addr %s5194, 64
        %s5196 = scalar_lea.vmem [#allocation17], %s5195
        // Predicated region
        $region85: #{tpu_custom_call.1} parent=51 // pred_check
          %p5197 = pneg %p243
        $region86: #{tpu_custom_call.1} parent=51 // pred_check_branch
          %5199 = sbr.rel (%p5197) target = $region88
        $region87: #{tpu_custom_call.1} parent=51 // pred_region
          %s5200 = smul.u32 8, %s36
          %s5202 = ssub.s32 1024, 1024
          %5203 = vsyncadd %s5193, %s5202
          %s5204 = smul.addr %s35, 8
          %s5205 = sadd.s32 %s5200, %s5204
          %s5206 = smul.addr %s5205, 128
          %s5207 = scalar_lea.hbm %s8, %s5206
          %s5208 = sshll.u32 %s5196, 4
          %s5209 = int_to_ptr.vmem [resolvable:$true] %s5208
          %5214 = dma.vmem_to_hbm [thread:$0]  %s5209, 1024, %s5207, %s5193, 128, 128, 8
        $region88: #{tpu_custom_call.1} parent=51 // pred_fallthru
          _
      $region52: #{tpu_custom_call.1} parent=5 // pred_fallthru
        _
      %p5215 = scmp.le.s32.totalorder 2, %s26
      // Predicated region
      $region89: #{tpu_custom_call.1} parent=5 // pred_check
        %p5216 = pneg %p5215
      $region90: #{tpu_custom_call.1} parent=5 // pred_check_branch
        %5218 = sbr.rel (%p5216) target = $region92
      $region91: #{tpu_custom_call.1} parent=5 // pred_region
        %s5219 = ssub.s32 %s26, 2
        // Predicated region
        $region93: #{tpu_custom_call.1} parent=91 // pred_check
          %p5220 = pneg %p249
        $region94: #{tpu_custom_call.1} parent=91 // pred_check_branch
          %5222 = sbr.rel (%p5220) target = $region96
        $region95: #{tpu_custom_call.1} parent=91 // pred_region
          %s5223 = sand.u32 %s234, 1
          %s5224 = scalar_lea.sflag [#allocation5], %s5223
          %s5225 = sand.u32 %s234, 1
          %s5226 = smul.addr %s5225, 64
          %s5227 = scalar_lea.vmem [#allocation17], %s5226
          %5228 = dma.done %s5224, 1024
        $region96: #{tpu_custom_call.1} parent=91 // pred_fallthru
          _
      $region92: #{tpu_custom_call.1} parent=5 // pred_fallthru
        _
    $region6: #{tpu_custom_call.1} parent=1 // loop_footer
      %s30 = sadd.s32 1, %s26
    $region7: #{tpu_custom_call.1} parent=1 // loop_footer_branch
      %25 = sbr.rel target = $region3
    $region8: #{tpu_custom_call.1} parent=1 // loop_exit
      _
    %5229 = vsyncpa [#allocation4], 1
    %s5230 = scalar_lea.sflag [#allocation4], 1
    %5231 = vsyncpa %s5230, 1
    %5232 = vsyncpa [#allocation7], 1
    %s5233 = scalar_lea.sflag [#allocation7], 1
    %5234 = vsyncpa %s5233, 1
    %5235 = vsyncpa [#allocation10], 1
    %5236 = vsyncpa [#allocation13], 1
    %5237 = vsyncpa [#allocation16], 1
    %5238 = vsyncpa [#allocation5], 1
    %s5239 = scalar_lea.sflag [#allocation5], 1
    %5240 = vsyncpa %s5239, 1

</llo_original>
